<compile_context>
chip_gen: v7x
topology: tpu7x:2x2x1
jax: 0.10.0
libtpu: 0.0.40
codegen_flags: <defaults>
</compile_context>

<pallas_src>
import functools
import math

import jax
import jax.numpy as jnp
from jax.experimental import pallas as pl
from jax.experimental.pallas import tpu as pltpu  # noqa: F401  (kept for TPU-specific tuning hooks)

H1, H2 = 800, 600          # PyTorch hidden sizes
LANE = 128


def _round_up(n, m):
    return ((n + m - 1) // m) * m


H1P = _round_up(H1, LANE)  # 896
H2P = _round_up(H2, LANE)  # 640


def _critic_kernel(s_ref, a_ref, w1_ref, b1_ref, w2s1_ref, w2s2_ref,
                   w2a_ref, b2_ref, w3_ref, b3_ref, q_ref, *, action_dim):
    """Both Q-heads fused into one body (no grid; everything VMEM-resident).

    Shapes seen by the kernel:
      s_ref   : (B, SP)            bf16  zero-padded states (MXU operand)
      a_ref   : (B, AP)            f32   zero-padded actions (VPU operand)
      w1_ref  : (SP, 2*H1P)        bf16  [layer_1 | layer_4] weights, fused along N
      b1_ref  : (1, 2*H1P)         f32   [layer_1 | layer_4] biases
      w2s1_ref: (H1P, H2P)         bf16  layer_2_s weight (padding rows/cols zeroed)
      w2s2_ref: (H1P, H2P)         bf16  layer_5_s weight
      w2a_ref : (action_dim, 2*H2P)f32   [layer_2_a | layer_5_a] weights (rank-1 MAC rows)
      b2_ref  : (1, 2*H2P)         f32   [layer_2_a | layer_5_a] biases
      w3_ref  : (2, H2P)           f32   layer_3 / layer_6 weights as rows
      b3_ref  : (1, 2)             f32   layer_3 / layer_6 biases
      q_ref   : (B, 2)             f32   [q1 | q2]
    """
    # layer_1 / layer_4 fused along N: one MXU push on the shared state input.
    h1 = jnp.dot(s_ref[...], w1_ref[...], preferred_element_type=jnp.float32)
    h1 = jnp.maximum(h1 + b1_ref[...], 0.0)                       # (B, 2*H1P) f32

    # layer_2_s / layer_5_s: two MXU matmuls (per-head weights, lane-aligned slices).
    h1a = h1[:, :H1P].astype(jnp.bfloat16)
    h1b = h1[:, H1P:].astype(jnp.bfloat16)
    h2a = jnp.dot(h1a, w2s1_ref[...], preferred_element_type=jnp.float32)
    h2b = jnp.dot(h1b, w2s2_ref[...], preferred_element_type=jnp.float32)
    h2a = h2a + b2_ref[:, :H2P]
    h2b = h2b + b2_ref[:, H2P:]

    # layer_2_a / layer_5_a: `action_dim` rank-1 VPU MACs (f32), both heads at once.
    for j in range(action_dim):
        aj = a_ref[:, j:j + 1]                                     # (B, 1) f32
        h2a = h2a + aj * w2a_ref[j:j + 1, :H2P]
        h2b = h2b + aj * w2a_ref[j:j + 1, H2P:]
    h2a = jnp.maximum(h2a, 0.0)
    h2b = jnp.maximum(h2b, 0.0)

    # layer_3 / layer_6: N=1 matmuls as VPU multiply + lane reduction (f32 exact).
    q1 = jnp.sum(h2a * w3_ref[0:1, :], axis=-1, keepdims=True)
    q2 = jnp.sum(h2b * w3_ref[1:2, :], axis=-1, keepdims=True)
    q_ref[...] = jnp.concatenate([q1, q2], axis=-1) + b3_ref[...]


def critic_forward(s, a, packed):
    """Equivalent of Critic.forward(s, a) -> (q1, q2)."""
    w1, b1, w2s1, w2s2, w2a, b2, w3, b3 = packed
    B, state_dim = s.shape
    action_dim = a.shape[1]
    SP = w1.shape[0]
    AP = _round_up(action_dim, LANE)

    # Zero-pad inputs (cheap XLA ops outside the kernel).  s is only ever an
    # MXU operand -> pre-cast to bf16; a feeds the VPU -> keep f32.
    s_pad = jnp.zeros((B, SP), jnp.bfloat16).at[:, :state_dim].set(
        s.astype(jnp.bfloat16))
    a_pad = jnp.zeros((B, AP), jnp.float32).at[:, :action_dim].set(a)

    out = pl.pallas_call(
        functools.partial(_critic_kernel, action_dim=action_dim),
        out_shape=jax.ShapeDtypeStruct((B, 2), jnp.float32),
        # No grid: single invocation, all operands fully VMEM-resident
        # (~1.3 MiB total, far under the scoped VMEM limit on every gen).
    )(s_pad, a_pad, w1, b1, w2s1, w2s2, w2a, b2, w3, b3)

    return out[:, 0:1], out[:, 1:2]


# ---------------------------------------------------------------------------
# Deterministic parameter construction (PyTorch nn.Linear-style uniform init).
# ---------------------------------------------------------------------------
def _linear_params(key, in_f, out_f):
    bound = 1.0 / math.sqrt(in_f)
    kw, kb = jax.random.split(key)
    # Stored as (in_f, out_f): already transposed relative to PyTorch's weight.
    w = jax.random.uniform(kw, (in_f, out_f), jnp.float32, -bound, bound)
    b = jax.random.uniform(kb, (1, out_f), jnp.float32, -bound, bound)
    return w, b


def make_critic_params(key, state_dim, action_dim):
    keys = jax.random.split(key, 8)
    # Head 1: layer_1, layer_2_s, layer_2_a, layer_3
    w1, b1 = _linear_params(keys[0], state_dim, H1)
    w2s, _ = _linear_params(keys[1], H1, H2)          # bias never used in fwd
    w2a, b2a = _linear_params(keys[2], action_dim, H2)
    w3, b3 = _linear_params(keys[3], H2, 1)
    head1 = (w1, b1, w2s, w2a, b2a, w3, b3)
    # Head 2: layer_4, layer_5_s, layer_5_a, layer_6
    w4, b4 = _linear_params(keys[4], state_dim, H1)
    w5s, _ = _linear_params(keys[5], H1, H2)          # bias never used in fwd
    w5a, b5a = _linear_params(keys[6], action_dim, H2)
    w6, b6 = _linear_params(keys[7], H2, 1)
    head2 = (w4, b4, w5s, w5a, b5a, w6, b6)
    return head1, head2


def pack_critic_params(head1, head2, state_dim, action_dim):
    """Pad / fuse / cast parameters into the layout the kernel expects."""
    w1a, b1a, w2sa, w2aa, b2aa, w3a, b3a = head1
    w1b, b1b, w2sb, w2ab, b2ab, w3b, b3b = head2
    SP = _round_up(state_dim, 16)        # bf16 sublane packing unit

    # layer_1 / layer_4 fused along output columns; unused padding zeroed.
    w1 = jnp.zeros((SP, 2 * H1P), jnp.float32)
    w1 = w1.at[:state_dim, :H1].set(w1a)
    w1 = w1.at[:state_dim, H1P:H1P + H1].set(w1b)
    w1 = w1.astype(jnp.bfloat16)
    b1 = jnp.zeros((1, 2 * H1P), jnp.float32)
    b1 = b1.at[:, :H1].set(b1a).at[:, H1P:H1P + H1].set(b1b)

    # layer_2_s / layer_5_s: per-head (H1P, H2P) blocks ONLY (no action rows).
    # Zeroed padding rows/cols keep the h1 / h2 padding lanes inert.
    def _pack_w2s(w):
        p = jnp.zeros((H1P, H2P), jnp.float32).at[:H1, :H2].set(w)
        return p.astype(jnp.bfloat16)

    w2s1 = _pack_w2s(w2sa)
    w2s2 = _pack_w2s(w2sb)

    # layer_2_a / layer_5_a weights stay f32 (VPU rank-1 MAC rows), fused along N.
    w2a = jnp.zeros((action_dim, 2 * H2P), jnp.float32)
    w2a = w2a.at[:, :H2].set(w2aa).at[:, H2P:H2P + H2].set(w2ab)
    b2 = jnp.zeros((1, 2 * H2P), jnp.float32)
    b2 = b2.at[:, :H2].set(b2aa).at[:, H2P:H2P + H2].set(b2ab)

    # layer_3 / layer_6 weights as f32 rows; biases folded into one (1, 2) add.
    w3 = jnp.zeros((2, H2P), jnp.float32)
    w3 = w3.at[0:1, :H2].set(w3a.T).at[1:2, :H2].set(w3b.T)
    b3 = jnp.concatenate([b3a, b3b], axis=-1)            # (1, 2)

    return w1, b1, w2s1, w2s2, w2a, b2, w3, b3


# ---------------------------------------------------------------------------
# References for correctness checking.
# ---------------------------------------------------------------------------
def _reference_head_f32(s, a, head):
    """Pure-f32 pure-JAX reference (original PyTorch semantics)."""
    w1, b1, w2s, w2a, b2a, w3, b3 = head
    h1 = jnp.maximum(s @ w1 + b1, 0.0)
    h2 = jnp.maximum(h1 @ w2s + a @ w2a + b2a, 0.0)
    return h2 @ w3 + b3


def _reference_packed(s, a, packed):
    """Pure-JAX reference using the SAME packed/bf16 parameters as the kernel."""
    w1, b1, w2s1, w2s2, w2a, b2, w3, b3 = packed
    B, state_dim = s.shape
    action_dim = a.shape[1]
    SP = w1.shape[0]
    s_pad = jnp.zeros((B, SP), jnp.bfloat16).at[:, :state_dim].set(
        s.astype(jnp.bfloat16))
    h1 = jnp.maximum(
        jnp.dot(s_pad, w1, preferred_element_type=jnp.float32) + b1, 0.0)
    h1a = h1[:, :H1P].astype(jnp.bfloat16)
    h1b = h1[:, H1P:].astype(jnp.bfloat16)
    h2a = jnp.dot(h1a, w2s1, preferred_element_type=jnp.float32) + b2[:, :H2P]
    h2b = jnp.dot(h1b, w2s2, preferred_element_type=jnp.float32) + b2[:, H2P:]
    for j in range(action_dim):
        aj = a[:, j:j + 1]
        h2a = h2a + aj * w2a[j:j + 1, :H2P]
        h2b = h2b + aj * w2a[j:j + 1, H2P:]
    h2a = jnp.maximum(h2a, 0.0)
    h2b = jnp.maximum(h2b, 0.0)
    q1 = jnp.sum(h2a * w3[0:1, :], axis=-1, keepdims=True) + b3[:, 0:1]
    q2 = jnp.sum(h2b * w3[1:2, :], axis=-1, keepdims=True) + b3[:, 1:2]
    return q1, q2


if __name__ == "__main__":
    B, STATE_DIM, ACTION_DIM = 8, 24, 2

    key = jax.random.PRNGKey(0)
    k_s, k_a, k_p = jax.random.split(key, 3)
    s = jax.random.normal(k_s, (B, STATE_DIM), jnp.float32)
    a = jax.random.normal(k_a, (B, ACTION_DIM), jnp.float32)

    head1, head2 = make_critic_params(k_p, STATE_DIM, ACTION_DIM)
    packed = pack_critic_params(head1, head2, STATE_DIM, ACTION_DIM)

    q1, q2 = jax.jit(critic_forward)(s, a, packed)
    q1 = jax.block_until_ready(q1)
    q2 = jax.block_until_ready(q2)
    assert q1.shape == (B, 1) and q2.shape == (B, 1)

    # Tight check vs. a pure-JAX reference using the SAME bf16 packed weights.
    r1p, r2p = _reference_packed(s, a, packed)
    assert jnp.allclose(q1, r1p, atol=5e-3, rtol=5e-3)
    assert jnp.allclose(q2, r2p, atol=5e-3, rtol=5e-3)

    # Loose sanity check vs. the full-f32 reference (bf16 weight quantization).
    r1 = _reference_head_f32(s, a, head1)
    r2 = _reference_head_f32(s, a, head2)
    assert jnp.allclose(q1, r1, atol=5e-2, rtol=5e-2)
    assert jnp.allclose(q2, r2, atol=5e-2, rtol=5e-2)

    print("KERNEL_OK")
</pallas_src>

<mosaic_0001>
module attributes {stable_mosaic.version = 11 : i64} {
  func.func @_critic_kernel(%arg0: memref<8x32xbf16, #tpu.memory_space<vmem>>, %arg1: memref<8x128xf32, #tpu.memory_space<vmem>>, %arg2: memref<32x1792xbf16, #tpu.memory_space<vmem>>, %arg3: memref<1x1792xf32, #tpu.memory_space<vmem>>, %arg4: memref<896x640xbf16, #tpu.memory_space<vmem>>, %arg5: memref<896x640xbf16, #tpu.memory_space<vmem>>, %arg6: memref<2x1280xf32, #tpu.memory_space<vmem>>, %arg7: memref<1x1280xf32, #tpu.memory_space<vmem>>, %arg8: memref<2x640xf32, #tpu.memory_space<vmem>>, %arg9: memref<1x2xf32, #tpu.memory_space<vmem>>, %arg10: memref<8x2xf32, #tpu.memory_space<vmem>>) attributes {dimension_semantics = [], scalar_prefetch = 0 : i64, scratch_operands = 0 : i64, tpu.core_type = #tpu.core_type<tc>} {
    %c0 = arith.constant 0 : index
    %c0_0 = arith.constant 0 : index
    %0 = vector.load %arg0[%c0, %c0_0] : memref<8x32xbf16, #tpu.memory_space<vmem>>, vector<8x32xbf16>
    %c0_1 = arith.constant 0 : index
    %c0_2 = arith.constant 0 : index
    %1 = vector.load %arg2[%c0_1, %c0_2] : memref<32x1792xbf16, #tpu.memory_space<vmem>>, vector<32x1792xbf16>
    %cst = arith.constant dense<0.000000e+00> : vector<8x1792xf32>
    %2 = tpu.matmul %0, %1, %cst {dimension_numbers = #tpu.dot_dimension_numbers<[1], [0], [0], [1], [0, 0, 1, 1], [], []>} : vector<8x32xbf16>, vector<32x1792xbf16>, vector<8x1792xf32> -> vector<8x1792xf32>
    %c0_3 = arith.constant 0 : index
    %c0_4 = arith.constant 0 : index
    %3 = vector.load %arg3[%c0_3, %c0_4] : memref<1x1792xf32, #tpu.memory_space<vmem>>, vector<1x1792xf32>
    %4 = vector.broadcast %3 : vector<1x1792xf32> to vector<8x1792xf32>
    %5 = arith.addf %2, %4 : vector<8x1792xf32>
    %cst_5 = arith.constant 0.000000e+00 : f32
    %6 = vector.broadcast %cst_5 : f32 to vector<8x1792xf32>
    %7 = arith.maximumf %5, %6 : vector<8x1792xf32>
    %8 = vector.extract_strided_slice %7 {offsets = [0, 0], sizes = [8, 896], strides = [1, 1]} : vector<8x1792xf32> to vector<8x896xf32>
    %9 = arith.truncf %8 : vector<8x896xf32> to vector<8x896xbf16>
    %10 = vector.extract_strided_slice %7 {offsets = [0, 896], sizes = [8, 896], strides = [1, 1]} : vector<8x1792xf32> to vector<8x896xf32>
    %11 = arith.truncf %10 : vector<8x896xf32> to vector<8x896xbf16>
    %c0_6 = arith.constant 0 : index
    %c0_7 = arith.constant 0 : index
    %12 = vector.load %arg4[%c0_6, %c0_7] : memref<896x640xbf16, #tpu.memory_space<vmem>>, vector<896x640xbf16>
    %cst_8 = arith.constant dense<0.000000e+00> : vector<8x640xf32>
    %13 = tpu.matmul %9, %12, %cst_8 {dimension_numbers = #tpu.dot_dimension_numbers<[1], [0], [0], [1], [0, 0, 1, 1], [], []>} : vector<8x896xbf16>, vector<896x640xbf16>, vector<8x640xf32> -> vector<8x640xf32>
    %c0_9 = arith.constant 0 : index
    %c0_10 = arith.constant 0 : index
    %14 = vector.load %arg5[%c0_9, %c0_10] : memref<896x640xbf16, #tpu.memory_space<vmem>>, vector<896x640xbf16>
    %cst_11 = arith.constant dense<0.000000e+00> : vector<8x640xf32>
    %15 = tpu.matmul %11, %14, %cst_11 {dimension_numbers = #tpu.dot_dimension_numbers<[1], [0], [0], [1], [0, 0, 1, 1], [], []>} : vector<8x896xbf16>, vector<896x640xbf16>, vector<8x640xf32> -> vector<8x640xf32>
    %c0_12 = arith.constant 0 : index
    %c0_13 = arith.constant 0 : index
    %16 = vector.load %arg7[%c0_12, %c0_13] : memref<1x1280xf32, #tpu.memory_space<vmem>>, vector<1x640xf32>
    %17 = vector.broadcast %16 : vector<1x640xf32> to vector<8x640xf32>
    %18 = arith.addf %13, %17 : vector<8x640xf32>
    %c0_14 = arith.constant 0 : index
    %c640 = arith.constant 640 : index
    %19 = vector.load %arg7[%c0_14, %c640] : memref<1x1280xf32, #tpu.memory_space<vmem>>, vector<1x640xf32>
    %20 = vector.broadcast %19 : vector<1x640xf32> to vector<8x640xf32>
    %21 = arith.addf %15, %20 : vector<8x640xf32>
    %c0_15 = arith.constant 0 : index
    %c0_16 = arith.constant 0 : index
    %22 = vector.load %arg1[%c0_15, %c0_16] : memref<8x128xf32, #tpu.memory_space<vmem>>, vector<8x1xf32>
    %c0_17 = arith.constant 0 : index
    %c0_18 = arith.constant 0 : index
    %23 = vector.load %arg6[%c0_17, %c0_18] : memref<2x1280xf32, #tpu.memory_space<vmem>>, vector<1x640xf32>
    %24 = vector.broadcast %22 : vector<8x1xf32> to vector<8x640xf32>
    %25 = vector.broadcast %23 : vector<1x640xf32> to vector<8x640xf32>
    %26 = arith.mulf %24, %25 : vector<8x640xf32>
    %27 = arith.addf %18, %26 : vector<8x640xf32>
    %c0_19 = arith.constant 0 : index
    %c640_20 = arith.constant 640 : index
    %28 = vector.load %arg6[%c0_19, %c640_20] : memref<2x1280xf32, #tpu.memory_space<vmem>>, vector<1x640xf32>
    %29 = vector.broadcast %22 : vector<8x1xf32> to vector<8x640xf32>
    %30 = vector.broadcast %28 : vector<1x640xf32> to vector<8x640xf32>
    %31 = arith.mulf %29, %30 : vector<8x640xf32>
    %32 = arith.addf %21, %31 : vector<8x640xf32>
    %c0_21 = arith.constant 0 : index
    %c1 = arith.constant 1 : index
    %33 = vector.load %arg1[%c0_21, %c1] : memref<8x128xf32, #tpu.memory_space<vmem>>, vector<8x1xf32>
    %c1_22 = arith.constant 1 : index
    %c0_23 = arith.constant 0 : index
    %34 = vector.load %arg6[%c1_22, %c0_23] : memref<2x1280xf32, #tpu.memory_space<vmem>>, vector<1x640xf32>
    %35 = vector.broadcast %33 : vector<8x1xf32> to vector<8x640xf32>
    %36 = vector.broadcast %34 : vector<1x640xf32> to vector<8x640xf32>
    %37 = arith.mulf %35, %36 : vector<8x640xf32>
    %38 = arith.addf %27, %37 : vector<8x640xf32>
    %c1_24 = arith.constant 1 : index
    %c640_25 = arith.constant 640 : index
    %39 = vector.load %arg6[%c1_24, %c640_25] : memref<2x1280xf32, #tpu.memory_space<vmem>>, vector<1x640xf32>
    %40 = vector.broadcast %33 : vector<8x1xf32> to vector<8x640xf32>
    %41 = vector.broadcast %39 : vector<1x640xf32> to vector<8x640xf32>
    %42 = arith.mulf %40, %41 : vector<8x640xf32>
    %43 = arith.addf %32, %42 : vector<8x640xf32>
    %cst_26 = arith.constant 0.000000e+00 : f32
    %44 = vector.broadcast %cst_26 : f32 to vector<8x640xf32>
    %45 = arith.maximumf %38, %44 : vector<8x640xf32>
    %cst_27 = arith.constant 0.000000e+00 : f32
    %46 = vector.broadcast %cst_27 : f32 to vector<8x640xf32>
    %47 = arith.maximumf %43, %46 : vector<8x640xf32>
    %c0_28 = arith.constant 0 : index
    %c0_29 = arith.constant 0 : index
    %48 = vector.load %arg8[%c0_28, %c0_29] : memref<2x640xf32, #tpu.memory_space<vmem>>, vector<1x640xf32>
    %49 = vector.broadcast %48 : vector<1x640xf32> to vector<8x640xf32>
    %50 = arith.mulf %45, %49 : vector<8x640xf32>
    %cst_30 = arith.constant dense<0.000000e+00> : vector<8xf32>
    %51 = vector.multi_reduction <add>, %50, %cst_30 [1] : vector<8x640xf32> to vector<8xf32>
    %52 = vector.shape_cast %51 : vector<8xf32> to vector<8x1xf32>
    %c1_31 = arith.constant 1 : index
    %c0_32 = arith.constant 0 : index
    %53 = vector.load %arg8[%c1_31, %c0_32] : memref<2x640xf32, #tpu.memory_space<vmem>>, vector<1x640xf32>
    %54 = vector.broadcast %53 : vector<1x640xf32> to vector<8x640xf32>
    %55 = arith.mulf %47, %54 : vector<8x640xf32>
    %cst_33 = arith.constant dense<0.000000e+00> : vector<8xf32>
    %56 = vector.multi_reduction <add>, %55, %cst_33 [1] : vector<8x640xf32> to vector<8xf32>
    %57 = vector.shape_cast %56 : vector<8xf32> to vector<8x1xf32>
    %58 = tpu.concatenate %52, %57 in 1 : vector<8x1xf32>, vector<8x1xf32> -> vector<8x2xf32>
    %c0_34 = arith.constant 0 : index
    %c0_35 = arith.constant 0 : index
    %59 = vector.load %arg9[%c0_34, %c0_35] : memref<1x2xf32, #tpu.memory_space<vmem>>, vector<1x2xf32>
    %60 = vector.broadcast %59 : vector<1x2xf32> to vector<8x2xf32>
    %61 = arith.addf %58, %60 : vector<8x2xf32>
    %c0_36 = arith.constant 0 : index
    %c0_37 = arith.constant 0 : index
    %62 = vector.load %arg10[%c0_36, %c0_37] : memref<8x2xf32, #tpu.memory_space<vmem>>, vector<8x2xf32>
    tpu.vector_store %arg10[%c0_36, %c0_37], %61 {strides = array<i32>} : memref<8x2xf32, #tpu.memory_space<vmem>>, vector<8x2xf32>,
    return
  }
}

</mosaic_0001>

<llo_original>
// kernel: critic_forward.1
$region0: #{critic_forward.1}
  #allocation0 [shape = 'u32[]', space=smem, size = 0x4, offset = 0x4, fixed_abs, tag = 'smem constant byte address 0x4 - core index']
  #allocation1 [shape = 'u32[144,128]{1,0:T(1,128)}', space=vmem, size = 0x12000, scoped, tag = 'internal scratch']
  %s0 = inlined_call_operand.vmem [shape: bf16[8,32], index: 0, kind: input, shape index: {}]
  %s1 = inlined_call_operand.vmem [shape: f32[8,128], index: 1, kind: input, shape index: {}]
  %s2 = inlined_call_operand.hbm [shape: bf16[32,1792], index: 2, kind: input, shape index: {}]
  %s3 = inlined_call_operand.hbm [shape: f32[1,1792], index: 3, kind: input, shape index: {}]
  %s4 = inlined_call_operand.hbm [shape: bf16[896,640], index: 4, kind: input, shape index: {}]
  %s5 = inlined_call_operand.hbm [shape: bf16[896,640], index: 5, kind: input, shape index: {}]
  %s6 = inlined_call_operand.hbm [shape: f32[2,1280], index: 6, kind: input, shape index: {}]
  %s7 = inlined_call_operand.hbm [shape: f32[1,1280], index: 7, kind: input, shape index: {}]
  %s8 = inlined_call_operand.hbm [shape: f32[2,640], index: 8, kind: input, shape index: {}]
  %s9 = inlined_call_operand.hbm [shape: f32[1,2], index: 9, kind: input, shape index: {}]
  %s10 = inlined_call_operand.vmem [shape: f32[8,2], index: 10, kind: output, shape index: {}]
  %s11 = sld [smem:[#allocation0]]
  $region82: #{critic_forward.1} parent=0
    _
  %s13 = ssub.s32 1, %s11
  %s14 = scalar_select 0, %s13, %s11
  $region1: #{critic_forward.1} parent=0
    #allocation2 [shape = 'u8[114688]{0}', space=vmem, size = 0x1c000, scoped, tag = 'input window, operand 2, single buffered']
    #allocation3 [shape = 's32[1]{0}', space=sflag, size = 0x4, scoped, tag = 'scoped memory for critic_forward.1']
    #allocation4 [shape = 'u8[7168]{0}', space=vmem, size = 0x1c00, scoped, tag = 'input window, operand 3, single buffered']
    #allocation5 [shape = 's32[1]{0}', space=sflag, size = 0x4, scoped, tag = 'scoped memory for critic_forward.1']
    #allocation6 [shape = 'u8[1146880]{0}', space=vmem, size = 0x118000, scoped, tag = 'input window, operand 4, single buffered']
    #allocation7 [shape = 'u8[1146880]{0}', space=vmem, size = 0x118000, scoped, tag = 'input window, operand 5, single buffered']
    #allocation8 [shape = 's32[1]{0}', space=sflag, size = 0x4, scoped, tag = 'scoped memory for critic_forward.1']
    #allocation9 [shape = 'u8[10240]{0}', space=vmem, size = 0x2800, scoped, tag = 'input window, operand 6, single buffered']
    #allocation10 [shape = 'u8[5120]{0}', space=vmem, size = 0x1400, scoped, tag = 'input window, operand 7, single buffered']
    #allocation11 [shape = 's32[1]{0}', space=sflag, size = 0x4, scoped, tag = 'scoped memory for critic_forward.1']
    #allocation12 [shape = 'u8[5120]{0}', space=vmem, size = 0x1400, scoped, tag = 'input window, operand 8, single buffered']
    #allocation13 [shape = 'u8[512]{0}', space=vmem, size = 0x400, scoped, tag = 'input window, operand 9, single buffered']
    #allocation14 [shape = 's32[1]{0}', space=sflag, size = 0x4, scoped, tag = 'scoped memory for critic_forward.1']
    %15 = vsyncpa [#allocation3], 0
    %16 = vsyncpa [#allocation5], 0
    %17 = vsyncpa [#allocation8], 0
    %18 = vsyncpa [#allocation11], 0
    %19 = vsyncpa [#allocation14], 0
    // Predicated region
    $region2: #{critic_forward.1} parent=1 // pred_check
      _
    $region3: #{critic_forward.1} parent=1 // pred_check_branch
      %21 = sbr.rel (0) target = $region5
    $region4: #{critic_forward.1} parent=1 // pred_region
      _
    $region5: #{critic_forward.1} parent=1 // pred_fallthru
      _
    // Predicated region
    $region6: #{critic_forward.1} parent=1 // pred_check
      _
    $region7: #{critic_forward.1} parent=1 // pred_check_branch
      %23 = sbr.rel (0) target = $region9
    $region8: #{critic_forward.1} parent=1 // pred_region
      _
    $region9: #{critic_forward.1} parent=1 // pred_fallthru
      _
    // Predicated region
    $region10: #{critic_forward.1} parent=1 // pred_check
      _
    $region11: #{critic_forward.1} parent=1 // pred_check_branch
      %25 = sbr.rel (0) target = $region13
    $region12: #{critic_forward.1} parent=1 // pred_region
      %s27 = ssub.s32 3584, 3584
      %28 = vsyncadd [#allocation3], %s27
      %s29 = sshll.u32 [#allocation2], 4
      %s30 = int_to_ptr.vmem [resolvable:$true] %s29
      %35 = dma.hbm_to_vmem [thread:$0]  %s2, 3584, %s30, [#allocation3], 896, 896, 56
    $region13: #{critic_forward.1} parent=1 // pred_fallthru
      _
    // Predicated region
    $region14: #{critic_forward.1} parent=1 // pred_check
      _
    $region15: #{critic_forward.1} parent=1 // pred_check_branch
      %37 = sbr.rel (0) target = $region17
    $region16: #{critic_forward.1} parent=1 // pred_region
      %s39 = ssub.s32 224, 224
      %40 = vsyncadd [#allocation5], %s39
      %s42 = sshll.u32 [#allocation4], 4
      %s43 = int_to_ptr.vmem [resolvable:$true] %s42
      %45 = dma.hbm_to_vmem [thread:$0]  %s3, 224, %s43, [#allocation5]
    $region17: #{critic_forward.1} parent=1 // pred_fallthru
      _
    // Predicated region
    $region18: #{critic_forward.1} parent=1 // pred_check
      _
    $region19: #{critic_forward.1} parent=1 // pred_check_branch
      %47 = sbr.rel (0) target = $region21
    $region20: #{critic_forward.1} parent=1 // pred_region
      %s49 = ssub.s32 35840, 35840
      %50 = vsyncadd [#allocation5], %s49
      %s51 = sshll.u32 [#allocation6], 4
      %s52 = int_to_ptr.vmem [resolvable:$true] %s51
      %57 = dma.hbm_to_vmem [thread:$0]  %s4, 35840, %s52, [#allocation5], 320, 320, 20
    $region21: #{critic_forward.1} parent=1 // pred_fallthru
      _
    // Predicated region
    $region22: #{critic_forward.1} parent=1 // pred_check
      _
    $region23: #{critic_forward.1} parent=1 // pred_check_branch
      %59 = sbr.rel (0) target = $region25
    $region24: #{critic_forward.1} parent=1 // pred_region
      %s61 = ssub.s32 35840, 35840
      %62 = vsyncadd [#allocation8], %s61
      %s63 = sshll.u32 [#allocation7], 4
      %s64 = int_to_ptr.vmem [resolvable:$true] %s63
      %69 = dma.hbm_to_vmem [thread:$0]  %s5, 35840, %s64, [#allocation8], 320, 320, 20
    $region25: #{critic_forward.1} parent=1 // pred_fallthru
      _
    // Predicated region
    $region26: #{critic_forward.1} parent=1 // pred_check
      _
    $region27: #{critic_forward.1} parent=1 // pred_check_branch
      %71 = sbr.rel (0) target = $region29
    $region28: #{critic_forward.1} parent=1 // pred_region
      %s73 = ssub.s32 320, 320
      %74 = vsyncadd [#allocation8], %s73
      %s76 = sshll.u32 [#allocation9], 4
      %s77 = int_to_ptr.vmem [resolvable:$true] %s76
      %79 = dma.hbm_to_vmem [thread:$0]  %s6, 320, %s77, [#allocation8]
    $region29: #{critic_forward.1} parent=1 // pred_fallthru
      _
    // Predicated region
    $region30: #{critic_forward.1} parent=1 // pred_check
      _
    $region31: #{critic_forward.1} parent=1 // pred_check_branch
      %81 = sbr.rel (0) target = $region33
    $region32: #{critic_forward.1} parent=1 // pred_region
      %s83 = ssub.s32 160, 160
      %84 = vsyncadd [#allocation11], %s83
      %s86 = sshll.u32 [#allocation10], 4
      %s87 = int_to_ptr.vmem [resolvable:$true] %s86
      %89 = dma.hbm_to_vmem [thread:$0]  %s7, 160, %s87, [#allocation11]
    $region33: #{critic_forward.1} parent=1 // pred_fallthru
      _
    // Predicated region
    $region34: #{critic_forward.1} parent=1 // pred_check
      _
    $region35: #{critic_forward.1} parent=1 // pred_check_branch
      %91 = sbr.rel (0) target = $region37
    $region36: #{critic_forward.1} parent=1 // pred_region
      %s93 = ssub.s32 160, 160
      %94 = vsyncadd [#allocation11], %s93
      %s96 = sshll.u32 [#allocation12], 4
      %s97 = int_to_ptr.vmem [resolvable:$true] %s96
      %99 = dma.hbm_to_vmem [thread:$0]  %s8, 160, %s97, [#allocation11]
    $region37: #{critic_forward.1} parent=1 // pred_fallthru
      _
    // Predicated region
    $region38: #{critic_forward.1} parent=1 // pred_check
      _
    $region39: #{critic_forward.1} parent=1 // pred_check_branch
      %101 = sbr.rel (0) target = $region41
    $region40: #{critic_forward.1} parent=1 // pred_region
      %s103 = ssub.s32 16, 16
      %104 = vsyncadd [#allocation14], %s103
      %s106 = sshll.u32 [#allocation13], 4
      %s107 = int_to_ptr.vmem [resolvable:$true] %s106
      %109 = dma.hbm_to_vmem [thread:$0]  %s9, 16, %s107, [#allocation14]
    $region41: #{critic_forward.1} parent=1 // pred_fallthru
      _
    // Predicated region
    $region42: #{critic_forward.1} parent=1 // pred_check
      _
    $region43: #{critic_forward.1} parent=1 // pred_check_branch
      %111 = sbr.rel (0) target = $region45
    $region44: #{critic_forward.1} parent=1 // pred_region
      %112 = dma.done [#allocation3], 3584
    $region45: #{critic_forward.1} parent=1 // pred_fallthru
      _
    // Predicated region
    $region46: #{critic_forward.1} parent=1 // pred_check
      _
    $region47: #{critic_forward.1} parent=1 // pred_check_branch
      %114 = sbr.rel (0) target = $region49
    $region48: #{critic_forward.1} parent=1 // pred_region
      %115 = dma.done [#allocation5], 224
    $region49: #{critic_forward.1} parent=1 // pred_fallthru
      _
    // Predicated region
    $region50: #{critic_forward.1} parent=1 // pred_check
      _
    $region51: #{critic_forward.1} parent=1 // pred_check_branch
      %117 = sbr.rel (0) target = $region53
    $region52: #{critic_forward.1} parent=1 // pred_region
      %118 = dma.done [#allocation5], 35840
    $region53: #{critic_forward.1} parent=1 // pred_fallthru
      _
    // Predicated region
    $region54: #{critic_forward.1} parent=1 // pred_check
      _
    $region55: #{critic_forward.1} parent=1 // pred_check_branch
      %120 = sbr.rel (0) target = $region57
    $region56: #{critic_forward.1} parent=1 // pred_region
      %121 = dma.done [#allocation8], 35840
    $region57: #{critic_forward.1} parent=1 // pred_fallthru
      _
    // Predicated region
    $region58: #{critic_forward.1} parent=1 // pred_check
      _
    $region59: #{critic_forward.1} parent=1 // pred_check_branch
      %123 = sbr.rel (0) target = $region61
    $region60: #{critic_forward.1} parent=1 // pred_region
      %124 = dma.done [#allocation8], 320
    $region61: #{critic_forward.1} parent=1 // pred_fallthru
      _
    // Predicated region
    $region62: #{critic_forward.1} parent=1 // pred_check
      _
    $region63: #{critic_forward.1} parent=1 // pred_check_branch
      %126 = sbr.rel (0) target = $region65
    $region64: #{critic_forward.1} parent=1 // pred_region
      %127 = dma.done [#allocation11], 160
    $region65: #{critic_forward.1} parent=1 // pred_fallthru
      _
    // Predicated region
    $region66: #{critic_forward.1} parent=1 // pred_check
      _
    $region67: #{critic_forward.1} parent=1 // pred_check_branch
      %129 = sbr.rel (0) target = $region69
    $region68: #{critic_forward.1} parent=1 // pred_region
      %130 = dma.done [#allocation11], 160
    $region69: #{critic_forward.1} parent=1 // pred_fallthru
      _
    // Predicated region
    $region70: #{critic_forward.1} parent=1 // pred_check
      _
    $region71: #{critic_forward.1} parent=1 // pred_check_branch
      %132 = sbr.rel (0) target = $region73
    $region72: #{critic_forward.1} parent=1 // pred_region
      %133 = dma.done [#allocation14], 16
    $region73: #{critic_forward.1} parent=1 // pred_fallthru
      _
    %v135 = vld [vmem:[%s0] sm:$0xf]
    %v136 = vld [vmem:[#allocation2] sm:$0xff]
    %v137 = vld [vmem:[#allocation2 + $0x8] sm:$0xff]
    %v138 = vld [vmem:[#allocation2 + $0x10] sm:$0xff]
    %v139 = vld [vmem:[#allocation2 + $0x18] sm:$0xff]
    %v140 = vld [vmem:[#allocation2 + $0x20] sm:$0xff]
    %v141 = vld [vmem:[#allocation2 + $0x28] sm:$0xff]
    %v142 = vld [vmem:[#allocation2 + $0x30] sm:$0xff]
    %v143 = vld [vmem:[#allocation2 + $0x38] sm:$0xff]
    %v144 = vld [vmem:[#allocation2 + $0x40] sm:$0xff]
    %v145 = vld [vmem:[#allocation2 + $0x48] sm:$0xff]
    %v146 = vld [vmem:[#allocation2 + $0x50] sm:$0xff]
    %v147 = vld [vmem:[#allocation2 + $0x58] sm:$0xff]
    %v148 = vld [vmem:[#allocation2 + $0x60] sm:$0xff]
    %v149 = vld [vmem:[#allocation2 + $0x68] sm:$0xff]
    %v150 = vld [vmem:[#allocation2 + $0x70] sm:$0xff]
    %v151 = vld [vmem:[#allocation2 + $0x78] sm:$0xff]
    %v152 = vld [vmem:[#allocation2 + $0x80] sm:$0xff]
    %v153 = vld [vmem:[#allocation2 + $0x88] sm:$0xff]
    %v154 = vld [vmem:[#allocation2 + $0x90] sm:$0xff]
    %v155 = vld [vmem:[#allocation2 + $0x98] sm:$0xff]
    %v156 = vld [vmem:[#allocation2 + $0xa0] sm:$0xff]
    %v157 = vld [vmem:[#allocation2 + $0xa8] sm:$0xff]
    %v158 = vld [vmem:[#allocation2 + $0xb0] sm:$0xff]
    %v159 = vld [vmem:[#allocation2 + $0xb8] sm:$0xff]
    %v160 = vld [vmem:[#allocation2 + $0xc0] sm:$0xff]
    %v161 = vld [vmem:[#allocation2 + $0xc8] sm:$0xff]
    %v162 = vld [vmem:[#allocation2 + $0xd0] sm:$0xff]
    %v163 = vld [vmem:[#allocation2 + $0xd8] sm:$0xff]
    %v164 = vld [vmem:[#allocation4] sm:$0xff]
    %v165 = vld [vmem:[#allocation4 + $0x8] sm:$0x3f]
    %v168 = vlaneseq
    %v169 = vshrl.u32 %v168, 7
    %v170 = vsub.s32 0, %v169
    %v171 = vrot.slane %v164, %v170
    %v172 = vlaneseq
    %v173 = vshrl.u32 %v172, 7
    %v174 = vsub.s32 1, %v173
    %v175 = vrot.slane %v164, %v174
    %v176 = vlaneseq
    %v177 = vshrl.u32 %v176, 7
    %v178 = vsub.s32 2, %v177
    %v179 = vrot.slane %v164, %v178
    %v180 = vlaneseq
    %v181 = vshrl.u32 %v180, 7
    %v182 = vsub.s32 3, %v181
    %v183 = vrot.slane %v164, %v182
    %v184 = vlaneseq
    %v185 = vshrl.u32 %v184, 7
    %v186 = vsub.s32 4, %v185
    %v187 = vrot.slane %v164, %v186
    %v188 = vlaneseq
    %v189 = vshrl.u32 %v188, 7
    %v190 = vsub.s32 5, %v189
    %v191 = vrot.slane %v164, %v190
    %v192 = vlaneseq
    %v193 = vshrl.u32 %v192, 7
    %v194 = vsub.s32 6, %v193
    %v195 = vrot.slane %v164, %v194
    %v196 = vlaneseq
    %v197 = vshrl.u32 %v196, 7
    %v198 = vsub.s32 7, %v197
    %v199 = vrot.slane %v164, %v198
    %v200 = vlaneseq
    %v201 = vshrl.u32 %v200, 7
    %v202 = vsub.s32 0, %v201
    %v203 = vrot.slane %v165, %v202
    %v204 = vlaneseq
    %v205 = vshrl.u32 %v204, 7
    %v206 = vsub.s32 1, %v205
    %v207 = vrot.slane %v165, %v206
    %v208 = vlaneseq
    %v209 = vshrl.u32 %v208, 7
    %v210 = vsub.s32 2, %v209
    %v211 = vrot.slane %v165, %v210
    %v212 = vlaneseq
    %v213 = vshrl.u32 %v212, 7
    %v214 = vsub.s32 3, %v213
    %v215 = vrot.slane %v165, %v214
    %v216 = vlaneseq
    %v217 = vshrl.u32 %v216, 7
    %v218 = vsub.s32 4, %v217
    %v219 = vrot.slane %v165, %v218
    %v220 = vlaneseq
    %v221 = vshrl.u32 %v220, 7
    %v222 = vsub.s32 5, %v221
    %v223 = vrot.slane %v165, %v222
    %v266 = vunpack.c.l.b16 %v136
    %v267 = vunpack.c.h.b16 %v136
    %v268 = vunpack.c.l.b16 %v137
    %v269 = vunpack.c.h.b16 %v137
    %v270 = vunpack.c.l.b16 %v138
    %v271 = vunpack.c.h.b16 %v138
    %v272 = vunpack.c.l.b16 %v139
    %v273 = vunpack.c.h.b16 %v139
    %v274 = vunpack.c.l.b16 %v140
    %v275 = vunpack.c.h.b16 %v140
    %v276 = vunpack.c.l.b16 %v141
    %v277 = vunpack.c.h.b16 %v141
    %v278 = vunpack.c.l.b16 %v142
    %v279 = vunpack.c.h.b16 %v142
    %v280 = vunpack.c.l.b16 %v143
    %v281 = vunpack.c.h.b16 %v143
    %v282 = vunpack.c.l.b16 %v144
    %v283 = vunpack.c.h.b16 %v144
    %v284 = vunpack.c.l.b16 %v145
    %v285 = vunpack.c.h.b16 %v145
    %v286 = vunpack.c.l.b16 %v146
    %v287 = vunpack.c.h.b16 %v146
    %v288 = vunpack.c.l.b16 %v147
    %v289 = vunpack.c.h.b16 %v147
    %v290 = vunpack.c.l.b16 %v148
    %v291 = vunpack.c.h.b16 %v148
    %v292 = vunpack.c.l.b16 %v149
    %v293 = vunpack.c.h.b16 %v149
    %v294 = vunpack.c.l.b16 %v150
    %v295 = vunpack.c.h.b16 %v150
    %v296 = vunpack.c.l.b16 %v151
    %v297 = vunpack.c.h.b16 %v151
    %v298 = vunpack.c.l.b16 %v152
    %v299 = vunpack.c.h.b16 %v152
    %v300 = vunpack.c.l.b16 %v153
    %v301 = vunpack.c.h.b16 %v153
    %v302 = vunpack.c.l.b16 %v154
    %v303 = vunpack.c.h.b16 %v154
    %v304 = vunpack.c.l.b16 %v155
    %v305 = vunpack.c.h.b16 %v155
    %v306 = vunpack.c.l.b16 %v156
    %v307 = vunpack.c.h.b16 %v156
    %v308 = vunpack.c.l.b16 %v157
    %v309 = vunpack.c.h.b16 %v157
    %v310 = vunpack.c.l.b16 %v158
    %v311 = vunpack.c.h.b16 %v158
    %v312 = vunpack.c.l.b16 %v159
    %v313 = vunpack.c.h.b16 %v159
    %v314 = vunpack.c.l.b16 %v160
    %v315 = vunpack.c.h.b16 %v160
    %v316 = vunpack.c.l.b16 %v161
    %v317 = vunpack.c.h.b16 %v161
    %v318 = vunpack.c.l.b16 %v162
    %v319 = vunpack.c.h.b16 %v162
    %v320 = vunpack.c.l.b16 %v163
    %v321 = vunpack.c.h.b16 %v163
    %v322 = vpack.c.b16 %v280, %v266
    %v323 = vpack.c.b16 %v281, %v267
    %v324 = vpack.c.b16 %v282, %v268
    %v325 = vpack.c.b16 %v283, %v269
    %v326 = vpack.c.b16 %v284, %v270
    %v327 = vpack.c.b16 %v285, %v271
    %v328 = vpack.c.b16 %v286, %v272
    %v329 = vpack.c.b16 %v287, %v273
    %v330 = vpack.c.b16 %v288, %v274
    %v331 = vpack.c.b16 %v289, %v275
    %v332 = vpack.c.b16 %v290, %v276
    %v333 = vpack.c.b16 %v291, %v277
    %v334 = vpack.c.b16 %v292, %v278
    %v335 = vpack.c.b16 %v293, %v279
    %v336 = vpack.c.b16 %v308, %v294
    %v337 = vpack.c.b16 %v309, %v295
    %v338 = vpack.c.b16 %v310, %v296
    %v339 = vpack.c.b16 %v311, %v297
    %v340 = vpack.c.b16 %v312, %v298
    %v341 = vpack.c.b16 %v313, %v299
    %v342 = vpack.c.b16 %v314, %v300
    %v343 = vpack.c.b16 %v315, %v301
    %v344 = vpack.c.b16 %v316, %v302
    %v345 = vpack.c.b16 %v317, %v303
    %v346 = vpack.c.b16 %v318, %v304
    %v347 = vpack.c.b16 %v319, %v305
    %v348 = vpack.c.b16 %v320, %v306
    %v349 = vpack.c.b16 %v321, %v307
    %vm378 = vcmask 261120
    %v380 = vsel %vm378, %v135, 0
    %382 = vmatprep.subr.bf16.mxu0 %v323
    %383 = vmatpush1.bf16.msra.mxu0 %v322
    %384 = vmatprep.subr.bf16.mxu0 %v337
    %385 = vmatpush1.bf16.msra.mxu0 %v336
    %386 = vmatprep.subr.bf16.mxu0 0
    %387 = vmatpush1.bf16.msra.mxu0 0
    %388 = vmatprep.subr.bf16.mxu0 0
    %389 = vmatpush1.bf16.msra.mxu0 0
    %390 = vmatprep.subr.bf16.mxu0 0
    %391 = vmatpush1.bf16.msra.mxu0 0
    %392 = vmatprep.subr.bf16.mxu0 0
    %393 = vmatpush1.bf16.msra.mxu0 0
    %394 = vmatprep.subr.bf16.mxu0 0
    %395 = vmatpush1.bf16.msra.mxu0 0
    %396 = vmatprep.subr.bf16.mxu0 0
    %397 = vmatpush1.bf16.msra.mxu0 0
    %398 = vmatprep.subr.bf16.mxu0 0
    %399 = vmatpush1.bf16.msra.mxu0 0
    %400 = vmatprep.subr.bf16.mxu0 0
    %401 = vmatpush1.bf16.msra.mxu0 0
    %402 = vmatprep.subr.bf16.mxu0 0
    %403 = vmatpush1.bf16.msra.mxu0 0
    %404 = vmatprep.subr.bf16.mxu0 0
    %405 = vmatpush1.bf16.msra.mxu0 0
    %406 = vmatprep.subr.bf16.mxu0 0
    %407 = vmatpush1.bf16.msra.mxu0 0
    %408 = vmatprep.subr.bf16.mxu0 0
    %409 = vmatpush1.bf16.msra.mxu0 0
    %410 = vmatprep.subr.bf16.mxu0 0
    %411 = vmatpush1.bf16.msra.mxu0 0
    %412 = vmatprep.subr.bf16.mxu0 0
    %413 = vmatpush1.bf16.msra.mxu0 0
    %414 = vmatprep.mubr.bf16.mxu0 0
    %415 = vmatmul.mubr.bf16.gmra.mrb[0].mxu0 %v380
    %v416 = vpop.f32.mrb[0].mxu0
    %v417 = vadd.f32 %v171, %v416
    %v418 = vpop.f32.mrb[0].mxu0
    %v419 = vadd.f32 %v175, %v418
    %v420 = vpop.f32.mrb[0].mxu0
    %v421 = vpop.f32.mrb[0].mxu0
    %422 = vdwg.mxu0
    %423 = vmatprep.subr.bf16.mxu0 %v325
    %424 = vmatpush1.bf16.msra.mxu0 %v324
    %425 = vmatprep.subr.bf16.mxu0 %v339
    %426 = vmatpush1.bf16.msra.mxu0 %v338
    %427 = vmatprep.subr.bf16.mxu0 0
    %428 = vmatpush1.bf16.msra.mxu0 0
    %429 = vmatprep.subr.bf16.mxu0 0
    %430 = vmatpush1.bf16.msra.mxu0 0
    %431 = vmatprep.subr.bf16.mxu0 0
    %432 = vmatpush1.bf16.msra.mxu0 0
    %433 = vmatprep.subr.bf16.mxu0 0
    %434 = vmatpush1.bf16.msra.mxu0 0
    %435 = vmatprep.subr.bf16.mxu0 0
    %436 = vmatpush1.bf16.msra.mxu0 0
    %437 = vmatprep.subr.bf16.mxu0 0
    %438 = vmatpush1.bf16.msra.mxu0 0
    %439 = vmatprep.subr.bf16.mxu0 0
    %440 = vmatpush1.bf16.msra.mxu0 0
    %441 = vmatprep.subr.bf16.mxu0 0
    %442 = vmatpush1.bf16.msra.mxu0 0
    %443 = vmatprep.subr.bf16.mxu0 0
    %444 = vmatpush1.bf16.msra.mxu0 0
    %445 = vmatprep.subr.bf16.mxu0 0
    %446 = vmatpush1.bf16.msra.mxu0 0
    %447 = vmatprep.subr.bf16.mxu0 0
    %448 = vmatpush1.bf16.msra.mxu0 0
    %449 = vmatprep.subr.bf16.mxu0 0
    %450 = vmatpush1.bf16.msra.mxu0 0
    %451 = vmatprep.subr.bf16.mxu0 0
    %452 = vmatpush1.bf16.msra.mxu0 0
    %453 = vmatprep.subr.bf16.mxu0 0
    %454 = vmatpush1.bf16.msra.mxu0 0
    %455 = vmatprep.mubr.bf16.mxu0 0
    %456 = vmatmul.mubr.bf16.gmra.mrb[0].mxu0 %v380
    %v457 = vpop.f32.mrb[0].mxu0
    %v458 = vadd.f32 %v179, %v457
    %v459 = vpop.f32.mrb[0].mxu0
    %v460 = vadd.f32 %v183, %v459
    %v461 = vpop.f32.mrb[0].mxu0
    %v462 = vpop.f32.mrb[0].mxu0
    %463 = vdwg.mxu0
    %464 = vmatprep.subr.bf16.mxu0 %v327
    %465 = vmatpush1.bf16.msra.mxu0 %v326
    %466 = vmatprep.subr.bf16.mxu0 %v341
    %467 = vmatpush1.bf16.msra.mxu0 %v340
    %468 = vmatprep.subr.bf16.mxu0 0
    %469 = vmatpush1.bf16.msra.mxu0 0
    %470 = vmatprep.subr.bf16.mxu0 0
    %471 = vmatpush1.bf16.msra.mxu0 0
    %472 = vmatprep.subr.bf16.mxu0 0
    %473 = vmatpush1.bf16.msra.mxu0 0
    %474 = vmatprep.subr.bf16.mxu0 0
    %475 = vmatpush1.bf16.msra.mxu0 0
    %476 = vmatprep.subr.bf16.mxu0 0
    %477 = vmatpush1.bf16.msra.mxu0 0
    %478 = vmatprep.subr.bf16.mxu0 0
    %479 = vmatpush1.bf16.msra.mxu0 0
    %480 = vmatprep.subr.bf16.mxu0 0
    %481 = vmatpush1.bf16.msra.mxu0 0
    %482 = vmatprep.subr.bf16.mxu0 0
    %483 = vmatpush1.bf16.msra.mxu0 0
    %484 = vmatprep.subr.bf16.mxu0 0
    %485 = vmatpush1.bf16.msra.mxu0 0
    %486 = vmatprep.subr.bf16.mxu0 0
    %487 = vmatpush1.bf16.msra.mxu0 0
    %488 = vmatprep.subr.bf16.mxu0 0
    %489 = vmatpush1.bf16.msra.mxu0 0
    %490 = vmatprep.subr.bf16.mxu0 0
    %491 = vmatpush1.bf16.msra.mxu0 0
    %492 = vmatprep.subr.bf16.mxu0 0
    %493 = vmatpush1.bf16.msra.mxu0 0
    %494 = vmatprep.subr.bf16.mxu0 0
    %495 = vmatpush1.bf16.msra.mxu0 0
    %496 = vmatprep.mubr.bf16.mxu0 0
    %497 = vmatmul.mubr.bf16.gmra.mrb[0].mxu0 %v380
    %v498 = vpop.f32.mrb[0].mxu0
    %v499 = vadd.f32 %v187, %v498
    %v500 = vpop.f32.mrb[0].mxu0
    %v501 = vadd.f32 %v191, %v500
    %v502 = vpop.f32.mrb[0].mxu0
    %v503 = vpop.f32.mrb[0].mxu0
    %504 = vdwg.mxu0
    %505 = vmatprep.subr.bf16.mxu0 %v329
    %506 = vmatpush1.bf16.msra.mxu0 %v328
    %507 = vmatprep.subr.bf16.mxu0 %v343
    %508 = vmatpush1.bf16.msra.mxu0 %v342
    %509 = vmatprep.subr.bf16.mxu0 0
    %510 = vmatpush1.bf16.msra.mxu0 0
    %511 = vmatprep.subr.bf16.mxu0 0
    %512 = vmatpush1.bf16.msra.mxu0 0
    %513 = vmatprep.subr.bf16.mxu0 0
    %514 = vmatpush1.bf16.msra.mxu0 0
    %515 = vmatprep.subr.bf16.mxu0 0
    %516 = vmatpush1.bf16.msra.mxu0 0
    %517 = vmatprep.subr.bf16.mxu0 0
    %518 = vmatpush1.bf16.msra.mxu0 0
    %519 = vmatprep.subr.bf16.mxu0 0
    %520 = vmatpush1.bf16.msra.mxu0 0
    %521 = vmatprep.subr.bf16.mxu0 0
    %522 = vmatpush1.bf16.msra.mxu0 0
    %523 = vmatprep.subr.bf16.mxu0 0
    %524 = vmatpush1.bf16.msra.mxu0 0
    %525 = vmatprep.subr.bf16.mxu0 0
    %526 = vmatpush1.bf16.msra.mxu0 0
    %527 = vmatprep.subr.bf16.mxu0 0
    %528 = vmatpush1.bf16.msra.mxu0 0
    %529 = vmatprep.subr.bf16.mxu0 0
    %530 = vmatpush1.bf16.msra.mxu0 0
    %531 = vmatprep.subr.bf16.mxu0 0
    %532 = vmatpush1.bf16.msra.mxu0 0
    %533 = vmatprep.subr.bf16.mxu0 0
    %534 = vmatpush1.bf16.msra.mxu0 0
    %535 = vmatprep.subr.bf16.mxu0 0
    %536 = vmatpush1.bf16.msra.mxu0 0
    %537 = vmatprep.mubr.bf16.mxu0 0
    %538 = vmatmul.mubr.bf16.gmra.mrb[0].mxu0 %v380
    %v539 = vpop.f32.mrb[0].mxu0
    %v540 = vadd.f32 %v195, %v539
    %v541 = vpop.f32.mrb[0].mxu0
    %v542 = vadd.f32 %v199, %v541
    %v543 = vpop.f32.mrb[0].mxu0
    %v544 = vpop.f32.mrb[0].mxu0
    %545 = vdwg.mxu0
    %546 = vmatprep.subr.bf16.mxu0 %v331
    %547 = vmatpush1.bf16.msra.mxu0 %v330
    %548 = vmatprep.subr.bf16.mxu0 %v345
    %549 = vmatpush1.bf16.msra.mxu0 %v344
    %550 = vmatprep.subr.bf16.mxu0 0
    %551 = vmatpush1.bf16.msra.mxu0 0
    %552 = vmatprep.subr.bf16.mxu0 0
    %553 = vmatpush1.bf16.msra.mxu0 0
    %554 = vmatprep.subr.bf16.mxu0 0
    %555 = vmatpush1.bf16.msra.mxu0 0
    %556 = vmatprep.subr.bf16.mxu0 0
    %557 = vmatpush1.bf16.msra.mxu0 0
    %558 = vmatprep.subr.bf16.mxu0 0
    %559 = vmatpush1.bf16.msra.mxu0 0
    %560 = vmatprep.subr.bf16.mxu0 0
    %561 = vmatpush1.bf16.msra.mxu0 0
    %562 = vmatprep.subr.bf16.mxu0 0
    %563 = vmatpush1.bf16.msra.mxu0 0
    %564 = vmatprep.subr.bf16.mxu0 0
    %565 = vmatpush1.bf16.msra.mxu0 0
    %566 = vmatprep.subr.bf16.mxu0 0
    %567 = vmatpush1.bf16.msra.mxu0 0
    %568 = vmatprep.subr.bf16.mxu0 0
    %569 = vmatpush1.bf16.msra.mxu0 0
    %570 = vmatprep.subr.bf16.mxu0 0
    %571 = vmatpush1.bf16.msra.mxu0 0
    %572 = vmatprep.subr.bf16.mxu0 0
    %573 = vmatpush1.bf16.msra.mxu0 0
    %574 = vmatprep.subr.bf16.mxu0 0
    %575 = vmatpush1.bf16.msra.mxu0 0
    %576 = vmatprep.subr.bf16.mxu0 0
    %577 = vmatpush1.bf16.msra.mxu0 0
    %578 = vmatprep.mubr.bf16.mxu0 0
    %579 = vmatmul.mubr.bf16.gmra.mrb[0].mxu0 %v380
    %v580 = vpop.f32.mrb[0].mxu0
    %v581 = vadd.f32 %v203, %v580
    %v582 = vpop.f32.mrb[0].mxu0
    %v583 = vadd.f32 %v207, %v582
    %v584 = vpop.f32.mrb[0].mxu0
    %v585 = vpop.f32.mrb[0].mxu0
    %586 = vdwg.mxu0
    %587 = vmatprep.subr.bf16.mxu0 %v333
    %588 = vmatpush1.bf16.msra.mxu0 %v332
    %589 = vmatprep.subr.bf16.mxu0 %v347
    %590 = vmatpush1.bf16.msra.mxu0 %v346
    %591 = vmatprep.subr.bf16.mxu0 0
    %592 = vmatpush1.bf16.msra.mxu0 0
    %593 = vmatprep.subr.bf16.mxu0 0
    %594 = vmatpush1.bf16.msra.mxu0 0
    %595 = vmatprep.subr.bf16.mxu0 0
    %596 = vmatpush1.bf16.msra.mxu0 0
    %597 = vmatprep.subr.bf16.mxu0 0
    %598 = vmatpush1.bf16.msra.mxu0 0
    %599 = vmatprep.subr.bf16.mxu0 0
    %600 = vmatpush1.bf16.msra.mxu0 0
    %601 = vmatprep.subr.bf16.mxu0 0
    %602 = vmatpush1.bf16.msra.mxu0 0
    %603 = vmatprep.subr.bf16.mxu0 0
    %604 = vmatpush1.bf16.msra.mxu0 0
    %605 = vmatprep.subr.bf16.mxu0 0
    %606 = vmatpush1.bf16.msra.mxu0 0
    %607 = vmatprep.subr.bf16.mxu0 0
    %608 = vmatpush1.bf16.msra.mxu0 0
    %609 = vmatprep.subr.bf16.mxu0 0
    %610 = vmatpush1.bf16.msra.mxu0 0
    %611 = vmatprep.subr.bf16.mxu0 0
    %612 = vmatpush1.bf16.msra.mxu0 0
    %613 = vmatprep.subr.bf16.mxu0 0
    %614 = vmatpush1.bf16.msra.mxu0 0
    %615 = vmatprep.subr.bf16.mxu0 0
    %616 = vmatpush1.bf16.msra.mxu0 0
    %617 = vmatprep.subr.bf16.mxu0 0
    %618 = vmatpush1.bf16.msra.mxu0 0
    %619 = vmatprep.mubr.bf16.mxu0 0
    %620 = vmatmul.mubr.bf16.gmra.mrb[0].mxu0 %v380
    %v621 = vpop.f32.mrb[0].mxu0
    %v622 = vadd.f32 %v211, %v621
    %v623 = vpop.f32.mrb[0].mxu0
    %v624 = vadd.f32 %v215, %v623
    %v625 = vpop.f32.mrb[0].mxu0
    %v626 = vpop.f32.mrb[0].mxu0
    %627 = vdwg.mxu0
    %628 = vmatprep.subr.bf16.mxu0 %v335
    %629 = vmatpush1.bf16.msra.mxu0 %v334
    %630 = vmatprep.subr.bf16.mxu0 %v349
    %631 = vmatpush1.bf16.msra.mxu0 %v348
    %632 = vmatprep.subr.bf16.mxu0 0
    %633 = vmatpush1.bf16.msra.mxu0 0
    %634 = vmatprep.subr.bf16.mxu0 0
    %635 = vmatpush1.bf16.msra.mxu0 0
    %636 = vmatprep.subr.bf16.mxu0 0
    %637 = vmatpush1.bf16.msra.mxu0 0
    %638 = vmatprep.subr.bf16.mxu0 0
    %639 = vmatpush1.bf16.msra.mxu0 0
    %640 = vmatprep.subr.bf16.mxu0 0
    %641 = vmatpush1.bf16.msra.mxu0 0
    %642 = vmatprep.subr.bf16.mxu0 0
    %643 = vmatpush1.bf16.msra.mxu0 0
    %644 = vmatprep.subr.bf16.mxu0 0
    %645 = vmatpush1.bf16.msra.mxu0 0
    %646 = vmatprep.subr.bf16.mxu0 0
    %647 = vmatpush1.bf16.msra.mxu0 0
    %648 = vmatprep.subr.bf16.mxu0 0
    %649 = vmatpush1.bf16.msra.mxu0 0
    %650 = vmatprep.subr.bf16.mxu0 0
    %651 = vmatpush1.bf16.msra.mxu0 0
    %652 = vmatprep.subr.bf16.mxu0 0
    %653 = vmatpush1.bf16.msra.mxu0 0
    %654 = vmatprep.subr.bf16.mxu0 0
    %655 = vmatpush1.bf16.msra.mxu0 0
    %656 = vmatprep.subr.bf16.mxu0 0
    %657 = vmatpush1.bf16.msra.mxu0 0
    %658 = vmatprep.subr.bf16.mxu0 0
    %659 = vmatpush1.bf16.msra.mxu0 0
    %660 = vmatprep.mubr.bf16.mxu0 0
    %661 = vmatmul.mubr.bf16.gmra.mrb[0].mxu0 %v380
    %v662 = vpop.f32.mrb[0].mxu0
    %v663 = vadd.f32 %v219, %v662
    %v664 = vpop.f32.mrb[0].mxu0
    %v665 = vadd.f32 %v223, %v664
    %v666 = vpop.f32.mrb[0].mxu0
    %v667 = vpop.f32.mrb[0].mxu0
    %668 = vdwg.mxu0
    %v669 = vmax.f32 %v417, 0.0
    %v670 = vmax.f32 %v419, 0.0
    %v671 = vmax.f32 %v458, 0.0
    %v672 = vmax.f32 %v460, 0.0
    %v673 = vmax.f32 %v499, 0.0
    %v674 = vmax.f32 %v501, 0.0
    %v675 = vmax.f32 %v540, 0.0
    %v676 = vmax.f32 %v542, 0.0
    %v677 = vmax.f32 %v581, 0.0
    %v678 = vmax.f32 %v583, 0.0
    %v679 = vmax.f32 %v622, 0.0
    %v680 = vmax.f32 %v624, 0.0
    %v681 = vmax.f32 %v663, 0.0
    %v682 = vmax.f32 %v665, 0.0
    %v683 = vpack.c.bf16 %v669, %v669
    %v684 = vpack.c.bf16 %v670, %v670
    %v685 = vpack.c.bf16 %v671, %v671
    %v686 = vpack.c.bf16 %v672, %v672
    %v687 = vpack.c.bf16 %v673, %v673
    %v688 = vpack.c.bf16 %v674, %v674
    %v689 = vpack.c.bf16 %v675, %v675
    %v690 = vpack.c.bf16 %v676, %v676
    %v691 = vpack.c.bf16 %v677, %v677
    %v692 = vpack.c.bf16 %v678, %v678
    %v693 = vpack.c.bf16 %v679, %v679
    %v694 = vpack.c.bf16 %v680, %v680
    %v695 = vpack.c.bf16 %v681, %v681
    %v696 = vpack.c.bf16 %v682, %v682
    %v697 = vld [vmem:[#allocation6] sm:$0xff]
    %v698 = vld [vmem:[#allocation6 + $0x8] sm:$0xff]
    %v699 = vld [vmem:[#allocation6 + $0x10] sm:$0xf]
    %v700 = vld [vmem:[#allocation6 + $0x14] sm:$0xff]
    %v701 = vld [vmem:[#allocation6 + $0x1c] sm:$0xff]
    %v702 = vld [vmem:[#allocation6 + $0x24] sm:$0xf]
    %v703 = vld [vmem:[#allocation6 + $0x28] sm:$0xff]
    %v704 = vld [vmem:[#allocation6 + $0x30] sm:$0xff]
    %v705 = vld [vmem:[#allocation6 + $0x38] sm:$0xf]
    %v706 = vld [vmem:[#allocation6 + $0x3c] sm:$0xff]
    %v707 = vld [vmem:[#allocation6 + $0x44] sm:$0xff]
    %v708 = vld [vmem:[#allocation6 + $0x4c] sm:$0xf]
    %v709 = vld [vmem:[#allocation6 + $0x50] sm:$0xff]
    %v710 = vld [vmem:[#allocation6 + $0x58] sm:$0xff]
    %v711 = vld [vmem:[#allocation6 + $0x60] sm:$0xf]
    %v712 = vld [vmem:[#allocation6 + $0x64] sm:$0xff]
    %v713 = vld [vmem:[#allocation6 + $0x6c] sm:$0xff]
    %v714 = vld [vmem:[#allocation6 + $0x74] sm:$0xf]
    %v715 = vld [vmem:[#allocation6 + $0x78] sm:$0xff]
    %v716 = vld [vmem:[#allocation6 + $0x80] sm:$0xff]
    %v717 = vld [vmem:[#allocation6 + $0x88] sm:$0xf]
    %v718 = vld [vmem:[#allocation6 + $0x8c] sm:$0xff]
    %v719 = vld [vmem:[#allocation6 + $0x94] sm:$0xff]
    %v720 = vld [vmem:[#allocation6 + $0x9c] sm:$0xf]
    %v721 = vld [vmem:[#allocation6 + $0xa0] sm:$0xff]
    %v722 = vld [vmem:[#allocation6 + $0xa8] sm:$0xff]
    %v723 = vld [vmem:[#allocation6 + $0xb0] sm:$0xf]
    %v724 = vld [vmem:[#allocation6 + $0xb4] sm:$0xff]
    %v725 = vld [vmem:[#allocation6 + $0xbc] sm:$0xff]
    %v726 = vld [vmem:[#allocation6 + $0xc4] sm:$0xf]
    %v727 = vld [vmem:[#allocation6 + $0xc8] sm:$0xff]
    %v728 = vld [vmem:[#allocation6 + $0xd0] sm:$0xff]
    %v729 = vld [vmem:[#allocation6 + $0xd8] sm:$0xf]
    %v730 = vld [vmem:[#allocation6 + $0xdc] sm:$0xff]
    %v731 = vld [vmem:[#allocation6 + $0xe4] sm:$0xff]
    %v732 = vld [vmem:[#allocation6 + $0xec] sm:$0xf]
    %v733 = vld [vmem:[#allocation6 + $0xf0] sm:$0xff]
    %v734 = vld [vmem:[#allocation6 + $0xf8] sm:$0xff]
    %v735 = vld [vmem:[#allocation6 + $0x100] sm:$0xf]
    %v736 = vld [vmem:[#allocation6 + $0x104] sm:$0xff]
    %v737 = vld [vmem:[#allocation6 + $0x10c] sm:$0xff]
    %v738 = vld [vmem:[#allocation6 + $0x114] sm:$0xf]
    %v739 = vld [vmem:[#allocation6 + $0x118] sm:$0xff]
    %v740 = vld [vmem:[#allocation6 + $0x120] sm:$0xff]
    %v741 = vld [vmem:[#allocation6 + $0x128] sm:$0xf]
    %v742 = vld [vmem:[#allocation6 + $0x12c] sm:$0xff]
    %v743 = vld [vmem:[#allocation6 + $0x134] sm:$0xff]
    %v744 = vld [vmem:[#allocation6 + $0x13c] sm:$0xf]
    %v745 = vld [vmem:[#allocation6 + $0x140] sm:$0xff]
    %v746 = vld [vmem:[#allocation6 + $0x148] sm:$0xff]
    %v747 = vld [vmem:[#allocation6 + $0x150] sm:$0xf]
    %v748 = vld [vmem:[#allocation6 + $0x154] sm:$0xff]
    %v749 = vld [vmem:[#allocation6 + $0x15c] sm:$0xff]
    %v750 = vld [vmem:[#allocation6 + $0x164] sm:$0xf]
    %v751 = vld [vmem:[#allocation6 + $0x168] sm:$0xff]
    %v752 = vld [vmem:[#allocation6 + $0x170] sm:$0xff]
    %v753 = vld [vmem:[#allocation6 + $0x178] sm:$0xf]
    %v754 = vld [vmem:[#allocation6 + $0x17c] sm:$0xff]
    %v755 = vld [vmem:[#allocation6 + $0x184] sm:$0xff]
    %v756 = vld [vmem:[#allocation6 + $0x18c] sm:$0xf]
    %v757 = vld [vmem:[#allocation6 + $0x190] sm:$0xff]
    %v758 = vld [vmem:[#allocation6 + $0x198] sm:$0xff]
    %v759 = vld [vmem:[#allocation6 + $0x1a0] sm:$0xf]
    %v760 = vld [vmem:[#allocation6 + $0x1a4] sm:$0xff]
    %v761 = vld [vmem:[#allocation6 + $0x1ac] sm:$0xff]
    %v762 = vld [vmem:[#allocation6 + $0x1b4] sm:$0xf]
    %v763 = vld [vmem:[#allocation6 + $0x1b8] sm:$0xff]
    %v764 = vld [vmem:[#allocation6 + $0x1c0] sm:$0xff]
    %v765 = vld [vmem:[#allocation6 + $0x1c8] sm:$0xf]
    %v766 = vld [vmem:[#allocation6 + $0x1cc] sm:$0xff]
    %v767 = vld [vmem:[#allocation6 + $0x1d4] sm:$0xff]
    %v768 = vld [vmem:[#allocation6 + $0x1dc] sm:$0xf]
    %v769 = vld [vmem:[#allocation6 + $0x1e0] sm:$0xff]
    %v770 = vld [vmem:[#allocation6 + $0x1e8] sm:$0xff]
    %v771 = vld [vmem:[#allocation6 + $0x1f0] sm:$0xf]
    %v772 = vld [vmem:[#allocation6 + $0x1f4] sm:$0xff]
    %v773 = vld [vmem:[#allocation6 + $0x1fc] sm:$0xff]
    %v774 = vld [vmem:[#allocation6 + $0x204] sm:$0xf]
    %v775 = vld [vmem:[#allocation6 + $0x208] sm:$0xff]
    %v776 = vld [vmem:[#allocation6 + $0x210] sm:$0xff]
    %v777 = vld [vmem:[#allocation6 + $0x218] sm:$0xf]
    %v778 = vld [vmem:[#allocation6 + $0x21c] sm:$0xff]
    %v779 = vld [vmem:[#allocation6 + $0x224] sm:$0xff]
    %v780 = vld [vmem:[#allocation6 + $0x22c] sm:$0xf]
    %v781 = vld [vmem:[#allocation6 + $0x230] sm:$0xff]
    %v782 = vld [vmem:[#allocation6 + $0x238] sm:$0xff]
    %v783 = vld [vmem:[#allocation6 + $0x240] sm:$0xf]
    %v784 = vld [vmem:[#allocation6 + $0x244] sm:$0xff]
    %v785 = vld [vmem:[#allocation6 + $0x24c] sm:$0xff]
    %v786 = vld [vmem:[#allocation6 + $0x254] sm:$0xf]
    %v787 = vld [vmem:[#allocation6 + $0x258] sm:$0xff]
    %v788 = vld [vmem:[#allocation6 + $0x260] sm:$0xff]
    %v789 = vld [vmem:[#allocation6 + $0x268] sm:$0xf]
    %v790 = vld [vmem:[#allocation6 + $0x26c] sm:$0xff]
    %v791 = vld [vmem:[#allocation6 + $0x274] sm:$0xff]
    %v792 = vld [vmem:[#allocation6 + $0x27c] sm:$0xf]
    %v793 = vld [vmem:[#allocation6 + $0x280] sm:$0xff]
    %v794 = vld [vmem:[#allocation6 + $0x288] sm:$0xff]
    %v795 = vld [vmem:[#allocation6 + $0x290] sm:$0xf]
    %v796 = vld [vmem:[#allocation6 + $0x294] sm:$0xff]
    %v797 = vld [vmem:[#allocation6 + $0x29c] sm:$0xff]
    %v798 = vld [vmem:[#allocation6 + $0x2a4] sm:$0xf]
    %v799 = vld [vmem:[#allocation6 + $0x2a8] sm:$0xff]
    %v800 = vld [vmem:[#allocation6 + $0x2b0] sm:$0xff]
    %v801 = vld [vmem:[#allocation6 + $0x2b8] sm:$0xf]
    %v802 = vld [vmem:[#allocation6 + $0x2bc] sm:$0xff]
    %v803 = vld [vmem:[#allocation6 + $0x2c4] sm:$0xff]
    %v804 = vld [vmem:[#allocation6 + $0x2cc] sm:$0xf]
    %v805 = vld [vmem:[#allocation6 + $0x2d0] sm:$0xff]
    %v806 = vld [vmem:[#allocation6 + $0x2d8] sm:$0xff]
    %v807 = vld [vmem:[#allocation6 + $0x2e0] sm:$0xf]
    %v808 = vld [vmem:[#allocation6 + $0x2e4] sm:$0xff]
    %v809 = vld [vmem:[#allocation6 + $0x2ec] sm:$0xff]
    %v810 = vld [vmem:[#allocation6 + $0x2f4] sm:$0xf]
    %v811 = vld [vmem:[#allocation6 + $0x2f8] sm:$0xff]
    %v812 = vld [vmem:[#allocation6 + $0x300] sm:$0xff]
    %v813 = vld [vmem:[#allocation6 + $0x308] sm:$0xf]
    %v814 = vld [vmem:[#allocation6 + $0x30c] sm:$0xff]
    %v815 = vld [vmem:[#allocation6 + $0x314] sm:$0xff]
    %v816 = vld [vmem:[#allocation6 + $0x31c] sm:$0xf]
    %v817 = vld [vmem:[#allocation6 + $0x320] sm:$0xff]
    %v818 = vld [vmem:[#allocation6 + $0x328] sm:$0xff]
    %v819 = vld [vmem:[#allocation6 + $0x330] sm:$0xf]
    %v820 = vld [vmem:[#allocation6 + $0x334] sm:$0xff]
    %v821 = vld [vmem:[#allocation6 + $0x33c] sm:$0xff]
    %v822 = vld [vmem:[#allocation6 + $0x344] sm:$0xf]
    %v823 = vld [vmem:[#allocation6 + $0x348] sm:$0xff]
    %v824 = vld [vmem:[#allocation6 + $0x350] sm:$0xff]
    %v825 = vld [vmem:[#allocation6 + $0x358] sm:$0xf]
    %v826 = vld [vmem:[#allocation6 + $0x35c] sm:$0xff]
    %v827 = vld [vmem:[#allocation6 + $0x364] sm:$0xff]
    %v828 = vld [vmem:[#allocation6 + $0x36c] sm:$0xf]
    %v829 = vld [vmem:[#allocation6 + $0x370] sm:$0xff]
    %v830 = vld [vmem:[#allocation6 + $0x378] sm:$0xff]
    %v831 = vld [vmem:[#allocation6 + $0x380] sm:$0xf]
    %v832 = vld [vmem:[#allocation6 + $0x384] sm:$0xff]
    %v833 = vld [vmem:[#allocation6 + $0x38c] sm:$0xff]
    %v834 = vld [vmem:[#allocation6 + $0x394] sm:$0xf]
    %v835 = vld [vmem:[#allocation6 + $0x398] sm:$0xff]
    %v836 = vld [vmem:[#allocation6 + $0x3a0] sm:$0xff]
    %v837 = vld [vmem:[#allocation6 + $0x3a8] sm:$0xf]
    %v838 = vld [vmem:[#allocation6 + $0x3ac] sm:$0xff]
    %v839 = vld [vmem:[#allocation6 + $0x3b4] sm:$0xff]
    %v840 = vld [vmem:[#allocation6 + $0x3bc] sm:$0xf]
    %v841 = vld [vmem:[#allocation6 + $0x3c0] sm:$0xff]
    %v842 = vld [vmem:[#allocation6 + $0x3c8] sm:$0xff]
    %v843 = vld [vmem:[#allocation6 + $0x3d0] sm:$0xf]
    %v844 = vld [vmem:[#allocation6 + $0x3d4] sm:$0xff]
    %v845 = vld [vmem:[#allocation6 + $0x3dc] sm:$0xff]
    %v846 = vld [vmem:[#allocation6 + $0x3e4] sm:$0xf]
    %v847 = vld [vmem:[#allocation6 + $0x3e8] sm:$0xff]
    %v848 = vld [vmem:[#allocation6 + $0x3f0] sm:$0xff]
    %v849 = vld [vmem:[#allocation6 + $0x3f8] sm:$0xf]
    %v850 = vld [vmem:[#allocation6 + $0x3fc] sm:$0xff]
    %v851 = vld [vmem:[#allocation6 + $0x404] sm:$0xff]
    %v852 = vld [vmem:[#allocation6 + $0x40c] sm:$0xf]
    %v853 = vld [vmem:[#allocation6 + $0x410] sm:$0xff]
    %v854 = vld [vmem:[#allocation6 + $0x418] sm:$0xff]
    %v855 = vld [vmem:[#allocation6 + $0x420] sm:$0xf]
    %v856 = vld [vmem:[#allocation6 + $0x424] sm:$0xff]
    %v857 = vld [vmem:[#allocation6 + $0x42c] sm:$0xff]
    %v858 = vld [vmem:[#allocation6 + $0x434] sm:$0xf]
    %v859 = vld [vmem:[#allocation6 + $0x438] sm:$0xff]
    %v860 = vld [vmem:[#allocation6 + $0x440] sm:$0xff]
    %v861 = vld [vmem:[#allocation6 + $0x448] sm:$0xf]
    %v862 = vld [vmem:[#allocation6 + $0x44c] sm:$0xff]
    %v863 = vld [vmem:[#allocation6 + $0x454] sm:$0xff]
    %v864 = vld [vmem:[#allocation6 + $0x45c] sm:$0xf]
    %v865 = vld [vmem:[#allocation6 + $0x460] sm:$0xff]
    %v866 = vld [vmem:[#allocation6 + $0x468] sm:$0xff]
    %v867 = vld [vmem:[#allocation6 + $0x470] sm:$0xf]
    %v868 = vld [vmem:[#allocation6 + $0x474] sm:$0xff]
    %v869 = vld [vmem:[#allocation6 + $0x47c] sm:$0xff]
    %v870 = vld [vmem:[#allocation6 + $0x484] sm:$0xf]
    %v871 = vld [vmem:[#allocation6 + $0x488] sm:$0xff]
    %v872 = vld [vmem:[#allocation6 + $0x490] sm:$0xff]
    %v873 = vld [vmem:[#allocation6 + $0x498] sm:$0xf]
    %v874 = vld [vmem:[#allocation6 + $0x49c] sm:$0xff]
    %v875 = vld [vmem:[#allocation6 + $0x4a4] sm:$0xff]
    %v876 = vld [vmem:[#allocation6 + $0x4ac] sm:$0xf]
    %v877 = vld [vmem:[#allocation6 + $0x4b0] sm:$0xff]
    %v878 = vld [vmem:[#allocation6 + $0x4b8] sm:$0xff]
    %v879 = vld [vmem:[#allocation6 + $0x4c0] sm:$0xf]
    %v880 = vld [vmem:[#allocation6 + $0x4c4] sm:$0xff]
    %v881 = vld [vmem:[#allocation6 + $0x4cc] sm:$0xff]
    %v882 = vld [vmem:[#allocation6 + $0x4d4] sm:$0xf]
    %v883 = vld [vmem:[#allocation6 + $0x4d8] sm:$0xff]
    %v884 = vld [vmem:[#allocation6 + $0x4e0] sm:$0xff]
    %v885 = vld [vmem:[#allocation6 + $0x4e8] sm:$0xf]
    %v886 = vld [vmem:[#allocation6 + $0x4ec] sm:$0xff]
    %v887 = vld [vmem:[#allocation6 + $0x4f4] sm:$0xff]
    %v888 = vld [vmem:[#allocation6 + $0x4fc] sm:$0xf]
    %v889 = vld [vmem:[#allocation6 + $0x500] sm:$0xff]
    %v890 = vld [vmem:[#allocation6 + $0x508] sm:$0xff]
    %v891 = vld [vmem:[#allocation6 + $0x510] sm:$0xf]
    %v892 = vld [vmem:[#allocation6 + $0x514] sm:$0xff]
    %v893 = vld [vmem:[#allocation6 + $0x51c] sm:$0xff]
    %v894 = vld [vmem:[#allocation6 + $0x524] sm:$0xf]
    %v895 = vld [vmem:[#allocation6 + $0x528] sm:$0xff]
    %v896 = vld [vmem:[#allocation6 + $0x530] sm:$0xff]
    %v897 = vld [vmem:[#allocation6 + $0x538] sm:$0xf]
    %v898 = vld [vmem:[#allocation6 + $0x53c] sm:$0xff]
    %v899 = vld [vmem:[#allocation6 + $0x544] sm:$0xff]
    %v900 = vld [vmem:[#allocation6 + $0x54c] sm:$0xf]
    %v901 = vld [vmem:[#allocation6 + $0x550] sm:$0xff]
    %v902 = vld [vmem:[#allocation6 + $0x558] sm:$0xff]
    %v903 = vld [vmem:[#allocation6 + $0x560] sm:$0xf]
    %v904 = vld [vmem:[#allocation6 + $0x564] sm:$0xff]
    %v905 = vld [vmem:[#allocation6 + $0x56c] sm:$0xff]
    %v906 = vld [vmem:[#allocation6 + $0x574] sm:$0xf]
    %v907 = vld [vmem:[#allocation6 + $0x578] sm:$0xff]
    %v908 = vld [vmem:[#allocation6 + $0x580] sm:$0xff]
    %v909 = vld [vmem:[#allocation6 + $0x588] sm:$0xf]
    %v910 = vld [vmem:[#allocation6 + $0x58c] sm:$0xff]
    %v911 = vld [vmem:[#allocation6 + $0x594] sm:$0xff]
    %v912 = vld [vmem:[#allocation6 + $0x59c] sm:$0xf]
    %v913 = vld [vmem:[#allocation6 + $0x5a0] sm:$0xff]
    %v914 = vld [vmem:[#allocation6 + $0x5a8] sm:$0xff]
    %v915 = vld [vmem:[#allocation6 + $0x5b0] sm:$0xf]
    %v916 = vld [vmem:[#allocation6 + $0x5b4] sm:$0xff]
    %v917 = vld [vmem:[#allocation6 + $0x5bc] sm:$0xff]
    %v918 = vld [vmem:[#allocation6 + $0x5c4] sm:$0xf]
    %v919 = vld [vmem:[#allocation6 + $0x5c8] sm:$0xff]
    %v920 = vld [vmem:[#allocation6 + $0x5d0] sm:$0xff]
    %v921 = vld [vmem:[#allocation6 + $0x5d8] sm:$0xf]
    %v922 = vld [vmem:[#allocation6 + $0x5dc] sm:$0xff]
    %v923 = vld [vmem:[#allocation6 + $0x5e4] sm:$0xff]
    %v924 = vld [vmem:[#allocation6 + $0x5ec] sm:$0xf]
    %v925 = vld [vmem:[#allocation6 + $0x5f0] sm:$0xff]
    %v926 = vld [vmem:[#allocation6 + $0x5f8] sm:$0xff]
    %v927 = vld [vmem:[#allocation6 + $0x600] sm:$0xf]
    %v928 = vld [vmem:[#allocation6 + $0x604] sm:$0xff]
    %v929 = vld [vmem:[#allocation6 + $0x60c] sm:$0xff]
    %v930 = vld [vmem:[#allocation6 + $0x614] sm:$0xf]
    %v931 = vld [vmem:[#allocation6 + $0x618] sm:$0xff]
    %v932 = vld [vmem:[#allocation6 + $0x620] sm:$0xff]
    %v933 = vld [vmem:[#allocation6 + $0x628] sm:$0xf]
    %v934 = vld [vmem:[#allocation6 + $0x62c] sm:$0xff]
    %v935 = vld [vmem:[#allocation6 + $0x634] sm:$0xff]
    %v936 = vld [vmem:[#allocation6 + $0x63c] sm:$0xf]
    %v937 = vld [vmem:[#allocation6 + $0x640] sm:$0xff]
    %v938 = vld [vmem:[#allocation6 + $0x648] sm:$0xff]
    %v939 = vld [vmem:[#allocation6 + $0x650] sm:$0xf]
    %v940 = vld [vmem:[#allocation6 + $0x654] sm:$0xff]
    %v941 = vld [vmem:[#allocation6 + $0x65c] sm:$0xff]
    %v942 = vld [vmem:[#allocation6 + $0x664] sm:$0xf]
    %v943 = vld [vmem:[#allocation6 + $0x668] sm:$0xff]
    %v944 = vld [vmem:[#allocation6 + $0x670] sm:$0xff]
    %v945 = vld [vmem:[#allocation6 + $0x678] sm:$0xf]
    %v946 = vld [vmem:[#allocation6 + $0x67c] sm:$0xff]
    %v947 = vld [vmem:[#allocation6 + $0x684] sm:$0xff]
    %v948 = vld [vmem:[#allocation6 + $0x68c] sm:$0xf]
    %v949 = vld [vmem:[#allocation6 + $0x690] sm:$0xff]
    %v950 = vld [vmem:[#allocation6 + $0x698] sm:$0xff]
    %v951 = vld [vmem:[#allocation6 + $0x6a0] sm:$0xf]
    %v952 = vld [vmem:[#allocation6 + $0x6a4] sm:$0xff]
    %v953 = vld [vmem:[#allocation6 + $0x6ac] sm:$0xff]
    %v954 = vld [vmem:[#allocation6 + $0x6b4] sm:$0xf]
    %v955 = vld [vmem:[#allocation6 + $0x6b8] sm:$0xff]
    %v956 = vld [vmem:[#allocation6 + $0x6c0] sm:$0xff]
    %v957 = vld [vmem:[#allocation6 + $0x6c8] sm:$0xf]
    %v958 = vld [vmem:[#allocation6 + $0x6cc] sm:$0xff]
    %v959 = vld [vmem:[#allocation6 + $0x6d4] sm:$0xff]
    %v960 = vld [vmem:[#allocation6 + $0x6dc] sm:$0xf]
    %v961 = vld [vmem:[#allocation6 + $0x6e0] sm:$0xff]
    %v962 = vld [vmem:[#allocation6 + $0x6e8] sm:$0xff]
    %v963 = vld [vmem:[#allocation6 + $0x6f0] sm:$0xf]
    %v964 = vld [vmem:[#allocation6 + $0x6f4] sm:$0xff]
    %v965 = vld [vmem:[#allocation6 + $0x6fc] sm:$0xff]
    %v966 = vld [vmem:[#allocation6 + $0x704] sm:$0xf]
    %v967 = vld [vmem:[#allocation6 + $0x708] sm:$0xff]
    %v968 = vld [vmem:[#allocation6 + $0x710] sm:$0xff]
    %v969 = vld [vmem:[#allocation6 + $0x718] sm:$0xf]
    %v970 = vld [vmem:[#allocation6 + $0x71c] sm:$0xff]
    %v971 = vld [vmem:[#allocation6 + $0x724] sm:$0xff]
    %v972 = vld [vmem:[#allocation6 + $0x72c] sm:$0xf]
    %v973 = vld [vmem:[#allocation6 + $0x730] sm:$0xff]
    %v974 = vld [vmem:[#allocation6 + $0x738] sm:$0xff]
    %v975 = vld [vmem:[#allocation6 + $0x740] sm:$0xf]
    %v976 = vld [vmem:[#allocation6 + $0x744] sm:$0xff]
    %v977 = vld [vmem:[#allocation6 + $0x74c] sm:$0xff]
    %v978 = vld [vmem:[#allocation6 + $0x754] sm:$0xf]
    %v979 = vld [vmem:[#allocation6 + $0x758] sm:$0xff]
    %v980 = vld [vmem:[#allocation6 + $0x760] sm:$0xff]
    %v981 = vld [vmem:[#allocation6 + $0x768] sm:$0xf]
    %v982 = vld [vmem:[#allocation6 + $0x76c] sm:$0xff]
    %v983 = vld [vmem:[#allocation6 + $0x774] sm:$0xff]
    %v984 = vld [vmem:[#allocation6 + $0x77c] sm:$0xf]
    %v985 = vld [vmem:[#allocation6 + $0x780] sm:$0xff]
    %v986 = vld [vmem:[#allocation6 + $0x788] sm:$0xff]
    %v987 = vld [vmem:[#allocation6 + $0x790] sm:$0xf]
    %v988 = vld [vmem:[#allocation6 + $0x794] sm:$0xff]
    %v989 = vld [vmem:[#allocation6 + $0x79c] sm:$0xff]
    %v990 = vld [vmem:[#allocation6 + $0x7a4] sm:$0xf]
    %v991 = vld [vmem:[#allocation6 + $0x7a8] sm:$0xff]
    %v992 = vld [vmem:[#allocation6 + $0x7b0] sm:$0xff]
    %v993 = vld [vmem:[#allocation6 + $0x7b8] sm:$0xf]
    %v994 = vld [vmem:[#allocation6 + $0x7bc] sm:$0xff]
    %v995 = vld [vmem:[#allocation6 + $0x7c4] sm:$0xff]
    %v996 = vld [vmem:[#allocation6 + $0x7cc] sm:$0xf]
    %v997 = vld [vmem:[#allocation6 + $0x7d0] sm:$0xff]
    %v998 = vld [vmem:[#allocation6 + $0x7d8] sm:$0xff]
    %v999 = vld [vmem:[#allocation6 + $0x7e0] sm:$0xf]
    %v1000 = vld [vmem:[#allocation6 + $0x7e4] sm:$0xff]
    %v1001 = vld [vmem:[#allocation6 + $0x7ec] sm:$0xff]
    %v1002 = vld [vmem:[#allocation6 + $0x7f4] sm:$0xf]
    %v1003 = vld [vmem:[#allocation6 + $0x7f8] sm:$0xff]
    %v1004 = vld [vmem:[#allocation6 + $0x800] sm:$0xff]
    %v1005 = vld [vmem:[#allocation6 + $0x808] sm:$0xf]
    %v1006 = vld [vmem:[#allocation6 + $0x80c] sm:$0xff]
    %v1007 = vld [vmem:[#allocation6 + $0x814] sm:$0xff]
    %v1008 = vld [vmem:[#allocation6 + $0x81c] sm:$0xf]
    %v1009 = vld [vmem:[#allocation6 + $0x820] sm:$0xff]
    %v1010 = vld [vmem:[#allocation6 + $0x828] sm:$0xff]
    %v1011 = vld [vmem:[#allocation6 + $0x830] sm:$0xf]
    %v1012 = vld [vmem:[#allocation6 + $0x834] sm:$0xff]
    %v1013 = vld [vmem:[#allocation6 + $0x83c] sm:$0xff]
    %v1014 = vld [vmem:[#allocation6 + $0x844] sm:$0xf]
    %v1015 = vld [vmem:[#allocation6 + $0x848] sm:$0xff]
    %v1016 = vld [vmem:[#allocation6 + $0x850] sm:$0xff]
    %v1017 = vld [vmem:[#allocation6 + $0x858] sm:$0xf]
    %v1018 = vld [vmem:[#allocation6 + $0x85c] sm:$0xff]
    %v1019 = vld [vmem:[#allocation6 + $0x864] sm:$0xff]
    %v1020 = vld [vmem:[#allocation6 + $0x86c] sm:$0xf]
    %v1021 = vld [vmem:[#allocation6 + $0x870] sm:$0xff]
    %v1022 = vld [vmem:[#allocation6 + $0x878] sm:$0xff]
    %v1023 = vld [vmem:[#allocation6 + $0x880] sm:$0xf]
    %v1024 = vld [vmem:[#allocation6 + $0x884] sm:$0xff]
    %v1025 = vld [vmem:[#allocation6 + $0x88c] sm:$0xff]
    %v1026 = vld [vmem:[#allocation6 + $0x894] sm:$0xf]
    %v1027 = vld [vmem:[#allocation6 + $0x898] sm:$0xff]
    %v1028 = vld [vmem:[#allocation6 + $0x8a0] sm:$0xff]
    %v1029 = vld [vmem:[#allocation6 + $0x8a8] sm:$0xf]
    %v1030 = vld [vmem:[#allocation6 + $0x8ac] sm:$0xff]
    %v1031 = vld [vmem:[#allocation6 + $0x8b4] sm:$0xff]
    %v1032 = vld [vmem:[#allocation6 + $0x8bc] sm:$0xf]
    %v1033 = vld [vmem:[#allocation7] sm:$0xff]
    %v1034 = vld [vmem:[#allocation7 + $0x8] sm:$0xff]
    %v1035 = vld [vmem:[#allocation7 + $0x10] sm:$0xf]
    %v1036 = vld [vmem:[#allocation7 + $0x14] sm:$0xff]
    %v1037 = vld [vmem:[#allocation7 + $0x1c] sm:$0xff]
    %v1038 = vld [vmem:[#allocation7 + $0x24] sm:$0xf]
    %v1039 = vld [vmem:[#allocation7 + $0x28] sm:$0xff]
    %v1040 = vld [vmem:[#allocation7 + $0x30] sm:$0xff]
    %v1041 = vld [vmem:[#allocation7 + $0x38] sm:$0xf]
    %v1042 = vld [vmem:[#allocation7 + $0x3c] sm:$0xff]
    %v1043 = vld [vmem:[#allocation7 + $0x44] sm:$0xff]
    %v1044 = vld [vmem:[#allocation7 + $0x4c] sm:$0xf]
    %v1045 = vld [vmem:[#allocation7 + $0x50] sm:$0xff]
    %v1046 = vld [vmem:[#allocation7 + $0x58] sm:$0xff]
    %v1047 = vld [vmem:[#allocation7 + $0x60] sm:$0xf]
    %v1048 = vld [vmem:[#allocation7 + $0x64] sm:$0xff]
    %v1049 = vld [vmem:[#allocation7 + $0x6c] sm:$0xff]
    %v1050 = vld [vmem:[#allocation7 + $0x74] sm:$0xf]
    %v1051 = vld [vmem:[#allocation7 + $0x78] sm:$0xff]
    %v1052 = vld [vmem:[#allocation7 + $0x80] sm:$0xff]
    %v1053 = vld [vmem:[#allocation7 + $0x88] sm:$0xf]
    %v1054 = vld [vmem:[#allocation7 + $0x8c] sm:$0xff]
    %v1055 = vld [vmem:[#allocation7 + $0x94] sm:$0xff]
    %v1056 = vld [vmem:[#allocation7 + $0x9c] sm:$0xf]
    %v1057 = vld [vmem:[#allocation7 + $0xa0] sm:$0xff]
    %v1058 = vld [vmem:[#allocation7 + $0xa8] sm:$0xff]
    %v1059 = vld [vmem:[#allocation7 + $0xb0] sm:$0xf]
    %v1060 = vld [vmem:[#allocation7 + $0xb4] sm:$0xff]
    %v1061 = vld [vmem:[#allocation7 + $0xbc] sm:$0xff]
    %v1062 = vld [vmem:[#allocation7 + $0xc4] sm:$0xf]
    %v1063 = vld [vmem:[#allocation7 + $0xc8] sm:$0xff]
    %v1064 = vld [vmem:[#allocation7 + $0xd0] sm:$0xff]
    %v1065 = vld [vmem:[#allocation7 + $0xd8] sm:$0xf]
    %v1066 = vld [vmem:[#allocation7 + $0xdc] sm:$0xff]
    %v1067 = vld [vmem:[#allocation7 + $0xe4] sm:$0xff]
    %v1068 = vld [vmem:[#allocation7 + $0xec] sm:$0xf]
    %v1069 = vld [vmem:[#allocation7 + $0xf0] sm:$0xff]
    %v1070 = vld [vmem:[#allocation7 + $0xf8] sm:$0xff]
    %v1071 = vld [vmem:[#allocation7 + $0x100] sm:$0xf]
    %v1072 = vld [vmem:[#allocation7 + $0x104] sm:$0xff]
    %v1073 = vld [vmem:[#allocation7 + $0x10c] sm:$0xff]
    %v1074 = vld [vmem:[#allocation7 + $0x114] sm:$0xf]
    %v1075 = vld [vmem:[#allocation7 + $0x118] sm:$0xff]
    %v1076 = vld [vmem:[#allocation7 + $0x120] sm:$0xff]
    %v1077 = vld [vmem:[#allocation7 + $0x128] sm:$0xf]
    %v1078 = vld [vmem:[#allocation7 + $0x12c] sm:$0xff]
    %v1079 = vld [vmem:[#allocation7 + $0x134] sm:$0xff]
    %v1080 = vld [vmem:[#allocation7 + $0x13c] sm:$0xf]
    %v1081 = vld [vmem:[#allocation7 + $0x140] sm:$0xff]
    %v1082 = vld [vmem:[#allocation7 + $0x148] sm:$0xff]
    %v1083 = vld [vmem:[#allocation7 + $0x150] sm:$0xf]
    %v1084 = vld [vmem:[#allocation7 + $0x154] sm:$0xff]
    %v1085 = vld [vmem:[#allocation7 + $0x15c] sm:$0xff]
    %v1086 = vld [vmem:[#allocation7 + $0x164] sm:$0xf]
    %v1087 = vld [vmem:[#allocation7 + $0x168] sm:$0xff]
    %v1088 = vld [vmem:[#allocation7 + $0x170] sm:$0xff]
    %v1089 = vld [vmem:[#allocation7 + $0x178] sm:$0xf]
    %v1090 = vld [vmem:[#allocation7 + $0x17c] sm:$0xff]
    %v1091 = vld [vmem:[#allocation7 + $0x184] sm:$0xff]
    %v1092 = vld [vmem:[#allocation7 + $0x18c] sm:$0xf]
    %v1093 = vld [vmem:[#allocation7 + $0x190] sm:$0xff]
    %v1094 = vld [vmem:[#allocation7 + $0x198] sm:$0xff]
    %v1095 = vld [vmem:[#allocation7 + $0x1a0] sm:$0xf]
    %v1096 = vld [vmem:[#allocation7 + $0x1a4] sm:$0xff]
    %v1097 = vld [vmem:[#allocation7 + $0x1ac] sm:$0xff]
    %v1098 = vld [vmem:[#allocation7 + $0x1b4] sm:$0xf]
    %v1099 = vld [vmem:[#allocation7 + $0x1b8] sm:$0xff]
    %v1100 = vld [vmem:[#allocation7 + $0x1c0] sm:$0xff]
    %v1101 = vld [vmem:[#allocation7 + $0x1c8] sm:$0xf]
    %v1102 = vld [vmem:[#allocation7 + $0x1cc] sm:$0xff]
    %v1103 = vld [vmem:[#allocation7 + $0x1d4] sm:$0xff]
    %v1104 = vld [vmem:[#allocation7 + $0x1dc] sm:$0xf]
    %v1105 = vld [vmem:[#allocation7 + $0x1e0] sm:$0xff]
    %v1106 = vld [vmem:[#allocation7 + $0x1e8] sm:$0xff]
    %v1107 = vld [vmem:[#allocation7 + $0x1f0] sm:$0xf]
    %v1108 = vld [vmem:[#allocation7 + $0x1f4] sm:$0xff]
    %v1109 = vld [vmem:[#allocation7 + $0x1fc] sm:$0xff]
    %v1110 = vld [vmem:[#allocation7 + $0x204] sm:$0xf]
    %v1111 = vld [vmem:[#allocation7 + $0x208] sm:$0xff]
    %v1112 = vld [vmem:[#allocation7 + $0x210] sm:$0xff]
    %v1113 = vld [vmem:[#allocation7 + $0x218] sm:$0xf]
    %v1114 = vld [vmem:[#allocation7 + $0x21c] sm:$0xff]
    %v1115 = vld [vmem:[#allocation7 + $0x224] sm:$0xff]
    %v1116 = vld [vmem:[#allocation7 + $0x22c] sm:$0xf]
    %v1117 = vld [vmem:[#allocation7 + $0x230] sm:$0xff]
    %v1118 = vld [vmem:[#allocation7 + $0x238] sm:$0xff]
    %v1119 = vld [vmem:[#allocation7 + $0x240] sm:$0xf]
    %v1120 = vld [vmem:[#allocation7 + $0x244] sm:$0xff]
    %v1121 = vld [vmem:[#allocation7 + $0x24c] sm:$0xff]
    %v1122 = vld [vmem:[#allocation7 + $0x254] sm:$0xf]
    %v1123 = vld [vmem:[#allocation7 + $0x258] sm:$0xff]
    %v1124 = vld [vmem:[#allocation7 + $0x260] sm:$0xff]
    %v1125 = vld [vmem:[#allocation7 + $0x268] sm:$0xf]
    %v1126 = vld [vmem:[#allocation7 + $0x26c] sm:$0xff]
    %v1127 = vld [vmem:[#allocation7 + $0x274] sm:$0xff]
    %v1128 = vld [vmem:[#allocation7 + $0x27c] sm:$0xf]
    %v1129 = vld [vmem:[#allocation7 + $0x280] sm:$0xff]
    %v1130 = vld [vmem:[#allocation7 + $0x288] sm:$0xff]
    %v1131 = vld [vmem:[#allocation7 + $0x290] sm:$0xf]
    %v1132 = vld [vmem:[#allocation7 + $0x294] sm:$0xff]
    %v1133 = vld [vmem:[#allocation7 + $0x29c] sm:$0xff]
    %v1134 = vld [vmem:[#allocation7 + $0x2a4] sm:$0xf]
    %v1135 = vld [vmem:[#allocation7 + $0x2a8] sm:$0xff]
    %v1136 = vld [vmem:[#allocation7 + $0x2b0] sm:$0xff]
    %v1137 = vld [vmem:[#allocation7 + $0x2b8] sm:$0xf]
    %v1138 = vld [vmem:[#allocation7 + $0x2bc] sm:$0xff]
    %v1139 = vld [vmem:[#allocation7 + $0x2c4] sm:$0xff]
    %v1140 = vld [vmem:[#allocation7 + $0x2cc] sm:$0xf]
    %v1141 = vld [vmem:[#allocation7 + $0x2d0] sm:$0xff]
    %v1142 = vld [vmem:[#allocation7 + $0x2d8] sm:$0xff]
    %v1143 = vld [vmem:[#allocation7 + $0x2e0] sm:$0xf]
    %v1144 = vld [vmem:[#allocation7 + $0x2e4] sm:$0xff]
    %v1145 = vld [vmem:[#allocation7 + $0x2ec] sm:$0xff]
    %v1146 = vld [vmem:[#allocation7 + $0x2f4] sm:$0xf]
    %v1147 = vld [vmem:[#allocation7 + $0x2f8] sm:$0xff]
    %v1148 = vld [vmem:[#allocation7 + $0x300] sm:$0xff]
    %v1149 = vld [vmem:[#allocation7 + $0x308] sm:$0xf]
    %v1150 = vld [vmem:[#allocation7 + $0x30c] sm:$0xff]
    %v1151 = vld [vmem:[#allocation7 + $0x314] sm:$0xff]
    %v1152 = vld [vmem:[#allocation7 + $0x31c] sm:$0xf]
    %v1153 = vld [vmem:[#allocation7 + $0x320] sm:$0xff]
    %v1154 = vld [vmem:[#allocation7 + $0x328] sm:$0xff]
    %v1155 = vld [vmem:[#allocation7 + $0x330] sm:$0xf]
    %v1156 = vld [vmem:[#allocation7 + $0x334] sm:$0xff]
    %v1157 = vld [vmem:[#allocation7 + $0x33c] sm:$0xff]
    %v1158 = vld [vmem:[#allocation7 + $0x344] sm:$0xf]
    %v1159 = vld [vmem:[#allocation7 + $0x348] sm:$0xff]
    %v1160 = vld [vmem:[#allocation7 + $0x350] sm:$0xff]
    %v1161 = vld [vmem:[#allocation7 + $0x358] sm:$0xf]
    %v1162 = vld [vmem:[#allocation7 + $0x35c] sm:$0xff]
    %v1163 = vld [vmem:[#allocation7 + $0x364] sm:$0xff]
    %v1164 = vld [vmem:[#allocation7 + $0x36c] sm:$0xf]
    %v1165 = vld [vmem:[#allocation7 + $0x370] sm:$0xff]
    %v1166 = vld [vmem:[#allocation7 + $0x378] sm:$0xff]
    %v1167 = vld [vmem:[#allocation7 + $0x380] sm:$0xf]
    %v1168 = vld [vmem:[#allocation7 + $0x384] sm:$0xff]
    %v1169 = vld [vmem:[#allocation7 + $0x38c] sm:$0xff]
    %v1170 = vld [vmem:[#allocation7 + $0x394] sm:$0xf]
    %v1171 = vld [vmem:[#allocation7 + $0x398] sm:$0xff]
    %v1172 = vld [vmem:[#allocation7 + $0x3a0] sm:$0xff]
    %v1173 = vld [vmem:[#allocation7 + $0x3a8] sm:$0xf]
    %v1174 = vld [vmem:[#allocation7 + $0x3ac] sm:$0xff]
    %v1175 = vld [vmem:[#allocation7 + $0x3b4] sm:$0xff]
    %v1176 = vld [vmem:[#allocation7 + $0x3bc] sm:$0xf]
    %v1177 = vld [vmem:[#allocation7 + $0x3c0] sm:$0xff]
    %v1178 = vld [vmem:[#allocation7 + $0x3c8] sm:$0xff]
    %v1179 = vld [vmem:[#allocation7 + $0x3d0] sm:$0xf]
    %v1180 = vld [vmem:[#allocation7 + $0x3d4] sm:$0xff]
    %v1181 = vld [vmem:[#allocation7 + $0x3dc] sm:$0xff]
    %v1182 = vld [vmem:[#allocation7 + $0x3e4] sm:$0xf]
    %v1183 = vld [vmem:[#allocation7 + $0x3e8] sm:$0xff]
    %v1184 = vld [vmem:[#allocation7 + $0x3f0] sm:$0xff]
    %v1185 = vld [vmem:[#allocation7 + $0x3f8] sm:$0xf]
    %v1186 = vld [vmem:[#allocation7 + $0x3fc] sm:$0xff]
    %v1187 = vld [vmem:[#allocation7 + $0x404] sm:$0xff]
    %v1188 = vld [vmem:[#allocation7 + $0x40c] sm:$0xf]
    %v1189 = vld [vmem:[#allocation7 + $0x410] sm:$0xff]
    %v1190 = vld [vmem:[#allocation7 + $0x418] sm:$0xff]
    %v1191 = vld [vmem:[#allocation7 + $0x420] sm:$0xf]
    %v1192 = vld [vmem:[#allocation7 + $0x424] sm:$0xff]
    %v1193 = vld [vmem:[#allocation7 + $0x42c] sm:$0xff]
    %v1194 = vld [vmem:[#allocation7 + $0x434] sm:$0xf]
    %v1195 = vld [vmem:[#allocation7 + $0x438] sm:$0xff]
    %v1196 = vld [vmem:[#allocation7 + $0x440] sm:$0xff]
    %v1197 = vld [vmem:[#allocation7 + $0x448] sm:$0xf]
    %v1198 = vld [vmem:[#allocation7 + $0x44c] sm:$0xff]
    %v1199 = vld [vmem:[#allocation7 + $0x454] sm:$0xff]
    %v1200 = vld [vmem:[#allocation7 + $0x45c] sm:$0xf]
    %v1201 = vld [vmem:[#allocation7 + $0x460] sm:$0xff]
    %v1202 = vld [vmem:[#allocation7 + $0x468] sm:$0xff]
    %v1203 = vld [vmem:[#allocation7 + $0x470] sm:$0xf]
    %v1204 = vld [vmem:[#allocation7 + $0x474] sm:$0xff]
    %v1205 = vld [vmem:[#allocation7 + $0x47c] sm:$0xff]
    %v1206 = vld [vmem:[#allocation7 + $0x484] sm:$0xf]
    %v1207 = vld [vmem:[#allocation7 + $0x488] sm:$0xff]
    %v1208 = vld [vmem:[#allocation7 + $0x490] sm:$0xff]
    %v1209 = vld [vmem:[#allocation7 + $0x498] sm:$0xf]
    %v1210 = vld [vmem:[#allocation7 + $0x49c] sm:$0xff]
    %v1211 = vld [vmem:[#allocation7 + $0x4a4] sm:$0xff]
    %v1212 = vld [vmem:[#allocation7 + $0x4ac] sm:$0xf]
    %v1213 = vld [vmem:[#allocation7 + $0x4b0] sm:$0xff]
    %v1214 = vld [vmem:[#allocation7 + $0x4b8] sm:$0xff]
    %v1215 = vld [vmem:[#allocation7 + $0x4c0] sm:$0xf]
    %v1216 = vld [vmem:[#allocation7 + $0x4c4] sm:$0xff]
    %v1217 = vld [vmem:[#allocation7 + $0x4cc] sm:$0xff]
    %v1218 = vld [vmem:[#allocation7 + $0x4d4] sm:$0xf]
    %v1219 = vld [vmem:[#allocation7 + $0x4d8] sm:$0xff]
    %v1220 = vld [vmem:[#allocation7 + $0x4e0] sm:$0xff]
    %v1221 = vld [vmem:[#allocation7 + $0x4e8] sm:$0xf]
    %v1222 = vld [vmem:[#allocation7 + $0x4ec] sm:$0xff]
    %v1223 = vld [vmem:[#allocation7 + $0x4f4] sm:$0xff]
    %v1224 = vld [vmem:[#allocation7 + $0x4fc] sm:$0xf]
    %v1225 = vld [vmem:[#allocation7 + $0x500] sm:$0xff]
    %v1226 = vld [vmem:[#allocation7 + $0x508] sm:$0xff]
    %v1227 = vld [vmem:[#allocation7 + $0x510] sm:$0xf]
    %v1228 = vld [vmem:[#allocation7 + $0x514] sm:$0xff]
    %v1229 = vld [vmem:[#allocation7 + $0x51c] sm:$0xff]
    %v1230 = vld [vmem:[#allocation7 + $0x524] sm:$0xf]
    %v1231 = vld [vmem:[#allocation7 + $0x528] sm:$0xff]
    %v1232 = vld [vmem:[#allocation7 + $0x530] sm:$0xff]
    %v1233 = vld [vmem:[#allocation7 + $0x538] sm:$0xf]
    %v1234 = vld [vmem:[#allocation7 + $0x53c] sm:$0xff]
    %v1235 = vld [vmem:[#allocation7 + $0x544] sm:$0xff]
    %v1236 = vld [vmem:[#allocation7 + $0x54c] sm:$0xf]
    %v1237 = vld [vmem:[#allocation7 + $0x550] sm:$0xff]
    %v1238 = vld [vmem:[#allocation7 + $0x558] sm:$0xff]
    %v1239 = vld [vmem:[#allocation7 + $0x560] sm:$0xf]
    %v1240 = vld [vmem:[#allocation7 + $0x564] sm:$0xff]
    %v1241 = vld [vmem:[#allocation7 + $0x56c] sm:$0xff]
    %v1242 = vld [vmem:[#allocation7 + $0x574] sm:$0xf]
    %v1243 = vld [vmem:[#allocation7 + $0x578] sm:$0xff]
    %v1244 = vld [vmem:[#allocation7 + $0x580] sm:$0xff]
    %v1245 = vld [vmem:[#allocation7 + $0x588] sm:$0xf]
    %v1246 = vld [vmem:[#allocation7 + $0x58c] sm:$0xff]
    %v1247 = vld [vmem:[#allocation7 + $0x594] sm:$0xff]
    %v1248 = vld [vmem:[#allocation7 + $0x59c] sm:$0xf]
    %v1249 = vld [vmem:[#allocation7 + $0x5a0] sm:$0xff]
    %v1250 = vld [vmem:[#allocation7 + $0x5a8] sm:$0xff]
    %v1251 = vld [vmem:[#allocation7 + $0x5b0] sm:$0xf]
    %v1252 = vld [vmem:[#allocation7 + $0x5b4] sm:$0xff]
    %v1253 = vld [vmem:[#allocation7 + $0x5bc] sm:$0xff]
    %v1254 = vld [vmem:[#allocation7 + $0x5c4] sm:$0xf]
    %v1255 = vld [vmem:[#allocation7 + $0x5c8] sm:$0xff]
    %v1256 = vld [vmem:[#allocation7 + $0x5d0] sm:$0xff]
    %v1257 = vld [vmem:[#allocation7 + $0x5d8] sm:$0xf]
    %v1258 = vld [vmem:[#allocation7 + $0x5dc] sm:$0xff]
    %v1259 = vld [vmem:[#allocation7 + $0x5e4] sm:$0xff]
    %v1260 = vld [vmem:[#allocation7 + $0x5ec] sm:$0xf]
    %v1261 = vld [vmem:[#allocation7 + $0x5f0] sm:$0xff]
    %v1262 = vld [vmem:[#allocation7 + $0x5f8] sm:$0xff]
    %v1263 = vld [vmem:[#allocation7 + $0x600] sm:$0xf]
    %v1264 = vld [vmem:[#allocation7 + $0x604] sm:$0xff]
    %v1265 = vld [vmem:[#allocation7 + $0x60c] sm:$0xff]
    %v1266 = vld [vmem:[#allocation7 + $0x614] sm:$0xf]
    %v1267 = vld [vmem:[#allocation7 + $0x618] sm:$0xff]
    %v1268 = vld [vmem:[#allocation7 + $0x620] sm:$0xff]
    %v1269 = vld [vmem:[#allocation7 + $0x628] sm:$0xf]
    %v1270 = vld [vmem:[#allocation7 + $0x62c] sm:$0xff]
    %v1271 = vld [vmem:[#allocation7 + $0x634] sm:$0xff]
    %v1272 = vld [vmem:[#allocation7 + $0x63c] sm:$0xf]
    %v1273 = vld [vmem:[#allocation7 + $0x640] sm:$0xff]
    %v1274 = vld [vmem:[#allocation7 + $0x648] sm:$0xff]
    %v1275 = vld [vmem:[#allocation7 + $0x650] sm:$0xf]
    %v1276 = vld [vmem:[#allocation7 + $0x654] sm:$0xff]
    %v1277 = vld [vmem:[#allocation7 + $0x65c] sm:$0xff]
    %v1278 = vld [vmem:[#allocation7 + $0x664] sm:$0xf]
    %v1279 = vld [vmem:[#allocation7 + $0x668] sm:$0xff]
    %v1280 = vld [vmem:[#allocation7 + $0x670] sm:$0xff]
    %v1281 = vld [vmem:[#allocation7 + $0x678] sm:$0xf]
    %v1282 = vld [vmem:[#allocation7 + $0x67c] sm:$0xff]
    %v1283 = vld [vmem:[#allocation7 + $0x684] sm:$0xff]
    %v1284 = vld [vmem:[#allocation7 + $0x68c] sm:$0xf]
    %v1285 = vld [vmem:[#allocation7 + $0x690] sm:$0xff]
    %v1286 = vld [vmem:[#allocation7 + $0x698] sm:$0xff]
    %v1287 = vld [vmem:[#allocation7 + $0x6a0] sm:$0xf]
    %v1288 = vld [vmem:[#allocation7 + $0x6a4] sm:$0xff]
    %v1289 = vld [vmem:[#allocation7 + $0x6ac] sm:$0xff]
    %v1290 = vld [vmem:[#allocation7 + $0x6b4] sm:$0xf]
    %v1291 = vld [vmem:[#allocation7 + $0x6b8] sm:$0xff]
    %v1292 = vld [vmem:[#allocation7 + $0x6c0] sm:$0xff]
    %v1293 = vld [vmem:[#allocation7 + $0x6c8] sm:$0xf]
    %v1294 = vld [vmem:[#allocation7 + $0x6cc] sm:$0xff]
    %v1295 = vld [vmem:[#allocation7 + $0x6d4] sm:$0xff]
    %v1296 = vld [vmem:[#allocation7 + $0x6dc] sm:$0xf]
    %v1297 = vld [vmem:[#allocation7 + $0x6e0] sm:$0xff]
    %v1298 = vld [vmem:[#allocation7 + $0x6e8] sm:$0xff]
    %v1299 = vld [vmem:[#allocation7 + $0x6f0] sm:$0xf]
    %v1300 = vld [vmem:[#allocation7 + $0x6f4] sm:$0xff]
    %v1301 = vld [vmem:[#allocation7 + $0x6fc] sm:$0xff]
    %v1302 = vld [vmem:[#allocation7 + $0x704] sm:$0xf]
    %v1303 = vld [vmem:[#allocation7 + $0x708] sm:$0xff]
    %v1304 = vld [vmem:[#allocation7 + $0x710] sm:$0xff]
    %v1305 = vld [vmem:[#allocation7 + $0x718] sm:$0xf]
    %v1306 = vld [vmem:[#allocation7 + $0x71c] sm:$0xff]
    %v1307 = vld [vmem:[#allocation7 + $0x724] sm:$0xff]
    %v1308 = vld [vmem:[#allocation7 + $0x72c] sm:$0xf]
    %v1309 = vld [vmem:[#allocation7 + $0x730] sm:$0xff]
    %v1310 = vld [vmem:[#allocation7 + $0x738] sm:$0xff]
    %v1311 = vld [vmem:[#allocation7 + $0x740] sm:$0xf]
    %v1312 = vld [vmem:[#allocation7 + $0x744] sm:$0xff]
    %v1313 = vld [vmem:[#allocation7 + $0x74c] sm:$0xff]
    %v1314 = vld [vmem:[#allocation7 + $0x754] sm:$0xf]
    %v1315 = vld [vmem:[#allocation7 + $0x758] sm:$0xff]
    %v1316 = vld [vmem:[#allocation7 + $0x760] sm:$0xff]
    %v1317 = vld [vmem:[#allocation7 + $0x768] sm:$0xf]
    %v1318 = vld [vmem:[#allocation7 + $0x76c] sm:$0xff]
    %v1319 = vld [vmem:[#allocation7 + $0x774] sm:$0xff]
    %v1320 = vld [vmem:[#allocation7 + $0x77c] sm:$0xf]
    %v1321 = vld [vmem:[#allocation7 + $0x780] sm:$0xff]
    %v1322 = vld [vmem:[#allocation7 + $0x788] sm:$0xff]
    %v1323 = vld [vmem:[#allocation7 + $0x790] sm:$0xf]
    %v1324 = vld [vmem:[#allocation7 + $0x794] sm:$0xff]
    %v1325 = vld [vmem:[#allocation7 + $0x79c] sm:$0xff]
    %v1326 = vld [vmem:[#allocation7 + $0x7a4] sm:$0xf]
    %v1327 = vld [vmem:[#allocation7 + $0x7a8] sm:$0xff]
    %v1328 = vld [vmem:[#allocation7 + $0x7b0] sm:$0xff]
    %v1329 = vld [vmem:[#allocation7 + $0x7b8] sm:$0xf]
    %v1330 = vld [vmem:[#allocation7 + $0x7bc] sm:$0xff]
    %v1331 = vld [vmem:[#allocation7 + $0x7c4] sm:$0xff]
    %v1332 = vld [vmem:[#allocation7 + $0x7cc] sm:$0xf]
    %v1333 = vld [vmem:[#allocation7 + $0x7d0] sm:$0xff]
    %v1334 = vld [vmem:[#allocation7 + $0x7d8] sm:$0xff]
    %v1335 = vld [vmem:[#allocation7 + $0x7e0] sm:$0xf]
    %v1336 = vld [vmem:[#allocation7 + $0x7e4] sm:$0xff]
    %v1337 = vld [vmem:[#allocation7 + $0x7ec] sm:$0xff]
    %v1338 = vld [vmem:[#allocation7 + $0x7f4] sm:$0xf]
    %v1339 = vld [vmem:[#allocation7 + $0x7f8] sm:$0xff]
    %v1340 = vld [vmem:[#allocation7 + $0x800] sm:$0xff]
    %v1341 = vld [vmem:[#allocation7 + $0x808] sm:$0xf]
    %v1342 = vld [vmem:[#allocation7 + $0x80c] sm:$0xff]
    %v1343 = vld [vmem:[#allocation7 + $0x814] sm:$0xff]
    %v1344 = vld [vmem:[#allocation7 + $0x81c] sm:$0xf]
    %v1345 = vld [vmem:[#allocation7 + $0x820] sm:$0xff]
    %v1346 = vld [vmem:[#allocation7 + $0x828] sm:$0xff]
    %v1347 = vld [vmem:[#allocation7 + $0x830] sm:$0xf]
    %v1348 = vld [vmem:[#allocation7 + $0x834] sm:$0xff]
    %v1349 = vld [vmem:[#allocation7 + $0x83c] sm:$0xff]
    %v1350 = vld [vmem:[#allocation7 + $0x844] sm:$0xf]
    %v1351 = vld [vmem:[#allocation7 + $0x848] sm:$0xff]
    %v1352 = vld [vmem:[#allocation7 + $0x850] sm:$0xff]
    %v1353 = vld [vmem:[#allocation7 + $0x858] sm:$0xf]
    %v1354 = vld [vmem:[#allocation7 + $0x85c] sm:$0xff]
    %v1355 = vld [vmem:[#allocation7 + $0x864] sm:$0xff]
    %v1356 = vld [vmem:[#allocation7 + $0x86c] sm:$0xf]
    %v1357 = vld [vmem:[#allocation7 + $0x870] sm:$0xff]
    %v1358 = vld [vmem:[#allocation7 + $0x878] sm:$0xff]
    %v1359 = vld [vmem:[#allocation7 + $0x880] sm:$0xf]
    %v1360 = vld [vmem:[#allocation7 + $0x884] sm:$0xff]
    %v1361 = vld [vmem:[#allocation7 + $0x88c] sm:$0xff]
    %v1362 = vld [vmem:[#allocation7 + $0x894] sm:$0xf]
    %v1363 = vld [vmem:[#allocation7 + $0x898] sm:$0xff]
    %v1364 = vld [vmem:[#allocation7 + $0x8a0] sm:$0xff]
    %v1365 = vld [vmem:[#allocation7 + $0x8a8] sm:$0xf]
    %v1366 = vld [vmem:[#allocation7 + $0x8ac] sm:$0xff]
    %v1367 = vld [vmem:[#allocation7 + $0x8b4] sm:$0xff]
    %v1368 = vld [vmem:[#allocation7 + $0x8bc] sm:$0xf]
    %v1369 = vld [vmem:[#allocation10] sm:$0x1f]
    %v1371 = vlaneseq
    %v1372 = vshrl.u32 %v1371, 7
    %v1373 = vsub.s32 0, %v1372
    %v1374 = vrot.slane %v1369, %v1373
    %v1375 = vlaneseq
    %v1376 = vshrl.u32 %v1375, 7
    %v1377 = vsub.s32 1, %v1376
    %v1378 = vrot.slane %v1369, %v1377
    %v1379 = vlaneseq
    %v1380 = vshrl.u32 %v1379, 7
    %v1381 = vsub.s32 2, %v1380
    %v1382 = vrot.slane %v1369, %v1381
    %v1383 = vlaneseq
    %v1384 = vshrl.u32 %v1383, 7
    %v1385 = vsub.s32 3, %v1384
    %v1386 = vrot.slane %v1369, %v1385
    %v1387 = vlaneseq
    %v1388 = vshrl.u32 %v1387, 7
    %v1389 = vsub.s32 4, %v1388
    %v1390 = vrot.slane %v1369, %v1389
    %v1732 = vunpack.c.l.b16 %v697
    %v1733 = vunpack.c.h.b16 %v697
    %v1734 = vunpack.c.l.b16 %v698
    %v1735 = vunpack.c.h.b16 %v698
    %v1736 = vunpack.c.l.b16 %v699
    %v1737 = vunpack.c.l.b16 %v700
    %v1738 = vunpack.c.h.b16 %v700
    %v1739 = vunpack.c.l.b16 %v701
    %v1740 = vunpack.c.h.b16 %v701
    %v1741 = vunpack.c.l.b16 %v702
    %v1742 = vunpack.c.l.b16 %v703
    %v1743 = vunpack.c.h.b16 %v703
    %v1744 = vunpack.c.l.b16 %v704
    %v1745 = vunpack.c.h.b16 %v704
    %v1746 = vunpack.c.l.b16 %v705
    %v1747 = vunpack.c.l.b16 %v706
    %v1748 = vunpack.c.h.b16 %v706
    %v1749 = vunpack.c.l.b16 %v707
    %v1750 = vunpack.c.h.b16 %v707
    %v1751 = vunpack.c.l.b16 %v708
    %v1752 = vunpack.c.l.b16 %v709
    %v1753 = vunpack.c.h.b16 %v709
    %v1754 = vunpack.c.l.b16 %v710
    %v1755 = vunpack.c.h.b16 %v710
    %v1756 = vunpack.c.l.b16 %v711
    %v1757 = vunpack.c.l.b16 %v712
    %v1758 = vunpack.c.h.b16 %v712
    %v1759 = vunpack.c.l.b16 %v713
    %v1760 = vunpack.c.h.b16 %v713
    %v1761 = vunpack.c.l.b16 %v714
    %v1762 = vunpack.c.l.b16 %v715
    %v1763 = vunpack.c.h.b16 %v715
    %v1764 = vunpack.c.l.b16 %v716
    %v1765 = vunpack.c.h.b16 %v716
    %v1766 = vunpack.c.l.b16 %v717
    %v1767 = vunpack.c.l.b16 %v718
    %v1768 = vunpack.c.h.b16 %v718
    %v1769 = vunpack.c.l.b16 %v719
    %v1770 = vunpack.c.h.b16 %v719
    %v1771 = vunpack.c.l.b16 %v720
    %v1772 = vunpack.c.l.b16 %v721
    %v1773 = vunpack.c.h.b16 %v721
    %v1774 = vunpack.c.l.b16 %v722
    %v1775 = vunpack.c.h.b16 %v722
    %v1776 = vunpack.c.l.b16 %v723
    %v1777 = vunpack.c.l.b16 %v724
    %v1778 = vunpack.c.h.b16 %v724
    %v1779 = vunpack.c.l.b16 %v725
    %v1780 = vunpack.c.h.b16 %v725
    %v1781 = vunpack.c.l.b16 %v726
    %v1782 = vunpack.c.l.b16 %v727
    %v1783 = vunpack.c.h.b16 %v727
    %v1784 = vunpack.c.l.b16 %v728
    %v1785 = vunpack.c.h.b16 %v728
    %v1786 = vunpack.c.l.b16 %v729
    %v1787 = vunpack.c.l.b16 %v730
    %v1788 = vunpack.c.h.b16 %v730
    %v1789 = vunpack.c.l.b16 %v731
    %v1790 = vunpack.c.h.b16 %v731
    %v1791 = vunpack.c.l.b16 %v732
    %v1792 = vunpack.c.l.b16 %v733
    %v1793 = vunpack.c.h.b16 %v733
    %v1794 = vunpack.c.l.b16 %v734
    %v1795 = vunpack.c.h.b16 %v734
    %v1796 = vunpack.c.l.b16 %v735
    %v1797 = vunpack.c.l.b16 %v736
    %v1798 = vunpack.c.h.b16 %v736
    %v1799 = vunpack.c.l.b16 %v737
    %v1800 = vunpack.c.h.b16 %v737
    %v1801 = vunpack.c.l.b16 %v738
    %v1802 = vunpack.c.l.b16 %v739
    %v1803 = vunpack.c.h.b16 %v739
    %v1804 = vunpack.c.l.b16 %v740
    %v1805 = vunpack.c.h.b16 %v740
    %v1806 = vunpack.c.l.b16 %v741
    %v1807 = vunpack.c.l.b16 %v742
    %v1808 = vunpack.c.h.b16 %v742
    %v1809 = vunpack.c.l.b16 %v743
    %v1810 = vunpack.c.h.b16 %v743
    %v1811 = vunpack.c.l.b16 %v744
    %v1812 = vunpack.c.l.b16 %v745
    %v1813 = vunpack.c.h.b16 %v745
    %v1814 = vunpack.c.l.b16 %v746
    %v1815 = vunpack.c.h.b16 %v746
    %v1816 = vunpack.c.l.b16 %v747
    %v1817 = vunpack.c.l.b16 %v748
    %v1818 = vunpack.c.h.b16 %v748
    %v1819 = vunpack.c.l.b16 %v749
    %v1820 = vunpack.c.h.b16 %v749
    %v1821 = vunpack.c.l.b16 %v750
    %v1822 = vunpack.c.l.b16 %v751
    %v1823 = vunpack.c.h.b16 %v751
    %v1824 = vunpack.c.l.b16 %v752
    %v1825 = vunpack.c.h.b16 %v752
    %v1826 = vunpack.c.l.b16 %v753
    %v1827 = vunpack.c.l.b16 %v754
    %v1828 = vunpack.c.h.b16 %v754
    %v1829 = vunpack.c.l.b16 %v755
    %v1830 = vunpack.c.h.b16 %v755
    %v1831 = vunpack.c.l.b16 %v756
    %v1832 = vunpack.c.l.b16 %v757
    %v1833 = vunpack.c.h.b16 %v757
    %v1834 = vunpack.c.l.b16 %v758
    %v1835 = vunpack.c.h.b16 %v758
    %v1836 = vunpack.c.l.b16 %v759
    %v1837 = vunpack.c.l.b16 %v760
    %v1838 = vunpack.c.h.b16 %v760
    %v1839 = vunpack.c.l.b16 %v761
    %v1840 = vunpack.c.h.b16 %v761
    %v1841 = vunpack.c.l.b16 %v762
    %v1842 = vunpack.c.l.b16 %v763
    %v1843 = vunpack.c.h.b16 %v763
    %v1844 = vunpack.c.l.b16 %v764
    %v1845 = vunpack.c.h.b16 %v764
    %v1846 = vunpack.c.l.b16 %v765
    %v1847 = vunpack.c.l.b16 %v766
    %v1848 = vunpack.c.h.b16 %v766
    %v1849 = vunpack.c.l.b16 %v767
    %v1850 = vunpack.c.h.b16 %v767
    %v1851 = vunpack.c.l.b16 %v768
    %v1852 = vunpack.c.l.b16 %v769
    %v1853 = vunpack.c.h.b16 %v769
    %v1854 = vunpack.c.l.b16 %v770
    %v1855 = vunpack.c.h.b16 %v770
    %v1856 = vunpack.c.l.b16 %v771
    %v1857 = vunpack.c.l.b16 %v772
    %v1858 = vunpack.c.h.b16 %v772
    %v1859 = vunpack.c.l.b16 %v773
    %v1860 = vunpack.c.h.b16 %v773
    %v1861 = vunpack.c.l.b16 %v774
    %v1862 = vunpack.c.l.b16 %v775
    %v1863 = vunpack.c.h.b16 %v775
    %v1864 = vunpack.c.l.b16 %v776
    %v1865 = vunpack.c.h.b16 %v776
    %v1866 = vunpack.c.l.b16 %v777
    %v1867 = vunpack.c.l.b16 %v778
    %v1868 = vunpack.c.h.b16 %v778
    %v1869 = vunpack.c.l.b16 %v779
    %v1870 = vunpack.c.h.b16 %v779
    %v1871 = vunpack.c.l.b16 %v780
    %v1872 = vunpack.c.l.b16 %v781
    %v1873 = vunpack.c.h.b16 %v781
    %v1874 = vunpack.c.l.b16 %v782
    %v1875 = vunpack.c.h.b16 %v782
    %v1876 = vunpack.c.l.b16 %v783
    %v1877 = vunpack.c.l.b16 %v784
    %v1878 = vunpack.c.h.b16 %v784
    %v1879 = vunpack.c.l.b16 %v785
    %v1880 = vunpack.c.h.b16 %v785
    %v1881 = vunpack.c.l.b16 %v786
    %v1882 = vunpack.c.l.b16 %v787
    %v1883 = vunpack.c.h.b16 %v787
    %v1884 = vunpack.c.l.b16 %v788
    %v1885 = vunpack.c.h.b16 %v788
    %v1886 = vunpack.c.l.b16 %v789
    %v1887 = vunpack.c.l.b16 %v790
    %v1888 = vunpack.c.h.b16 %v790
    %v1889 = vunpack.c.l.b16 %v791
    %v1890 = vunpack.c.h.b16 %v791
    %v1891 = vunpack.c.l.b16 %v792
    %v1892 = vunpack.c.l.b16 %v793
    %v1893 = vunpack.c.h.b16 %v793
    %v1894 = vunpack.c.l.b16 %v794
    %v1895 = vunpack.c.h.b16 %v794
    %v1896 = vunpack.c.l.b16 %v795
    %v1897 = vunpack.c.l.b16 %v796
    %v1898 = vunpack.c.h.b16 %v796
    %v1899 = vunpack.c.l.b16 %v797
    %v1900 = vunpack.c.h.b16 %v797
    %v1901 = vunpack.c.l.b16 %v798
    %v1902 = vunpack.c.l.b16 %v799
    %v1903 = vunpack.c.h.b16 %v799
    %v1904 = vunpack.c.l.b16 %v800
    %v1905 = vunpack.c.h.b16 %v800
    %v1906 = vunpack.c.l.b16 %v801
    %v1907 = vunpack.c.l.b16 %v802
    %v1908 = vunpack.c.h.b16 %v802
    %v1909 = vunpack.c.l.b16 %v803
    %v1910 = vunpack.c.h.b16 %v803
    %v1911 = vunpack.c.l.b16 %v804
    %v1912 = vunpack.c.l.b16 %v805
    %v1913 = vunpack.c.h.b16 %v805
    %v1914 = vunpack.c.l.b16 %v806
    %v1915 = vunpack.c.h.b16 %v806
    %v1916 = vunpack.c.l.b16 %v807
    %v1917 = vunpack.c.l.b16 %v808
    %v1918 = vunpack.c.h.b16 %v808
    %v1919 = vunpack.c.l.b16 %v809
    %v1920 = vunpack.c.h.b16 %v809
    %v1921 = vunpack.c.l.b16 %v810
    %v1922 = vunpack.c.l.b16 %v811
    %v1923 = vunpack.c.h.b16 %v811
    %v1924 = vunpack.c.l.b16 %v812
    %v1925 = vunpack.c.h.b16 %v812
    %v1926 = vunpack.c.l.b16 %v813
    %v1927 = vunpack.c.l.b16 %v814
    %v1928 = vunpack.c.h.b16 %v814
    %v1929 = vunpack.c.l.b16 %v815
    %v1930 = vunpack.c.h.b16 %v815
    %v1931 = vunpack.c.l.b16 %v816
    %v1932 = vunpack.c.l.b16 %v817
    %v1933 = vunpack.c.h.b16 %v817
    %v1934 = vunpack.c.l.b16 %v818
    %v1935 = vunpack.c.h.b16 %v818
    %v1936 = vunpack.c.l.b16 %v819
    %v1937 = vunpack.c.l.b16 %v820
    %v1938 = vunpack.c.h.b16 %v820
    %v1939 = vunpack.c.l.b16 %v821
    %v1940 = vunpack.c.h.b16 %v821
    %v1941 = vunpack.c.l.b16 %v822
    %v1942 = vunpack.c.l.b16 %v823
    %v1943 = vunpack.c.h.b16 %v823
    %v1944 = vunpack.c.l.b16 %v824
    %v1945 = vunpack.c.h.b16 %v824
    %v1946 = vunpack.c.l.b16 %v825
    %v1947 = vunpack.c.l.b16 %v826
    %v1948 = vunpack.c.h.b16 %v826
    %v1949 = vunpack.c.l.b16 %v827
    %v1950 = vunpack.c.h.b16 %v827
    %v1951 = vunpack.c.l.b16 %v828
    %v1952 = vunpack.c.l.b16 %v829
    %v1953 = vunpack.c.h.b16 %v829
    %v1954 = vunpack.c.l.b16 %v830
    %v1955 = vunpack.c.h.b16 %v830
    %v1956 = vunpack.c.l.b16 %v831
    %v1957 = vunpack.c.l.b16 %v832
    %v1958 = vunpack.c.h.b16 %v832
    %v1959 = vunpack.c.l.b16 %v833
    %v1960 = vunpack.c.h.b16 %v833
    %v1961 = vunpack.c.l.b16 %v834
    %v1962 = vunpack.c.l.b16 %v835
    %v1963 = vunpack.c.h.b16 %v835
    %v1964 = vunpack.c.l.b16 %v836
    %v1965 = vunpack.c.h.b16 %v836
    %v1966 = vunpack.c.l.b16 %v837
    %v1967 = vunpack.c.l.b16 %v838
    %v1968 = vunpack.c.h.b16 %v838
    %v1969 = vunpack.c.l.b16 %v839
    %v1970 = vunpack.c.h.b16 %v839
    %v1971 = vunpack.c.l.b16 %v840
    %v1972 = vunpack.c.l.b16 %v841
    %v1973 = vunpack.c.h.b16 %v841
    %v1974 = vunpack.c.l.b16 %v842
    %v1975 = vunpack.c.h.b16 %v842
    %v1976 = vunpack.c.l.b16 %v843
    %v1977 = vunpack.c.l.b16 %v844
    %v1978 = vunpack.c.h.b16 %v844
    %v1979 = vunpack.c.l.b16 %v845
    %v1980 = vunpack.c.h.b16 %v845
    %v1981 = vunpack.c.l.b16 %v846
    %v1982 = vunpack.c.l.b16 %v847
    %v1983 = vunpack.c.h.b16 %v847
    %v1984 = vunpack.c.l.b16 %v848
    %v1985 = vunpack.c.h.b16 %v848
    %v1986 = vunpack.c.l.b16 %v849
    %v1987 = vunpack.c.l.b16 %v850
    %v1988 = vunpack.c.h.b16 %v850
    %v1989 = vunpack.c.l.b16 %v851
    %v1990 = vunpack.c.h.b16 %v851
    %v1991 = vunpack.c.l.b16 %v852
    %v1992 = vunpack.c.l.b16 %v853
    %v1993 = vunpack.c.h.b16 %v853
    %v1994 = vunpack.c.l.b16 %v854
    %v1995 = vunpack.c.h.b16 %v854
    %v1996 = vunpack.c.l.b16 %v855
    %v1997 = vunpack.c.l.b16 %v856
    %v1998 = vunpack.c.h.b16 %v856
    %v1999 = vunpack.c.l.b16 %v857
    %v2000 = vunpack.c.h.b16 %v857
    %v2001 = vunpack.c.l.b16 %v858
    %v2002 = vunpack.c.l.b16 %v859
    %v2003 = vunpack.c.h.b16 %v859
    %v2004 = vunpack.c.l.b16 %v860
    %v2005 = vunpack.c.h.b16 %v860
    %v2006 = vunpack.c.l.b16 %v861
    %v2007 = vunpack.c.l.b16 %v862
    %v2008 = vunpack.c.h.b16 %v862
    %v2009 = vunpack.c.l.b16 %v863
    %v2010 = vunpack.c.h.b16 %v863
    %v2011 = vunpack.c.l.b16 %v864
    %v2012 = vunpack.c.l.b16 %v865
    %v2013 = vunpack.c.h.b16 %v865
    %v2014 = vunpack.c.l.b16 %v866
    %v2015 = vunpack.c.h.b16 %v866
    %v2016 = vunpack.c.l.b16 %v867
    %v2017 = vunpack.c.l.b16 %v868
    %v2018 = vunpack.c.h.b16 %v868
    %v2019 = vunpack.c.l.b16 %v869
    %v2020 = vunpack.c.h.b16 %v869
    %v2021 = vunpack.c.l.b16 %v870
    %v2022 = vunpack.c.l.b16 %v871
    %v2023 = vunpack.c.h.b16 %v871
    %v2024 = vunpack.c.l.b16 %v872
    %v2025 = vunpack.c.h.b16 %v872
    %v2026 = vunpack.c.l.b16 %v873
    %v2027 = vunpack.c.l.b16 %v874
    %v2028 = vunpack.c.h.b16 %v874
    %v2029 = vunpack.c.l.b16 %v875
    %v2030 = vunpack.c.h.b16 %v875
    %v2031 = vunpack.c.l.b16 %v876
    %v2032 = vunpack.c.l.b16 %v877
    %v2033 = vunpack.c.h.b16 %v877
    %v2034 = vunpack.c.l.b16 %v878
    %v2035 = vunpack.c.h.b16 %v878
    %v2036 = vunpack.c.l.b16 %v879
    %v2037 = vunpack.c.l.b16 %v880
    %v2038 = vunpack.c.h.b16 %v880
    %v2039 = vunpack.c.l.b16 %v881
    %v2040 = vunpack.c.h.b16 %v881
    %v2041 = vunpack.c.l.b16 %v882
    %v2042 = vunpack.c.l.b16 %v883
    %v2043 = vunpack.c.h.b16 %v883
    %v2044 = vunpack.c.l.b16 %v884
    %v2045 = vunpack.c.h.b16 %v884
    %v2046 = vunpack.c.l.b16 %v885
    %v2047 = vunpack.c.l.b16 %v886
    %v2048 = vunpack.c.h.b16 %v886
    %v2049 = vunpack.c.l.b16 %v887
    %v2050 = vunpack.c.h.b16 %v887
    %v2051 = vunpack.c.l.b16 %v888
    %v2052 = vunpack.c.l.b16 %v889
    %v2053 = vunpack.c.h.b16 %v889
    %v2054 = vunpack.c.l.b16 %v890
    %v2055 = vunpack.c.h.b16 %v890
    %v2056 = vunpack.c.l.b16 %v891
    %v2057 = vunpack.c.l.b16 %v892
    %v2058 = vunpack.c.h.b16 %v892
    %v2059 = vunpack.c.l.b16 %v893
    %v2060 = vunpack.c.h.b16 %v893
    %v2061 = vunpack.c.l.b16 %v894
    %v2062 = vunpack.c.l.b16 %v895
    %v2063 = vunpack.c.h.b16 %v895
    %v2064 = vunpack.c.l.b16 %v896
    %v2065 = vunpack.c.h.b16 %v896
    %v2066 = vunpack.c.l.b16 %v897
    %v2067 = vunpack.c.l.b16 %v898
    %v2068 = vunpack.c.h.b16 %v898
    %v2069 = vunpack.c.l.b16 %v899
    %v2070 = vunpack.c.h.b16 %v899
    %v2071 = vunpack.c.l.b16 %v900
    %v2072 = vunpack.c.l.b16 %v901
    %v2073 = vunpack.c.h.b16 %v901
    %v2074 = vunpack.c.l.b16 %v902
    %v2075 = vunpack.c.h.b16 %v902
    %v2076 = vunpack.c.l.b16 %v903
    %v2077 = vunpack.c.l.b16 %v904
    %v2078 = vunpack.c.h.b16 %v904
    %v2079 = vunpack.c.l.b16 %v905
    %v2080 = vunpack.c.h.b16 %v905
    %v2081 = vunpack.c.l.b16 %v906
    %v2082 = vunpack.c.l.b16 %v907
    %v2083 = vunpack.c.h.b16 %v907
    %v2084 = vunpack.c.l.b16 %v908
    %v2085 = vunpack.c.h.b16 %v908
    %v2086 = vunpack.c.l.b16 %v909
    %v2087 = vunpack.c.l.b16 %v910
    %v2088 = vunpack.c.h.b16 %v910
    %v2089 = vunpack.c.l.b16 %v911
    %v2090 = vunpack.c.h.b16 %v911
    %v2091 = vunpack.c.l.b16 %v912
    %v2092 = vunpack.c.l.b16 %v913
    %v2093 = vunpack.c.h.b16 %v913
    %v2094 = vunpack.c.l.b16 %v914
    %v2095 = vunpack.c.h.b16 %v914
    %v2096 = vunpack.c.l.b16 %v915
    %v2097 = vunpack.c.l.b16 %v916
    %v2098 = vunpack.c.h.b16 %v916
    %v2099 = vunpack.c.l.b16 %v917
    %v2100 = vunpack.c.h.b16 %v917
    %v2101 = vunpack.c.l.b16 %v918
    %v2102 = vunpack.c.l.b16 %v919
    %v2103 = vunpack.c.h.b16 %v919
    %v2104 = vunpack.c.l.b16 %v920
    %v2105 = vunpack.c.h.b16 %v920
    %v2106 = vunpack.c.l.b16 %v921
    %v2107 = vunpack.c.l.b16 %v922
    %v2108 = vunpack.c.h.b16 %v922
    %v2109 = vunpack.c.l.b16 %v923
    %v2110 = vunpack.c.h.b16 %v923
    %v2111 = vunpack.c.l.b16 %v924
    %v2112 = vunpack.c.l.b16 %v925
    %v2113 = vunpack.c.h.b16 %v925
    %v2114 = vunpack.c.l.b16 %v926
    %v2115 = vunpack.c.h.b16 %v926
    %v2116 = vunpack.c.l.b16 %v927
    %v2117 = vunpack.c.l.b16 %v928
    %v2118 = vunpack.c.h.b16 %v928
    %v2119 = vunpack.c.l.b16 %v929
    %v2120 = vunpack.c.h.b16 %v929
    %v2121 = vunpack.c.l.b16 %v930
    %v2122 = vunpack.c.l.b16 %v931
    %v2123 = vunpack.c.h.b16 %v931
    %v2124 = vunpack.c.l.b16 %v932
    %v2125 = vunpack.c.h.b16 %v932
    %v2126 = vunpack.c.l.b16 %v933
    %v2127 = vunpack.c.l.b16 %v934
    %v2128 = vunpack.c.h.b16 %v934
    %v2129 = vunpack.c.l.b16 %v935
    %v2130 = vunpack.c.h.b16 %v935
    %v2131 = vunpack.c.l.b16 %v936
    %v2132 = vunpack.c.l.b16 %v937
    %v2133 = vunpack.c.h.b16 %v937
    %v2134 = vunpack.c.l.b16 %v938
    %v2135 = vunpack.c.h.b16 %v938
    %v2136 = vunpack.c.l.b16 %v939
    %v2137 = vunpack.c.l.b16 %v940
    %v2138 = vunpack.c.h.b16 %v940
    %v2139 = vunpack.c.l.b16 %v941
    %v2140 = vunpack.c.h.b16 %v941
    %v2141 = vunpack.c.l.b16 %v942
    %v2142 = vunpack.c.l.b16 %v943
    %v2143 = vunpack.c.h.b16 %v943
    %v2144 = vunpack.c.l.b16 %v944
    %v2145 = vunpack.c.h.b16 %v944
    %v2146 = vunpack.c.l.b16 %v945
    %v2147 = vunpack.c.l.b16 %v946
    %v2148 = vunpack.c.h.b16 %v946
    %v2149 = vunpack.c.l.b16 %v947
    %v2150 = vunpack.c.h.b16 %v947
    %v2151 = vunpack.c.l.b16 %v948
    %v2152 = vunpack.c.l.b16 %v949
    %v2153 = vunpack.c.h.b16 %v949
    %v2154 = vunpack.c.l.b16 %v950
    %v2155 = vunpack.c.h.b16 %v950
    %v2156 = vunpack.c.l.b16 %v951
    %v2157 = vunpack.c.l.b16 %v952
    %v2158 = vunpack.c.h.b16 %v952
    %v2159 = vunpack.c.l.b16 %v953
    %v2160 = vunpack.c.h.b16 %v953
    %v2161 = vunpack.c.l.b16 %v954
    %v2162 = vunpack.c.l.b16 %v955
    %v2163 = vunpack.c.h.b16 %v955
    %v2164 = vunpack.c.l.b16 %v956
    %v2165 = vunpack.c.h.b16 %v956
    %v2166 = vunpack.c.l.b16 %v957
    %v2167 = vunpack.c.l.b16 %v958
    %v2168 = vunpack.c.h.b16 %v958
    %v2169 = vunpack.c.l.b16 %v959
    %v2170 = vunpack.c.h.b16 %v959
    %v2171 = vunpack.c.l.b16 %v960
    %v2172 = vunpack.c.l.b16 %v961
    %v2173 = vunpack.c.h.b16 %v961
    %v2174 = vunpack.c.l.b16 %v962
    %v2175 = vunpack.c.h.b16 %v962
    %v2176 = vunpack.c.l.b16 %v963
    %v2177 = vunpack.c.l.b16 %v964
    %v2178 = vunpack.c.h.b16 %v964
    %v2179 = vunpack.c.l.b16 %v965
    %v2180 = vunpack.c.h.b16 %v965
    %v2181 = vunpack.c.l.b16 %v966
    %v2182 = vunpack.c.l.b16 %v967
    %v2183 = vunpack.c.h.b16 %v967
    %v2184 = vunpack.c.l.b16 %v968
    %v2185 = vunpack.c.h.b16 %v968
    %v2186 = vunpack.c.l.b16 %v969
    %v2187 = vunpack.c.l.b16 %v970
    %v2188 = vunpack.c.h.b16 %v970
    %v2189 = vunpack.c.l.b16 %v971
    %v2190 = vunpack.c.h.b16 %v971
    %v2191 = vunpack.c.l.b16 %v972
    %v2192 = vunpack.c.l.b16 %v973
    %v2193 = vunpack.c.h.b16 %v973
    %v2194 = vunpack.c.l.b16 %v974
    %v2195 = vunpack.c.h.b16 %v974
    %v2196 = vunpack.c.l.b16 %v975
    %v2197 = vunpack.c.l.b16 %v976
    %v2198 = vunpack.c.h.b16 %v976
    %v2199 = vunpack.c.l.b16 %v977
    %v2200 = vunpack.c.h.b16 %v977
    %v2201 = vunpack.c.l.b16 %v978
    %v2202 = vunpack.c.l.b16 %v979
    %v2203 = vunpack.c.h.b16 %v979
    %v2204 = vunpack.c.l.b16 %v980
    %v2205 = vunpack.c.h.b16 %v980
    %v2206 = vunpack.c.l.b16 %v981
    %v2207 = vunpack.c.l.b16 %v982
    %v2208 = vunpack.c.h.b16 %v982
    %v2209 = vunpack.c.l.b16 %v983
    %v2210 = vunpack.c.h.b16 %v983
    %v2211 = vunpack.c.l.b16 %v984
    %v2212 = vunpack.c.l.b16 %v985
    %v2213 = vunpack.c.h.b16 %v985
    %v2214 = vunpack.c.l.b16 %v986
    %v2215 = vunpack.c.h.b16 %v986
    %v2216 = vunpack.c.l.b16 %v987
    %v2217 = vunpack.c.l.b16 %v988
    %v2218 = vunpack.c.h.b16 %v988
    %v2219 = vunpack.c.l.b16 %v989
    %v2220 = vunpack.c.h.b16 %v989
    %v2221 = vunpack.c.l.b16 %v990
    %v2222 = vunpack.c.l.b16 %v991
    %v2223 = vunpack.c.h.b16 %v991
    %v2224 = vunpack.c.l.b16 %v992
    %v2225 = vunpack.c.h.b16 %v992
    %v2226 = vunpack.c.l.b16 %v993
    %v2227 = vunpack.c.l.b16 %v994
    %v2228 = vunpack.c.h.b16 %v994
    %v2229 = vunpack.c.l.b16 %v995
    %v2230 = vunpack.c.h.b16 %v995
    %v2231 = vunpack.c.l.b16 %v996
    %v2232 = vunpack.c.l.b16 %v997
    %v2233 = vunpack.c.h.b16 %v997
    %v2234 = vunpack.c.l.b16 %v998
    %v2235 = vunpack.c.h.b16 %v998
    %v2236 = vunpack.c.l.b16 %v999
    %v2237 = vunpack.c.l.b16 %v1000
    %v2238 = vunpack.c.h.b16 %v1000
    %v2239 = vunpack.c.l.b16 %v1001
    %v2240 = vunpack.c.h.b16 %v1001
    %v2241 = vunpack.c.l.b16 %v1002
    %v2242 = vunpack.c.l.b16 %v1003
    %v2243 = vunpack.c.h.b16 %v1003
    %v2244 = vunpack.c.l.b16 %v1004
    %v2245 = vunpack.c.h.b16 %v1004
    %v2246 = vunpack.c.l.b16 %v1005
    %v2247 = vunpack.c.l.b16 %v1006
    %v2248 = vunpack.c.h.b16 %v1006
    %v2249 = vunpack.c.l.b16 %v1007
    %v2250 = vunpack.c.h.b16 %v1007
    %v2251 = vunpack.c.l.b16 %v1008
    %v2252 = vunpack.c.l.b16 %v1009
    %v2253 = vunpack.c.h.b16 %v1009
    %v2254 = vunpack.c.l.b16 %v1010
    %v2255 = vunpack.c.h.b16 %v1010
    %v2256 = vunpack.c.l.b16 %v1011
    %v2257 = vunpack.c.l.b16 %v1012
    %v2258 = vunpack.c.h.b16 %v1012
    %v2259 = vunpack.c.l.b16 %v1013
    %v2260 = vunpack.c.h.b16 %v1013
    %v2261 = vunpack.c.l.b16 %v1014
    %v2262 = vunpack.c.l.b16 %v1015
    %v2263 = vunpack.c.h.b16 %v1015
    %v2264 = vunpack.c.l.b16 %v1016
    %v2265 = vunpack.c.h.b16 %v1016
    %v2266 = vunpack.c.l.b16 %v1017
    %v2267 = vunpack.c.l.b16 %v1018
    %v2268 = vunpack.c.h.b16 %v1018
    %v2269 = vunpack.c.l.b16 %v1019
    %v2270 = vunpack.c.h.b16 %v1019
    %v2271 = vunpack.c.l.b16 %v1020
    %v2272 = vunpack.c.l.b16 %v1021
    %v2273 = vunpack.c.h.b16 %v1021
    %v2274 = vunpack.c.l.b16 %v1022
    %v2275 = vunpack.c.h.b16 %v1022
    %v2276 = vunpack.c.l.b16 %v1023
    %v2277 = vunpack.c.l.b16 %v1024
    %v2278 = vunpack.c.h.b16 %v1024
    %v2279 = vunpack.c.l.b16 %v1025
    %v2280 = vunpack.c.h.b16 %v1025
    %v2281 = vunpack.c.l.b16 %v1026
    %v2282 = vunpack.c.l.b16 %v1027
    %v2283 = vunpack.c.h.b16 %v1027
    %v2284 = vunpack.c.l.b16 %v1028
    %v2285 = vunpack.c.h.b16 %v1028
    %v2286 = vunpack.c.l.b16 %v1029
    %v2287 = vunpack.c.l.b16 %v1030
    %v2288 = vunpack.c.h.b16 %v1030
    %v2289 = vunpack.c.l.b16 %v1031
    %v2290 = vunpack.c.h.b16 %v1031
    %v2291 = vunpack.c.l.b16 %v1032
    %v2292 = vpack.c.b16 %v1737, %v1732
    %v2293 = vpack.c.b16 %v1738, %v1733
    %v2294 = vpack.c.b16 %v1739, %v1734
    %v2295 = vpack.c.b16 %v1740, %v1735
    %v2296 = vpack.c.b16 %v1741, %v1736
    %v2297 = vpack.c.b16 %v1747, %v1742
    %v2298 = vpack.c.b16 %v1748, %v1743
    %v2299 = vpack.c.b16 %v1749, %v1744
    %v2300 = vpack.c.b16 %v1750, %v1745
    %v2301 = vpack.c.b16 %v1751, %v1746
    %v2302 = vpack.c.b16 %v1757, %v1752
    %v2303 = vpack.c.b16 %v1758, %v1753
    %v2304 = vpack.c.b16 %v1759, %v1754
    %v2305 = vpack.c.b16 %v1760, %v1755
    %v2306 = vpack.c.b16 %v1761, %v1756
    %v2307 = vpack.c.b16 %v1767, %v1762
    %v2308 = vpack.c.b16 %v1768, %v1763
    %v2309 = vpack.c.b16 %v1769, %v1764
    %v2310 = vpack.c.b16 %v1770, %v1765
    %v2311 = vpack.c.b16 %v1771, %v1766
    %v2312 = vpack.c.b16 %v1777, %v1772
    %v2313 = vpack.c.b16 %v1778, %v1773
    %v2314 = vpack.c.b16 %v1779, %v1774
    %v2315 = vpack.c.b16 %v1780, %v1775
    %v2316 = vpack.c.b16 %v1781, %v1776
    %v2317 = vpack.c.b16 %v1787, %v1782
    %v2318 = vpack.c.b16 %v1788, %v1783
    %v2319 = vpack.c.b16 %v1789, %v1784
    %v2320 = vpack.c.b16 %v1790, %v1785
    %v2321 = vpack.c.b16 %v1791, %v1786
    %v2322 = vpack.c.b16 %v1797, %v1792
    %v2323 = vpack.c.b16 %v1798, %v1793
    %v2324 = vpack.c.b16 %v1799, %v1794
    %v2325 = vpack.c.b16 %v1800, %v1795
    %v2326 = vpack.c.b16 %v1801, %v1796
    %v2327 = vpack.c.b16 %v1807, %v1802
    %v2328 = vpack.c.b16 %v1808, %v1803
    %v2329 = vpack.c.b16 %v1809, %v1804
    %v2330 = vpack.c.b16 %v1810, %v1805
    %v2331 = vpack.c.b16 %v1811, %v1806
    %v2332 = vpack.c.b16 %v1817, %v1812
    %v2333 = vpack.c.b16 %v1818, %v1813
    %v2334 = vpack.c.b16 %v1819, %v1814
    %v2335 = vpack.c.b16 %v1820, %v1815
    %v2336 = vpack.c.b16 %v1821, %v1816
    %v2337 = vpack.c.b16 %v1827, %v1822
    %v2338 = vpack.c.b16 %v1828, %v1823
    %v2339 = vpack.c.b16 %v1829, %v1824
    %v2340 = vpack.c.b16 %v1830, %v1825
    %v2341 = vpack.c.b16 %v1831, %v1826
    %v2342 = vpack.c.b16 %v1837, %v1832
    %v2343 = vpack.c.b16 %v1838, %v1833
    %v2344 = vpack.c.b16 %v1839, %v1834
    %v2345 = vpack.c.b16 %v1840, %v1835
    %v2346 = vpack.c.b16 %v1841, %v1836
    %v2347 = vpack.c.b16 %v1847, %v1842
    %v2348 = vpack.c.b16 %v1848, %v1843
    %v2349 = vpack.c.b16 %v1849, %v1844
    %v2350 = vpack.c.b16 %v1850, %v1845
    %v2351 = vpack.c.b16 %v1851, %v1846
    %v2352 = vpack.c.b16 %v1857, %v1852
    %v2353 = vpack.c.b16 %v1858, %v1853
    %v2354 = vpack.c.b16 %v1859, %v1854
    %v2355 = vpack.c.b16 %v1860, %v1855
    %v2356 = vpack.c.b16 %v1861, %v1856
    %v2357 = vpack.c.b16 %v1867, %v1862
    %v2358 = vpack.c.b16 %v1868, %v1863
    %v2359 = vpack.c.b16 %v1869, %v1864
    %v2360 = vpack.c.b16 %v1870, %v1865
    %v2361 = vpack.c.b16 %v1871, %v1866
    %v2362 = vpack.c.b16 %v1877, %v1872
    %v2363 = vpack.c.b16 %v1878, %v1873
    %v2364 = vpack.c.b16 %v1879, %v1874
    %v2365 = vpack.c.b16 %v1880, %v1875
    %v2366 = vpack.c.b16 %v1881, %v1876
    %v2367 = vpack.c.b16 %v1887, %v1882
    %v2368 = vpack.c.b16 %v1888, %v1883
    %v2369 = vpack.c.b16 %v1889, %v1884
    %v2370 = vpack.c.b16 %v1890, %v1885
    %v2371 = vpack.c.b16 %v1891, %v1886
    %v2372 = vpack.c.b16 %v1897, %v1892
    %v2373 = vpack.c.b16 %v1898, %v1893
    %v2374 = vpack.c.b16 %v1899, %v1894
    %v2375 = vpack.c.b16 %v1900, %v1895
    %v2376 = vpack.c.b16 %v1901, %v1896
    %v2377 = vpack.c.b16 %v1907, %v1902
    %v2378 = vpack.c.b16 %v1908, %v1903
    %v2379 = vpack.c.b16 %v1909, %v1904
    %v2380 = vpack.c.b16 %v1910, %v1905
    %v2381 = vpack.c.b16 %v1911, %v1906
    %v2382 = vpack.c.b16 %v1917, %v1912
    %v2383 = vpack.c.b16 %v1918, %v1913
    %v2384 = vpack.c.b16 %v1919, %v1914
    %v2385 = vpack.c.b16 %v1920, %v1915
    %v2386 = vpack.c.b16 %v1921, %v1916
    %v2387 = vpack.c.b16 %v1927, %v1922
    %v2388 = vpack.c.b16 %v1928, %v1923
    %v2389 = vpack.c.b16 %v1929, %v1924
    %v2390 = vpack.c.b16 %v1930, %v1925
    %v2391 = vpack.c.b16 %v1931, %v1926
    %v2392 = vpack.c.b16 %v1937, %v1932
    %v2393 = vpack.c.b16 %v1938, %v1933
    %v2394 = vpack.c.b16 %v1939, %v1934
    %v2395 = vpack.c.b16 %v1940, %v1935
    %v2396 = vpack.c.b16 %v1941, %v1936
    %v2397 = vpack.c.b16 %v1947, %v1942
    %v2398 = vpack.c.b16 %v1948, %v1943
    %v2399 = vpack.c.b16 %v1949, %v1944
    %v2400 = vpack.c.b16 %v1950, %v1945
    %v2401 = vpack.c.b16 %v1951, %v1946
    %v2402 = vpack.c.b16 %v1957, %v1952
    %v2403 = vpack.c.b16 %v1958, %v1953
    %v2404 = vpack.c.b16 %v1959, %v1954
    %v2405 = vpack.c.b16 %v1960, %v1955
    %v2406 = vpack.c.b16 %v1961, %v1956
    %v2407 = vpack.c.b16 %v1967, %v1962
    %v2408 = vpack.c.b16 %v1968, %v1963
    %v2409 = vpack.c.b16 %v1969, %v1964
    %v2410 = vpack.c.b16 %v1970, %v1965
    %v2411 = vpack.c.b16 %v1971, %v1966
    %v2412 = vpack.c.b16 %v1977, %v1972
    %v2413 = vpack.c.b16 %v1978, %v1973
    %v2414 = vpack.c.b16 %v1979, %v1974
    %v2415 = vpack.c.b16 %v1980, %v1975
    %v2416 = vpack.c.b16 %v1981, %v1976
    %v2417 = vpack.c.b16 %v1987, %v1982
    %v2418 = vpack.c.b16 %v1988, %v1983
    %v2419 = vpack.c.b16 %v1989, %v1984
    %v2420 = vpack.c.b16 %v1990, %v1985
    %v2421 = vpack.c.b16 %v1991, %v1986
    %v2422 = vpack.c.b16 %v1997, %v1992
    %v2423 = vpack.c.b16 %v1998, %v1993
    %v2424 = vpack.c.b16 %v1999, %v1994
    %v2425 = vpack.c.b16 %v2000, %v1995
    %v2426 = vpack.c.b16 %v2001, %v1996
    %v2427 = vpack.c.b16 %v2007, %v2002
    %v2428 = vpack.c.b16 %v2008, %v2003
    %v2429 = vpack.c.b16 %v2009, %v2004
    %v2430 = vpack.c.b16 %v2010, %v2005
    %v2431 = vpack.c.b16 %v2011, %v2006
    %v2432 = vpack.c.b16 %v2017, %v2012
    %v2433 = vpack.c.b16 %v2018, %v2013
    %v2434 = vpack.c.b16 %v2019, %v2014
    %v2435 = vpack.c.b16 %v2020, %v2015
    %v2436 = vpack.c.b16 %v2021, %v2016
    %v2437 = vpack.c.b16 %v2027, %v2022
    %v2438 = vpack.c.b16 %v2028, %v2023
    %v2439 = vpack.c.b16 %v2029, %v2024
    %v2440 = vpack.c.b16 %v2030, %v2025
    %v2441 = vpack.c.b16 %v2031, %v2026
    %v2442 = vpack.c.b16 %v2037, %v2032
    %v2443 = vpack.c.b16 %v2038, %v2033
    %v2444 = vpack.c.b16 %v2039, %v2034
    %v2445 = vpack.c.b16 %v2040, %v2035
    %v2446 = vpack.c.b16 %v2041, %v2036
    %v2447 = vpack.c.b16 %v2047, %v2042
    %v2448 = vpack.c.b16 %v2048, %v2043
    %v2449 = vpack.c.b16 %v2049, %v2044
    %v2450 = vpack.c.b16 %v2050, %v2045
    %v2451 = vpack.c.b16 %v2051, %v2046
    %v2452 = vpack.c.b16 %v2057, %v2052
    %v2453 = vpack.c.b16 %v2058, %v2053
    %v2454 = vpack.c.b16 %v2059, %v2054
    %v2455 = vpack.c.b16 %v2060, %v2055
    %v2456 = vpack.c.b16 %v2061, %v2056
    %v2457 = vpack.c.b16 %v2067, %v2062
    %v2458 = vpack.c.b16 %v2068, %v2063
    %v2459 = vpack.c.b16 %v2069, %v2064
    %v2460 = vpack.c.b16 %v2070, %v2065
    %v2461 = vpack.c.b16 %v2071, %v2066
    %v2462 = vpack.c.b16 %v2077, %v2072
    %v2463 = vpack.c.b16 %v2078, %v2073
    %v2464 = vpack.c.b16 %v2079, %v2074
    %v2465 = vpack.c.b16 %v2080, %v2075
    %v2466 = vpack.c.b16 %v2081, %v2076
    %v2467 = vpack.c.b16 %v2087, %v2082
    %v2468 = vpack.c.b16 %v2088, %v2083
    %v2469 = vpack.c.b16 %v2089, %v2084
    %v2470 = vpack.c.b16 %v2090, %v2085
    %v2471 = vpack.c.b16 %v2091, %v2086
    %v2472 = vpack.c.b16 %v2097, %v2092
    %v2473 = vpack.c.b16 %v2098, %v2093
    %v2474 = vpack.c.b16 %v2099, %v2094
    %v2475 = vpack.c.b16 %v2100, %v2095
    %v2476 = vpack.c.b16 %v2101, %v2096
    %v2477 = vpack.c.b16 %v2107, %v2102
    %v2478 = vpack.c.b16 %v2108, %v2103
    %v2479 = vpack.c.b16 %v2109, %v2104
    %v2480 = vpack.c.b16 %v2110, %v2105
    %v2481 = vpack.c.b16 %v2111, %v2106
    %v2482 = vpack.c.b16 %v2117, %v2112
    %v2483 = vpack.c.b16 %v2118, %v2113
    %v2484 = vpack.c.b16 %v2119, %v2114
    %v2485 = vpack.c.b16 %v2120, %v2115
    %v2486 = vpack.c.b16 %v2121, %v2116
    %v2487 = vpack.c.b16 %v2127, %v2122
    %v2488 = vpack.c.b16 %v2128, %v2123
    %v2489 = vpack.c.b16 %v2129, %v2124
    %v2490 = vpack.c.b16 %v2130, %v2125
    %v2491 = vpack.c.b16 %v2131, %v2126
    %v2492 = vpack.c.b16 %v2137, %v2132
    %v2493 = vpack.c.b16 %v2138, %v2133
    %v2494 = vpack.c.b16 %v2139, %v2134
    %v2495 = vpack.c.b16 %v2140, %v2135
    %v2496 = vpack.c.b16 %v2141, %v2136
    %v2497 = vpack.c.b16 %v2147, %v2142
    %v2498 = vpack.c.b16 %v2148, %v2143
    %v2499 = vpack.c.b16 %v2149, %v2144
    %v2500 = vpack.c.b16 %v2150, %v2145
    %v2501 = vpack.c.b16 %v2151, %v2146
    %v2502 = vpack.c.b16 %v2157, %v2152
    %v2503 = vpack.c.b16 %v2158, %v2153
    %v2504 = vpack.c.b16 %v2159, %v2154
    %v2505 = vpack.c.b16 %v2160, %v2155
    %v2506 = vpack.c.b16 %v2161, %v2156
    %v2507 = vpack.c.b16 %v2167, %v2162
    %v2508 = vpack.c.b16 %v2168, %v2163
    %v2509 = vpack.c.b16 %v2169, %v2164
    %v2510 = vpack.c.b16 %v2170, %v2165
    %v2511 = vpack.c.b16 %v2171, %v2166
    %v2512 = vpack.c.b16 %v2177, %v2172
    %v2513 = vpack.c.b16 %v2178, %v2173
    %v2514 = vpack.c.b16 %v2179, %v2174
    %v2515 = vpack.c.b16 %v2180, %v2175
    %v2516 = vpack.c.b16 %v2181, %v2176
    %v2517 = vpack.c.b16 %v2187, %v2182
    %v2518 = vpack.c.b16 %v2188, %v2183
    %v2519 = vpack.c.b16 %v2189, %v2184
    %v2520 = vpack.c.b16 %v2190, %v2185
    %v2521 = vpack.c.b16 %v2191, %v2186
    %v2522 = vpack.c.b16 %v2197, %v2192
    %v2523 = vpack.c.b16 %v2198, %v2193
    %v2524 = vpack.c.b16 %v2199, %v2194
    %v2525 = vpack.c.b16 %v2200, %v2195
    %v2526 = vpack.c.b16 %v2201, %v2196
    %v2527 = vpack.c.b16 %v2207, %v2202
    %v2528 = vpack.c.b16 %v2208, %v2203
    %v2529 = vpack.c.b16 %v2209, %v2204
    %v2530 = vpack.c.b16 %v2210, %v2205
    %v2531 = vpack.c.b16 %v2211, %v2206
    %v2532 = vpack.c.b16 %v2217, %v2212
    %v2533 = vpack.c.b16 %v2218, %v2213
    %v2534 = vpack.c.b16 %v2219, %v2214
    %v2535 = vpack.c.b16 %v2220, %v2215
    %v2536 = vpack.c.b16 %v2221, %v2216
    %v2537 = vpack.c.b16 %v2227, %v2222
    %v2538 = vpack.c.b16 %v2228, %v2223
    %v2539 = vpack.c.b16 %v2229, %v2224
    %v2540 = vpack.c.b16 %v2230, %v2225
    %v2541 = vpack.c.b16 %v2231, %v2226
    %v2542 = vpack.c.b16 %v2237, %v2232
    %v2543 = vpack.c.b16 %v2238, %v2233
    %v2544 = vpack.c.b16 %v2239, %v2234
    %v2545 = vpack.c.b16 %v2240, %v2235
    %v2546 = vpack.c.b16 %v2241, %v2236
    %v2547 = vpack.c.b16 %v2247, %v2242
    %v2548 = vpack.c.b16 %v2248, %v2243
    %v2549 = vpack.c.b16 %v2249, %v2244
    %v2550 = vpack.c.b16 %v2250, %v2245
    %v2551 = vpack.c.b16 %v2251, %v2246
    %v2552 = vpack.c.b16 %v2257, %v2252
    %v2553 = vpack.c.b16 %v2258, %v2253
    %v2554 = vpack.c.b16 %v2259, %v2254
    %v2555 = vpack.c.b16 %v2260, %v2255
    %v2556 = vpack.c.b16 %v2261, %v2256
    %v2557 = vpack.c.b16 %v2267, %v2262
    %v2558 = vpack.c.b16 %v2268, %v2263
    %v2559 = vpack.c.b16 %v2269, %v2264
    %v2560 = vpack.c.b16 %v2270, %v2265
    %v2561 = vpack.c.b16 %v2271, %v2266
    %v2562 = vpack.c.b16 %v2277, %v2272
    %v2563 = vpack.c.b16 %v2278, %v2273
    %v2564 = vpack.c.b16 %v2279, %v2274
    %v2565 = vpack.c.b16 %v2280, %v2275
    %v2566 = vpack.c.b16 %v2281, %v2276
    %v2567 = vpack.c.b16 %v2287, %v2282
    %v2568 = vpack.c.b16 %v2288, %v2283
    %v2569 = vpack.c.b16 %v2289, %v2284
    %v2570 = vpack.c.b16 %v2290, %v2285
    %v2571 = vpack.c.b16 %v2291, %v2286
    %2852 = vmatprep.subr.bf16.mxu0 %v2293
    %2853 = vmatpush1.bf16.msra.mxu0 %v2292
    %2854 = vmatprep.subr.bf16.mxu0 %v2298
    %2855 = vmatpush1.bf16.msra.mxu0 %v2297
    %2856 = vmatprep.subr.bf16.mxu0 %v2303
    %2857 = vmatpush1.bf16.msra.mxu0 %v2302
    %2858 = vmatprep.subr.bf16.mxu0 %v2308
    %2859 = vmatpush1.bf16.msra.mxu0 %v2307
    %2860 = vmatprep.subr.bf16.mxu0 %v2313
    %2861 = vmatpush1.bf16.msra.mxu0 %v2312
    %2862 = vmatprep.subr.bf16.mxu0 %v2318
    %2863 = vmatpush1.bf16.msra.mxu0 %v2317
    %2864 = vmatprep.subr.bf16.mxu0 %v2323
    %2865 = vmatpush1.bf16.msra.mxu0 %v2322
    %2866 = vmatprep.subr.bf16.mxu0 %v2328
    %2867 = vmatpush1.bf16.msra.mxu0 %v2327
    %2868 = vmatprep.subr.bf16.mxu0 %v2333
    %2869 = vmatpush1.bf16.msra.mxu0 %v2332
    %2870 = vmatprep.subr.bf16.mxu0 %v2338
    %2871 = vmatpush1.bf16.msra.mxu0 %v2337
    %2872 = vmatprep.subr.bf16.mxu0 %v2343
    %2873 = vmatpush1.bf16.msra.mxu0 %v2342
    %2874 = vmatprep.subr.bf16.mxu0 %v2348
    %2875 = vmatpush1.bf16.msra.mxu0 %v2347
    %2876 = vmatprep.subr.bf16.mxu0 %v2353
    %2877 = vmatpush1.bf16.msra.mxu0 %v2352
    %2878 = vmatprep.subr.bf16.mxu0 %v2358
    %2879 = vmatpush1.bf16.msra.mxu0 %v2357
    %2880 = vmatprep.subr.bf16.mxu0 %v2363
    %2881 = vmatpush1.bf16.msra.mxu0 %v2362
    %2882 = vmatprep.subr.bf16.mxu0 %v2368
    %2883 = vmatpush1.bf16.msra.mxu0 %v2367
    %2884 = vmatprep.mubr.bf16.mxu0 %v684
    %2885 = vmatmul.mubr.bf16.gmra.mrb[0].mxu0 %v683
    %v2886 = vpop.f32.mrb[0].mxu0
    %v2887 = vadd.f32 %v1374, %v2886
    %v2888 = vpop.f32.mrb[0].mxu0
    %v2889 = vadd.f32 %v1378, %v2888
    %v2890 = vpop.f32.mrb[0].mxu0
    %v2891 = vpop.f32.mrb[0].mxu0
    %2892 = vdwg.mxu0
    %2893 = vmatprep.subr.bf16.mxu0 %v2373
    %2894 = vmatpush1.bf16.msra.mxu0 %v2372
    %2895 = vmatprep.subr.bf16.mxu0 %v2378
    %2896 = vmatpush1.bf16.msra.mxu0 %v2377
    %2897 = vmatprep.subr.bf16.mxu0 %v2383
    %2898 = vmatpush1.bf16.msra.mxu0 %v2382
    %2899 = vmatprep.subr.bf16.mxu0 %v2388
    %2900 = vmatpush1.bf16.msra.mxu0 %v2387
    %2901 = vmatprep.subr.bf16.mxu0 %v2393
    %2902 = vmatpush1.bf16.msra.mxu0 %v2392
    %2903 = vmatprep.subr.bf16.mxu0 %v2398
    %2904 = vmatpush1.bf16.msra.mxu0 %v2397
    %2905 = vmatprep.subr.bf16.mxu0 %v2403
    %2906 = vmatpush1.bf16.msra.mxu0 %v2402
    %2907 = vmatprep.subr.bf16.mxu0 %v2408
    %2908 = vmatpush1.bf16.msra.mxu0 %v2407
    %2909 = vmatprep.subr.bf16.mxu0 %v2413
    %2910 = vmatpush1.bf16.msra.mxu0 %v2412
    %2911 = vmatprep.subr.bf16.mxu0 %v2418
    %2912 = vmatpush1.bf16.msra.mxu0 %v2417
    %2913 = vmatprep.subr.bf16.mxu0 %v2423
    %2914 = vmatpush1.bf16.msra.mxu0 %v2422
    %2915 = vmatprep.subr.bf16.mxu0 %v2428
    %2916 = vmatpush1.bf16.msra.mxu0 %v2427
    %2917 = vmatprep.subr.bf16.mxu0 %v2433
    %2918 = vmatpush1.bf16.msra.mxu0 %v2432
    %2919 = vmatprep.subr.bf16.mxu0 %v2438
    %2920 = vmatpush1.bf16.msra.mxu0 %v2437
    %2921 = vmatprep.subr.bf16.mxu0 %v2443
    %2922 = vmatpush1.bf16.msra.mxu0 %v2442
    %2923 = vmatprep.subr.bf16.mxu0 %v2448
    %2924 = vmatpush1.bf16.msra.mxu0 %v2447
    %2925 = vmatprep.mubr.bf16.mxu0 %v686
    %2926 = vmatmul.mubr.bf16.gmra.mrb[0].mxu0 %v685
    %v2927 = vpop.f32.mrb[0].mxu0
    %v2928 = vadd.f32 %v2887, %v2927
    %v2929 = vpop.f32.mrb[0].mxu0
    %v2930 = vadd.f32 %v2889, %v2929
    %v2931 = vpop.f32.mrb[0].mxu0
    %v2932 = vpop.f32.mrb[0].mxu0
    %2933 = vdwg.mxu0
    %2934 = vmatprep.subr.bf16.mxu0 %v2453
    %2935 = vmatpush1.bf16.msra.mxu0 %v2452
    %2936 = vmatprep.subr.bf16.mxu0 %v2458
    %2937 = vmatpush1.bf16.msra.mxu0 %v2457
    %2938 = vmatprep.subr.bf16.mxu0 %v2463
    %2939 = vmatpush1.bf16.msra.mxu0 %v2462
    %2940 = vmatprep.subr.bf16.mxu0 %v2468
    %2941 = vmatpush1.bf16.msra.mxu0 %v2467
    %2942 = vmatprep.subr.bf16.mxu0 %v2473
    %2943 = vmatpush1.bf16.msra.mxu0 %v2472
    %2944 = vmatprep.subr.bf16.mxu0 %v2478
    %2945 = vmatpush1.bf16.msra.mxu0 %v2477
    %2946 = vmatprep.subr.bf16.mxu0 %v2483
    %2947 = vmatpush1.bf16.msra.mxu0 %v2482
    %2948 = vmatprep.subr.bf16.mxu0 %v2488
    %2949 = vmatpush1.bf16.msra.mxu0 %v2487
    %2950 = vmatprep.subr.bf16.mxu0 %v2493
    %2951 = vmatpush1.bf16.msra.mxu0 %v2492
    %2952 = vmatprep.subr.bf16.mxu0 %v2498
    %2953 = vmatpush1.bf16.msra.mxu0 %v2497
    %2954 = vmatprep.subr.bf16.mxu0 %v2503
    %2955 = vmatpush1.bf16.msra.mxu0 %v2502
    %2956 = vmatprep.subr.bf16.mxu0 %v2508
    %2957 = vmatpush1.bf16.msra.mxu0 %v2507
    %2958 = vmatprep.subr.bf16.mxu0 %v2513
    %2959 = vmatpush1.bf16.msra.mxu0 %v2512
    %2960 = vmatprep.subr.bf16.mxu0 %v2518
    %2961 = vmatpush1.bf16.msra.mxu0 %v2517
    %2962 = vmatprep.subr.bf16.mxu0 %v2523
    %2963 = vmatpush1.bf16.msra.mxu0 %v2522
    %2964 = vmatprep.subr.bf16.mxu0 %v2528
    %2965 = vmatpush1.bf16.msra.mxu0 %v2527
    %2966 = vmatprep.mubr.bf16.mxu0 %v688
    %2967 = vmatmul.mubr.bf16.gmra.mrb[0].mxu0 %v687
    %v2968 = vpop.f32.mrb[0].mxu0
    %v2969 = vadd.f32 %v2928, %v2968
    %v2970 = vpop.f32.mrb[0].mxu0
    %v2971 = vadd.f32 %v2930, %v2970
    %v2972 = vpop.f32.mrb[0].mxu0
    %v2973 = vpop.f32.mrb[0].mxu0
    %2974 = vdwg.mxu0
    %2975 = vmatprep.subr.bf16.mxu0 %v2533
    %2976 = vmatpush1.bf16.msra.mxu0 %v2532
    %2977 = vmatprep.subr.bf16.mxu0 %v2538
    %2978 = vmatpush1.bf16.msra.mxu0 %v2537
    %2979 = vmatprep.subr.bf16.mxu0 %v2543
    %2980 = vmatpush1.bf16.msra.mxu0 %v2542
    %2981 = vmatprep.subr.bf16.mxu0 %v2548
    %2982 = vmatpush1.bf16.msra.mxu0 %v2547
    %2983 = vmatprep.subr.bf16.mxu0 %v2553
    %2984 = vmatpush1.bf16.msra.mxu0 %v2552
    %2985 = vmatprep.subr.bf16.mxu0 %v2558
    %2986 = vmatpush1.bf16.msra.mxu0 %v2557
    %2987 = vmatprep.subr.bf16.mxu0 %v2563
    %2988 = vmatpush1.bf16.msra.mxu0 %v2562
    %2989 = vmatprep.subr.bf16.mxu0 %v2568
    %2990 = vmatpush1.bf16.msra.mxu0 %v2567
    %2991 = vmatprep.subr.bf16.mxu0 0
    %2992 = vmatpush1.bf16.msra.mxu0 0
    %2993 = vmatprep.subr.bf16.mxu0 0
    %2994 = vmatpush1.bf16.msra.mxu0 0
    %2995 = vmatprep.subr.bf16.mxu0 0
    %2996 = vmatpush1.bf16.msra.mxu0 0
    %2997 = vmatprep.subr.bf16.mxu0 0
    %2998 = vmatpush1.bf16.msra.mxu0 0
    %2999 = vmatprep.subr.bf16.mxu0 0
    %3000 = vmatpush1.bf16.msra.mxu0 0
    %3001 = vmatprep.subr.bf16.mxu0 0
    %3002 = vmatpush1.bf16.msra.mxu0 0
    %3003 = vmatprep.subr.bf16.mxu0 0
    %3004 = vmatpush1.bf16.msra.mxu0 0
    %3005 = vmatprep.subr.bf16.mxu0 0
    %3006 = vmatpush1.bf16.msra.mxu0 0
    %3007 = vmatprep.mubr.bf16.mxu0 0
    %3008 = vmatmul.mubr.bf16.gmra.mrb[0].mxu0 %v689
    %v3009 = vpop.f32.mrb[0].mxu0
    %v3010 = vadd.f32 %v2969, %v3009
    %v3011 = vpop.f32.mrb[0].mxu0
    %v3012 = vadd.f32 %v2971, %v3011
    %v3013 = vpop.f32.mrb[0].mxu0
    %v3014 = vpop.f32.mrb[0].mxu0
    %3015 = vdwg.mxu0
    %3016 = vmatprep.subr.bf16.mxu0 %v2295
    %3017 = vmatpush1.bf16.msra.mxu0 %v2294
    %3018 = vmatprep.subr.bf16.mxu0 %v2300
    %3019 = vmatpush1.bf16.msra.mxu0 %v2299
    %3020 = vmatprep.subr.bf16.mxu0 %v2305
    %3021 = vmatpush1.bf16.msra.mxu0 %v2304
    %3022 = vmatprep.subr.bf16.mxu0 %v2310
    %3023 = vmatpush1.bf16.msra.mxu0 %v2309
    %3024 = vmatprep.subr.bf16.mxu0 %v2315
    %3025 = vmatpush1.bf16.msra.mxu0 %v2314
    %3026 = vmatprep.subr.bf16.mxu0 %v2320
    %3027 = vmatpush1.bf16.msra.mxu0 %v2319
    %3028 = vmatprep.subr.bf16.mxu0 %v2325
    %3029 = vmatpush1.bf16.msra.mxu0 %v2324
    %3030 = vmatprep.subr.bf16.mxu0 %v2330
    %3031 = vmatpush1.bf16.msra.mxu0 %v2329
    %3032 = vmatprep.subr.bf16.mxu0 %v2335
    %3033 = vmatpush1.bf16.msra.mxu0 %v2334
    %3034 = vmatprep.subr.bf16.mxu0 %v2340
    %3035 = vmatpush1.bf16.msra.mxu0 %v2339
    %3036 = vmatprep.subr.bf16.mxu0 %v2345
    %3037 = vmatpush1.bf16.msra.mxu0 %v2344
    %3038 = vmatprep.subr.bf16.mxu0 %v2350
    %3039 = vmatpush1.bf16.msra.mxu0 %v2349
    %3040 = vmatprep.subr.bf16.mxu0 %v2355
    %3041 = vmatpush1.bf16.msra.mxu0 %v2354
    %3042 = vmatprep.subr.bf16.mxu0 %v2360
    %3043 = vmatpush1.bf16.msra.mxu0 %v2359
    %3044 = vmatprep.subr.bf16.mxu0 %v2365
    %3045 = vmatpush1.bf16.msra.mxu0 %v2364
    %3046 = vmatprep.subr.bf16.mxu0 %v2370
    %3047 = vmatpush1.bf16.msra.mxu0 %v2369
    %3048 = vmatprep.mubr.bf16.mxu0 %v684
    %3049 = vmatmul.mubr.bf16.gmra.mrb[0].mxu0 %v683
    %v3050 = vpop.f32.mrb[0].mxu0
    %v3051 = vadd.f32 %v1382, %v3050
    %v3052 = vpop.f32.mrb[0].mxu0
    %v3053 = vadd.f32 %v1386, %v3052
    %v3054 = vpop.f32.mrb[0].mxu0
    %v3055 = vpop.f32.mrb[0].mxu0
    %3056 = vdwg.mxu0
    %3057 = vmatprep.subr.bf16.mxu0 %v2375
    %3058 = vmatpush1.bf16.msra.mxu0 %v2374
    %3059 = vmatprep.subr.bf16.mxu0 %v2380
    %3060 = vmatpush1.bf16.msra.mxu0 %v2379
    %3061 = vmatprep.subr.bf16.mxu0 %v2385
    %3062 = vmatpush1.bf16.msra.mxu0 %v2384
    %3063 = vmatprep.subr.bf16.mxu0 %v2390
    %3064 = vmatpush1.bf16.msra.mxu0 %v2389
    %3065 = vmatprep.subr.bf16.mxu0 %v2395
    %3066 = vmatpush1.bf16.msra.mxu0 %v2394
    %3067 = vmatprep.subr.bf16.mxu0 %v2400
    %3068 = vmatpush1.bf16.msra.mxu0 %v2399
    %3069 = vmatprep.subr.bf16.mxu0 %v2405
    %3070 = vmatpush1.bf16.msra.mxu0 %v2404
    %3071 = vmatprep.subr.bf16.mxu0 %v2410
    %3072 = vmatpush1.bf16.msra.mxu0 %v2409
    %3073 = vmatprep.subr.bf16.mxu0 %v2415
    %3074 = vmatpush1.bf16.msra.mxu0 %v2414
    %3075 = vmatprep.subr.bf16.mxu0 %v2420
    %3076 = vmatpush1.bf16.msra.mxu0 %v2419
    %3077 = vmatprep.subr.bf16.mxu0 %v2425
    %3078 = vmatpush1.bf16.msra.mxu0 %v2424
    %3079 = vmatprep.subr.bf16.mxu0 %v2430
    %3080 = vmatpush1.bf16.msra.mxu0 %v2429
    %3081 = vmatprep.subr.bf16.mxu0 %v2435
    %3082 = vmatpush1.bf16.msra.mxu0 %v2434
    %3083 = vmatprep.subr.bf16.mxu0 %v2440
    %3084 = vmatpush1.bf16.msra.mxu0 %v2439
    %3085 = vmatprep.subr.bf16.mxu0 %v2445
    %3086 = vmatpush1.bf16.msra.mxu0 %v2444
    %3087 = vmatprep.subr.bf16.mxu0 %v2450
    %3088 = vmatpush1.bf16.msra.mxu0 %v2449
    %3089 = vmatprep.mubr.bf16.mxu0 %v686
    %3090 = vmatmul.mubr.bf16.gmra.mrb[0].mxu0 %v685
    %v3091 = vpop.f32.mrb[0].mxu0
    %v3092 = vadd.f32 %v3051, %v3091
    %v3093 = vpop.f32.mrb[0].mxu0
    %v3094 = vadd.f32 %v3053, %v3093
    %v3095 = vpop.f32.mrb[0].mxu0
    %v3096 = vpop.f32.mrb[0].mxu0
    %3097 = vdwg.mxu0
    %3098 = vmatprep.subr.bf16.mxu0 %v2455
    %3099 = vmatpush1.bf16.msra.mxu0 %v2454
    %3100 = vmatprep.subr.bf16.mxu0 %v2460
    %3101 = vmatpush1.bf16.msra.mxu0 %v2459
    %3102 = vmatprep.subr.bf16.mxu0 %v2465
    %3103 = vmatpush1.bf16.msra.mxu0 %v2464
    %3104 = vmatprep.subr.bf16.mxu0 %v2470
    %3105 = vmatpush1.bf16.msra.mxu0 %v2469
    %3106 = vmatprep.subr.bf16.mxu0 %v2475
    %3107 = vmatpush1.bf16.msra.mxu0 %v2474
    %3108 = vmatprep.subr.bf16.mxu0 %v2480
    %3109 = vmatpush1.bf16.msra.mxu0 %v2479
    %3110 = vmatprep.subr.bf16.mxu0 %v2485
    %3111 = vmatpush1.bf16.msra.mxu0 %v2484
    %3112 = vmatprep.subr.bf16.mxu0 %v2490
    %3113 = vmatpush1.bf16.msra.mxu0 %v2489
    %3114 = vmatprep.subr.bf16.mxu0 %v2495
    %3115 = vmatpush1.bf16.msra.mxu0 %v2494
    %3116 = vmatprep.subr.bf16.mxu0 %v2500
    %3117 = vmatpush1.bf16.msra.mxu0 %v2499
    %3118 = vmatprep.subr.bf16.mxu0 %v2505
    %3119 = vmatpush1.bf16.msra.mxu0 %v2504
    %3120 = vmatprep.subr.bf16.mxu0 %v2510
    %3121 = vmatpush1.bf16.msra.mxu0 %v2509
    %3122 = vmatprep.subr.bf16.mxu0 %v2515
    %3123 = vmatpush1.bf16.msra.mxu0 %v2514
    %3124 = vmatprep.subr.bf16.mxu0 %v2520
    %3125 = vmatpush1.bf16.msra.mxu0 %v2519
    %3126 = vmatprep.subr.bf16.mxu0 %v2525
    %3127 = vmatpush1.bf16.msra.mxu0 %v2524
    %3128 = vmatprep.subr.bf16.mxu0 %v2530
    %3129 = vmatpush1.bf16.msra.mxu0 %v2529
    %3130 = vmatprep.mubr.bf16.mxu0 %v688
    %3131 = vmatmul.mubr.bf16.gmra.mrb[0].mxu0 %v687
    %v3132 = vpop.f32.mrb[0].mxu0
    %v3133 = vadd.f32 %v3092, %v3132
    %v3134 = vpop.f32.mrb[0].mxu0
    %v3135 = vadd.f32 %v3094, %v3134
    %v3136 = vpop.f32.mrb[0].mxu0
    %v3137 = vpop.f32.mrb[0].mxu0
    %3138 = vdwg.mxu0
    %3139 = vmatprep.subr.bf16.mxu0 %v2535
    %3140 = vmatpush1.bf16.msra.mxu0 %v2534
    %3141 = vmatprep.subr.bf16.mxu0 %v2540
    %3142 = vmatpush1.bf16.msra.mxu0 %v2539
    %3143 = vmatprep.subr.bf16.mxu0 %v2545
    %3144 = vmatpush1.bf16.msra.mxu0 %v2544
    %3145 = vmatprep.subr.bf16.mxu0 %v2550
    %3146 = vmatpush1.bf16.msra.mxu0 %v2549
    %3147 = vmatprep.subr.bf16.mxu0 %v2555
    %3148 = vmatpush1.bf16.msra.mxu0 %v2554
    %3149 = vmatprep.subr.bf16.mxu0 %v2560
    %3150 = vmatpush1.bf16.msra.mxu0 %v2559
    %3151 = vmatprep.subr.bf16.mxu0 %v2565
    %3152 = vmatpush1.bf16.msra.mxu0 %v2564
    %3153 = vmatprep.subr.bf16.mxu0 %v2570
    %3154 = vmatpush1.bf16.msra.mxu0 %v2569
    %3155 = vmatprep.subr.bf16.mxu0 0
    %3156 = vmatpush1.bf16.msra.mxu0 0
    %3157 = vmatprep.subr.bf16.mxu0 0
    %3158 = vmatpush1.bf16.msra.mxu0 0
    %3159 = vmatprep.subr.bf16.mxu0 0
    %3160 = vmatpush1.bf16.msra.mxu0 0
    %3161 = vmatprep.subr.bf16.mxu0 0
    %3162 = vmatpush1.bf16.msra.mxu0 0
    %3163 = vmatprep.subr.bf16.mxu0 0
    %3164 = vmatpush1.bf16.msra.mxu0 0
    %3165 = vmatprep.subr.bf16.mxu0 0
    %3166 = vmatpush1.bf16.msra.mxu0 0
    %3167 = vmatprep.subr.bf16.mxu0 0
    %3168 = vmatpush1.bf16.msra.mxu0 0
    %3169 = vmatprep.subr.bf16.mxu0 0
    %3170 = vmatpush1.bf16.msra.mxu0 0
    %3171 = vmatprep.mubr.bf16.mxu0 0
    %3172 = vmatmul.mubr.bf16.gmra.mrb[0].mxu0 %v689
    %v3173 = vpop.f32.mrb[0].mxu0
    %v3174 = vadd.f32 %v3133, %v3173
    %v3175 = vpop.f32.mrb[0].mxu0
    %v3176 = vadd.f32 %v3135, %v3175
    %v3177 = vpop.f32.mrb[0].mxu0
    %v3178 = vpop.f32.mrb[0].mxu0
    %3179 = vdwg.mxu0
    %3180 = vmatprep.subr.bf16.mxu0 0
    %3181 = vmatpush1.bf16.msra.mxu0 %v2296
    %3182 = vmatprep.subr.bf16.mxu0 0
    %3183 = vmatpush1.bf16.msra.mxu0 %v2301
    %3184 = vmatprep.subr.bf16.mxu0 0
    %3185 = vmatpush1.bf16.msra.mxu0 %v2306
    %3186 = vmatprep.subr.bf16.mxu0 0
    %3187 = vmatpush1.bf16.msra.mxu0 %v2311
    %3188 = vmatprep.subr.bf16.mxu0 0
    %3189 = vmatpush1.bf16.msra.mxu0 %v2316
    %3190 = vmatprep.subr.bf16.mxu0 0
    %3191 = vmatpush1.bf16.msra.mxu0 %v2321
    %3192 = vmatprep.subr.bf16.mxu0 0
    %3193 = vmatpush1.bf16.msra.mxu0 %v2326
    %3194 = vmatprep.subr.bf16.mxu0 0
    %3195 = vmatpush1.bf16.msra.mxu0 %v2331
    %3196 = vmatprep.subr.bf16.mxu0 0
    %3197 = vmatpush1.bf16.msra.mxu0 %v2336
    %3198 = vmatprep.subr.bf16.mxu0 0
    %3199 = vmatpush1.bf16.msra.mxu0 %v2341
    %3200 = vmatprep.subr.bf16.mxu0 0
    %3201 = vmatpush1.bf16.msra.mxu0 %v2346
    %3202 = vmatprep.subr.bf16.mxu0 0
    %3203 = vmatpush1.bf16.msra.mxu0 %v2351
    %3204 = vmatprep.subr.bf16.mxu0 0
    %3205 = vmatpush1.bf16.msra.mxu0 %v2356
    %3206 = vmatprep.subr.bf16.mxu0 0
    %3207 = vmatpush1.bf16.msra.mxu0 %v2361
    %3208 = vmatprep.subr.bf16.mxu0 0
    %3209 = vmatpush1.bf16.msra.mxu0 %v2366
    %3210 = vmatprep.subr.bf16.mxu0 0
    %3211 = vmatpush1.bf16.msra.mxu0 %v2371
    %3212 = vmatprep.mubr.bf16.mxu0 %v684
    %3213 = vmatmul.mubr.bf16.gmra.mrb[0].mxu0 %v683
    %v3214 = vpop.f32.mrb[0].mxu0
    %v3215 = vadd.f32 %v1390, %v3214
    %v3216 = vpop.f32.mrb[0].mxu0
    %v3217 = vpop.f32.mrb[0].mxu0
    %v3218 = vpop.f32.mrb[0].mxu0
    %3219 = vdwg.mxu0
    %3220 = vmatprep.subr.bf16.mxu0 0
    %3221 = vmatpush1.bf16.msra.mxu0 %v2376
    %3222 = vmatprep.subr.bf16.mxu0 0
    %3223 = vmatpush1.bf16.msra.mxu0 %v2381
    %3224 = vmatprep.subr.bf16.mxu0 0
    %3225 = vmatpush1.bf16.msra.mxu0 %v2386
    %3226 = vmatprep.subr.bf16.mxu0 0
    %3227 = vmatpush1.bf16.msra.mxu0 %v2391
    %3228 = vmatprep.subr.bf16.mxu0 0
    %3229 = vmatpush1.bf16.msra.mxu0 %v2396
    %3230 = vmatprep.subr.bf16.mxu0 0
    %3231 = vmatpush1.bf16.msra.mxu0 %v2401
    %3232 = vmatprep.subr.bf16.mxu0 0
    %3233 = vmatpush1.bf16.msra.mxu0 %v2406
    %3234 = vmatprep.subr.bf16.mxu0 0
    %3235 = vmatpush1.bf16.msra.mxu0 %v2411
    %3236 = vmatprep.subr.bf16.mxu0 0
    %3237 = vmatpush1.bf16.msra.mxu0 %v2416
    %3238 = vmatprep.subr.bf16.mxu0 0
    %3239 = vmatpush1.bf16.msra.mxu0 %v2421
    %3240 = vmatprep.subr.bf16.mxu0 0
    %3241 = vmatpush1.bf16.msra.mxu0 %v2426
    %3242 = vmatprep.subr.bf16.mxu0 0
    %3243 = vmatpush1.bf16.msra.mxu0 %v2431
    %3244 = vmatprep.subr.bf16.mxu0 0
    %3245 = vmatpush1.bf16.msra.mxu0 %v2436
    %3246 = vmatprep.subr.bf16.mxu0 0
    %3247 = vmatpush1.bf16.msra.mxu0 %v2441
    %3248 = vmatprep.subr.bf16.mxu0 0
    %3249 = vmatpush1.bf16.msra.mxu0 %v2446
    %3250 = vmatprep.subr.bf16.mxu0 0
    %3251 = vmatpush1.bf16.msra.mxu0 %v2451
    %3252 = vmatprep.mubr.bf16.mxu0 %v686
    %3253 = vmatmul.mubr.bf16.gmra.mrb[0].mxu0 %v685
    %v3254 = vpop.f32.mrb[0].mxu0
    %v3255 = vadd.f32 %v3215, %v3254
    %v3256 = vpop.f32.mrb[0].mxu0
    %v3257 = vpop.f32.mrb[0].mxu0
    %v3258 = vpop.f32.mrb[0].mxu0
    %3259 = vdwg.mxu0
    %3260 = vmatprep.subr.bf16.mxu0 0
    %3261 = vmatpush1.bf16.msra.mxu0 %v2456
    %3262 = vmatprep.subr.bf16.mxu0 0
    %3263 = vmatpush1.bf16.msra.mxu0 %v2461
    %3264 = vmatprep.subr.bf16.mxu0 0
    %3265 = vmatpush1.bf16.msra.mxu0 %v2466
    %3266 = vmatprep.subr.bf16.mxu0 0
    %3267 = vmatpush1.bf16.msra.mxu0 %v2471
    %3268 = vmatprep.subr.bf16.mxu0 0
    %3269 = vmatpush1.bf16.msra.mxu0 %v2476
    %3270 = vmatprep.subr.bf16.mxu0 0
    %3271 = vmatpush1.bf16.msra.mxu0 %v2481
    %3272 = vmatprep.subr.bf16.mxu0 0
    %3273 = vmatpush1.bf16.msra.mxu0 %v2486
    %3274 = vmatprep.subr.bf16.mxu0 0
    %3275 = vmatpush1.bf16.msra.mxu0 %v2491
    %3276 = vmatprep.subr.bf16.mxu0 0
    %3277 = vmatpush1.bf16.msra.mxu0 %v2496
    %3278 = vmatprep.subr.bf16.mxu0 0
    %3279 = vmatpush1.bf16.msra.mxu0 %v2501
    %3280 = vmatprep.subr.bf16.mxu0 0
    %3281 = vmatpush1.bf16.msra.mxu0 %v2506
    %3282 = vmatprep.subr.bf16.mxu0 0
    %3283 = vmatpush1.bf16.msra.mxu0 %v2511
    %3284 = vmatprep.subr.bf16.mxu0 0
    %3285 = vmatpush1.bf16.msra.mxu0 %v2516
    %3286 = vmatprep.subr.bf16.mxu0 0
    %3287 = vmatpush1.bf16.msra.mxu0 %v2521
    %3288 = vmatprep.subr.bf16.mxu0 0
    %3289 = vmatpush1.bf16.msra.mxu0 %v2526
    %3290 = vmatprep.subr.bf16.mxu0 0
    %3291 = vmatpush1.bf16.msra.mxu0 %v2531
    %3292 = vmatprep.mubr.bf16.mxu0 %v688
    %3293 = vmatmul.mubr.bf16.gmra.mrb[0].mxu0 %v687
    %v3294 = vpop.f32.mrb[0].mxu0
    %v3295 = vadd.f32 %v3255, %v3294
    %v3296 = vpop.f32.mrb[0].mxu0
    %v3297 = vpop.f32.mrb[0].mxu0
    %v3298 = vpop.f32.mrb[0].mxu0
    %3299 = vdwg.mxu0
    %3300 = vmatprep.subr.bf16.mxu0 0
    %3301 = vmatpush1.bf16.msra.mxu0 %v2536
    %3302 = vmatprep.subr.bf16.mxu0 0
    %3303 = vmatpush1.bf16.msra.mxu0 %v2541
    %3304 = vmatprep.subr.bf16.mxu0 0
    %3305 = vmatpush1.bf16.msra.mxu0 %v2546
    %3306 = vmatprep.subr.bf16.mxu0 0
    %3307 = vmatpush1.bf16.msra.mxu0 %v2551
    %3308 = vmatprep.subr.bf16.mxu0 0
    %3309 = vmatpush1.bf16.msra.mxu0 %v2556
    %3310 = vmatprep.subr.bf16.mxu0 0
    %3311 = vmatpush1.bf16.msra.mxu0 %v2561
    %3312 = vmatprep.subr.bf16.mxu0 0
    %3313 = vmatpush1.bf16.msra.mxu0 %v2566
    %3314 = vmatprep.subr.bf16.mxu0 0
    %3315 = vmatpush1.bf16.msra.mxu0 %v2571
    %3316 = vmatprep.subr.bf16.mxu0 0
    %3317 = vmatpush1.bf16.msra.mxu0 0
    %3318 = vmatprep.subr.bf16.mxu0 0
    %3319 = vmatpush1.bf16.msra.mxu0 0
    %3320 = vmatprep.subr.bf16.mxu0 0
    %3321 = vmatpush1.bf16.msra.mxu0 0
    %3322 = vmatprep.subr.bf16.mxu0 0
    %3323 = vmatpush1.bf16.msra.mxu0 0
    %3324 = vmatprep.subr.bf16.mxu0 0
    %3325 = vmatpush1.bf16.msra.mxu0 0
    %3326 = vmatprep.subr.bf16.mxu0 0
    %3327 = vmatpush1.bf16.msra.mxu0 0
    %3328 = vmatprep.subr.bf16.mxu0 0
    %3329 = vmatpush1.bf16.msra.mxu0 0
    %3330 = vmatprep.subr.bf16.mxu0 0
    %3331 = vmatpush1.bf16.msra.mxu0 0
    %3332 = vmatprep.mubr.bf16.mxu0 0
    %3333 = vmatmul.mubr.bf16.gmra.mrb[0].mxu0 %v689
    %v3334 = vpop.f32.mrb[0].mxu0
    %v3335 = vadd.f32 %v3295, %v3334
    %v3336 = vpop.f32.mrb[0].mxu0
    %v3337 = vpop.f32.mrb[0].mxu0
    %v3338 = vpop.f32.mrb[0].mxu0
    %3339 = vdwg.mxu0
    %v3340 = vld [vmem:[#allocation10 + $0x5] sm:$0x1f]
    %v3342 = vlaneseq
    %v3343 = vshrl.u32 %v3342, 7
    %v3344 = vsub.s32 0, %v3343
    %v3345 = vrot.slane %v3340, %v3344
    %v3346 = vlaneseq
    %v3347 = vshrl.u32 %v3346, 7
    %v3348 = vsub.s32 1, %v3347
    %v3349 = vrot.slane %v3340, %v3348
    %v3350 = vlaneseq
    %v3351 = vshrl.u32 %v3350, 7
    %v3352 = vsub.s32 2, %v3351
    %v3353 = vrot.slane %v3340, %v3352
    %v3354 = vlaneseq
    %v3355 = vshrl.u32 %v3354, 7
    %v3356 = vsub.s32 3, %v3355
    %v3357 = vrot.slane %v3340, %v3356
    %v3358 = vlaneseq
    %v3359 = vshrl.u32 %v3358, 7
    %v3360 = vsub.s32 4, %v3359
    %v3361 = vrot.slane %v3340, %v3360
    %v3703 = vunpack.c.l.b16 %v1033
    %v3704 = vunpack.c.h.b16 %v1033
    %v3705 = vunpack.c.l.b16 %v1034
    %v3706 = vunpack.c.h.b16 %v1034
    %v3707 = vunpack.c.l.b16 %v1035
    %v3708 = vunpack.c.l.b16 %v1036
    %v3709 = vunpack.c.h.b16 %v1036
    %v3710 = vunpack.c.l.b16 %v1037
    %v3711 = vunpack.c.h.b16 %v1037
    %v3712 = vunpack.c.l.b16 %v1038
    %v3713 = vunpack.c.l.b16 %v1039
    %v3714 = vunpack.c.h.b16 %v1039
    %v3715 = vunpack.c.l.b16 %v1040
    %v3716 = vunpack.c.h.b16 %v1040
    %v3717 = vunpack.c.l.b16 %v1041
    %v3718 = vunpack.c.l.b16 %v1042
    %v3719 = vunpack.c.h.b16 %v1042
    %v3720 = vunpack.c.l.b16 %v1043
    %v3721 = vunpack.c.h.b16 %v1043
    %v3722 = vunpack.c.l.b16 %v1044
    %v3723 = vunpack.c.l.b16 %v1045
    %v3724 = vunpack.c.h.b16 %v1045
    %v3725 = vunpack.c.l.b16 %v1046
    %v3726 = vunpack.c.h.b16 %v1046
    %v3727 = vunpack.c.l.b16 %v1047
    %v3728 = vunpack.c.l.b16 %v1048
    %v3729 = vunpack.c.h.b16 %v1048
    %v3730 = vunpack.c.l.b16 %v1049
    %v3731 = vunpack.c.h.b16 %v1049
    %v3732 = vunpack.c.l.b16 %v1050
    %v3733 = vunpack.c.l.b16 %v1051
    %v3734 = vunpack.c.h.b16 %v1051
    %v3735 = vunpack.c.l.b16 %v1052
    %v3736 = vunpack.c.h.b16 %v1052
    %v3737 = vunpack.c.l.b16 %v1053
    %v3738 = vunpack.c.l.b16 %v1054
    %v3739 = vunpack.c.h.b16 %v1054
    %v3740 = vunpack.c.l.b16 %v1055
    %v3741 = vunpack.c.h.b16 %v1055
    %v3742 = vunpack.c.l.b16 %v1056
    %v3743 = vunpack.c.l.b16 %v1057
    %v3744 = vunpack.c.h.b16 %v1057
    %v3745 = vunpack.c.l.b16 %v1058
    %v3746 = vunpack.c.h.b16 %v1058
    %v3747 = vunpack.c.l.b16 %v1059
    %v3748 = vunpack.c.l.b16 %v1060
    %v3749 = vunpack.c.h.b16 %v1060
    %v3750 = vunpack.c.l.b16 %v1061
    %v3751 = vunpack.c.h.b16 %v1061
    %v3752 = vunpack.c.l.b16 %v1062
    %v3753 = vunpack.c.l.b16 %v1063
    %v3754 = vunpack.c.h.b16 %v1063
    %v3755 = vunpack.c.l.b16 %v1064
    %v3756 = vunpack.c.h.b16 %v1064
    %v3757 = vunpack.c.l.b16 %v1065
    %v3758 = vunpack.c.l.b16 %v1066
    %v3759 = vunpack.c.h.b16 %v1066
    %v3760 = vunpack.c.l.b16 %v1067
    %v3761 = vunpack.c.h.b16 %v1067
    %v3762 = vunpack.c.l.b16 %v1068
    %v3763 = vunpack.c.l.b16 %v1069
    %v3764 = vunpack.c.h.b16 %v1069
    %v3765 = vunpack.c.l.b16 %v1070
    %v3766 = vunpack.c.h.b16 %v1070
    %v3767 = vunpack.c.l.b16 %v1071
    %v3768 = vunpack.c.l.b16 %v1072
    %v3769 = vunpack.c.h.b16 %v1072
    %v3770 = vunpack.c.l.b16 %v1073
    %v3771 = vunpack.c.h.b16 %v1073
    %v3772 = vunpack.c.l.b16 %v1074
    %v3773 = vunpack.c.l.b16 %v1075
    %v3774 = vunpack.c.h.b16 %v1075
    %v3775 = vunpack.c.l.b16 %v1076
    %v3776 = vunpack.c.h.b16 %v1076
    %v3777 = vunpack.c.l.b16 %v1077
    %v3778 = vunpack.c.l.b16 %v1078
    %v3779 = vunpack.c.h.b16 %v1078
    %v3780 = vunpack.c.l.b16 %v1079
    %v3781 = vunpack.c.h.b16 %v1079
    %v3782 = vunpack.c.l.b16 %v1080
    %v3783 = vunpack.c.l.b16 %v1081
    %v3784 = vunpack.c.h.b16 %v1081
    %v3785 = vunpack.c.l.b16 %v1082
    %v3786 = vunpack.c.h.b16 %v1082
    %v3787 = vunpack.c.l.b16 %v1083
    %v3788 = vunpack.c.l.b16 %v1084
    %v3789 = vunpack.c.h.b16 %v1084
    %v3790 = vunpack.c.l.b16 %v1085
    %v3791 = vunpack.c.h.b16 %v1085
    %v3792 = vunpack.c.l.b16 %v1086
    %v3793 = vunpack.c.l.b16 %v1087
    %v3794 = vunpack.c.h.b16 %v1087
    %v3795 = vunpack.c.l.b16 %v1088
    %v3796 = vunpack.c.h.b16 %v1088
    %v3797 = vunpack.c.l.b16 %v1089
    %v3798 = vunpack.c.l.b16 %v1090
    %v3799 = vunpack.c.h.b16 %v1090
    %v3800 = vunpack.c.l.b16 %v1091
    %v3801 = vunpack.c.h.b16 %v1091
    %v3802 = vunpack.c.l.b16 %v1092
    %v3803 = vunpack.c.l.b16 %v1093
    %v3804 = vunpack.c.h.b16 %v1093
    %v3805 = vunpack.c.l.b16 %v1094
    %v3806 = vunpack.c.h.b16 %v1094
    %v3807 = vunpack.c.l.b16 %v1095
    %v3808 = vunpack.c.l.b16 %v1096
    %v3809 = vunpack.c.h.b16 %v1096
    %v3810 = vunpack.c.l.b16 %v1097
    %v3811 = vunpack.c.h.b16 %v1097
    %v3812 = vunpack.c.l.b16 %v1098
    %v3813 = vunpack.c.l.b16 %v1099
    %v3814 = vunpack.c.h.b16 %v1099
    %v3815 = vunpack.c.l.b16 %v1100
    %v3816 = vunpack.c.h.b16 %v1100
    %v3817 = vunpack.c.l.b16 %v1101
    %v3818 = vunpack.c.l.b16 %v1102
    %v3819 = vunpack.c.h.b16 %v1102
    %v3820 = vunpack.c.l.b16 %v1103
    %v3821 = vunpack.c.h.b16 %v1103
    %v3822 = vunpack.c.l.b16 %v1104
    %v3823 = vunpack.c.l.b16 %v1105
    %v3824 = vunpack.c.h.b16 %v1105
    %v3825 = vunpack.c.l.b16 %v1106
    %v3826 = vunpack.c.h.b16 %v1106
    %v3827 = vunpack.c.l.b16 %v1107
    %v3828 = vunpack.c.l.b16 %v1108
    %v3829 = vunpack.c.h.b16 %v1108
    %v3830 = vunpack.c.l.b16 %v1109
    %v3831 = vunpack.c.h.b16 %v1109
    %v3832 = vunpack.c.l.b16 %v1110
    %v3833 = vunpack.c.l.b16 %v1111
    %v3834 = vunpack.c.h.b16 %v1111
    %v3835 = vunpack.c.l.b16 %v1112
    %v3836 = vunpack.c.h.b16 %v1112
    %v3837 = vunpack.c.l.b16 %v1113
    %v3838 = vunpack.c.l.b16 %v1114
    %v3839 = vunpack.c.h.b16 %v1114
    %v3840 = vunpack.c.l.b16 %v1115
    %v3841 = vunpack.c.h.b16 %v1115
    %v3842 = vunpack.c.l.b16 %v1116
    %v3843 = vunpack.c.l.b16 %v1117
    %v3844 = vunpack.c.h.b16 %v1117
    %v3845 = vunpack.c.l.b16 %v1118
    %v3846 = vunpack.c.h.b16 %v1118
    %v3847 = vunpack.c.l.b16 %v1119
    %v3848 = vunpack.c.l.b16 %v1120
    %v3849 = vunpack.c.h.b16 %v1120
    %v3850 = vunpack.c.l.b16 %v1121
    %v3851 = vunpack.c.h.b16 %v1121
    %v3852 = vunpack.c.l.b16 %v1122
    %v3853 = vunpack.c.l.b16 %v1123
    %v3854 = vunpack.c.h.b16 %v1123
    %v3855 = vunpack.c.l.b16 %v1124
    %v3856 = vunpack.c.h.b16 %v1124
    %v3857 = vunpack.c.l.b16 %v1125
    %v3858 = vunpack.c.l.b16 %v1126
    %v3859 = vunpack.c.h.b16 %v1126
    %v3860 = vunpack.c.l.b16 %v1127
    %v3861 = vunpack.c.h.b16 %v1127
    %v3862 = vunpack.c.l.b16 %v1128
    %v3863 = vunpack.c.l.b16 %v1129
    %v3864 = vunpack.c.h.b16 %v1129
    %v3865 = vunpack.c.l.b16 %v1130
    %v3866 = vunpack.c.h.b16 %v1130
    %v3867 = vunpack.c.l.b16 %v1131
    %v3868 = vunpack.c.l.b16 %v1132
    %v3869 = vunpack.c.h.b16 %v1132
    %v3870 = vunpack.c.l.b16 %v1133
    %v3871 = vunpack.c.h.b16 %v1133
    %v3872 = vunpack.c.l.b16 %v1134
    %v3873 = vunpack.c.l.b16 %v1135
    %v3874 = vunpack.c.h.b16 %v1135
    %v3875 = vunpack.c.l.b16 %v1136
    %v3876 = vunpack.c.h.b16 %v1136
    %v3877 = vunpack.c.l.b16 %v1137
    %v3878 = vunpack.c.l.b16 %v1138
    %v3879 = vunpack.c.h.b16 %v1138
    %v3880 = vunpack.c.l.b16 %v1139
    %v3881 = vunpack.c.h.b16 %v1139
    %v3882 = vunpack.c.l.b16 %v1140
    %v3883 = vunpack.c.l.b16 %v1141
    %v3884 = vunpack.c.h.b16 %v1141
    %v3885 = vunpack.c.l.b16 %v1142
    %v3886 = vunpack.c.h.b16 %v1142
    %v3887 = vunpack.c.l.b16 %v1143
    %v3888 = vunpack.c.l.b16 %v1144
    %v3889 = vunpack.c.h.b16 %v1144
    %v3890 = vunpack.c.l.b16 %v1145
    %v3891 = vunpack.c.h.b16 %v1145
    %v3892 = vunpack.c.l.b16 %v1146
    %v3893 = vunpack.c.l.b16 %v1147
    %v3894 = vunpack.c.h.b16 %v1147
    %v3895 = vunpack.c.l.b16 %v1148
    %v3896 = vunpack.c.h.b16 %v1148
    %v3897 = vunpack.c.l.b16 %v1149
    %v3898 = vunpack.c.l.b16 %v1150
    %v3899 = vunpack.c.h.b16 %v1150
    %v3900 = vunpack.c.l.b16 %v1151
    %v3901 = vunpack.c.h.b16 %v1151
    %v3902 = vunpack.c.l.b16 %v1152
    %v3903 = vunpack.c.l.b16 %v1153
    %v3904 = vunpack.c.h.b16 %v1153
    %v3905 = vunpack.c.l.b16 %v1154
    %v3906 = vunpack.c.h.b16 %v1154
    %v3907 = vunpack.c.l.b16 %v1155
    %v3908 = vunpack.c.l.b16 %v1156
    %v3909 = vunpack.c.h.b16 %v1156
    %v3910 = vunpack.c.l.b16 %v1157
    %v3911 = vunpack.c.h.b16 %v1157
    %v3912 = vunpack.c.l.b16 %v1158
    %v3913 = vunpack.c.l.b16 %v1159
    %v3914 = vunpack.c.h.b16 %v1159
    %v3915 = vunpack.c.l.b16 %v1160
    %v3916 = vunpack.c.h.b16 %v1160
    %v3917 = vunpack.c.l.b16 %v1161
    %v3918 = vunpack.c.l.b16 %v1162
    %v3919 = vunpack.c.h.b16 %v1162
    %v3920 = vunpack.c.l.b16 %v1163
    %v3921 = vunpack.c.h.b16 %v1163
    %v3922 = vunpack.c.l.b16 %v1164
    %v3923 = vunpack.c.l.b16 %v1165
    %v3924 = vunpack.c.h.b16 %v1165
    %v3925 = vunpack.c.l.b16 %v1166
    %v3926 = vunpack.c.h.b16 %v1166
    %v3927 = vunpack.c.l.b16 %v1167
    %v3928 = vunpack.c.l.b16 %v1168
    %v3929 = vunpack.c.h.b16 %v1168
    %v3930 = vunpack.c.l.b16 %v1169
    %v3931 = vunpack.c.h.b16 %v1169
    %v3932 = vunpack.c.l.b16 %v1170
    %v3933 = vunpack.c.l.b16 %v1171
    %v3934 = vunpack.c.h.b16 %v1171
    %v3935 = vunpack.c.l.b16 %v1172
    %v3936 = vunpack.c.h.b16 %v1172
    %v3937 = vunpack.c.l.b16 %v1173
    %v3938 = vunpack.c.l.b16 %v1174
    %v3939 = vunpack.c.h.b16 %v1174
    %v3940 = vunpack.c.l.b16 %v1175
    %v3941 = vunpack.c.h.b16 %v1175
    %v3942 = vunpack.c.l.b16 %v1176
    %v3943 = vunpack.c.l.b16 %v1177
    %v3944 = vunpack.c.h.b16 %v1177
    %v3945 = vunpack.c.l.b16 %v1178
    %v3946 = vunpack.c.h.b16 %v1178
    %v3947 = vunpack.c.l.b16 %v1179
    %v3948 = vunpack.c.l.b16 %v1180
    %v3949 = vunpack.c.h.b16 %v1180
    %v3950 = vunpack.c.l.b16 %v1181
    %v3951 = vunpack.c.h.b16 %v1181
    %v3952 = vunpack.c.l.b16 %v1182
    %v3953 = vunpack.c.l.b16 %v1183
    %v3954 = vunpack.c.h.b16 %v1183
    %v3955 = vunpack.c.l.b16 %v1184
    %v3956 = vunpack.c.h.b16 %v1184
    %v3957 = vunpack.c.l.b16 %v1185
    %v3958 = vunpack.c.l.b16 %v1186
    %v3959 = vunpack.c.h.b16 %v1186
    %v3960 = vunpack.c.l.b16 %v1187
    %v3961 = vunpack.c.h.b16 %v1187
    %v3962 = vunpack.c.l.b16 %v1188
    %v3963 = vunpack.c.l.b16 %v1189
    %v3964 = vunpack.c.h.b16 %v1189
    %v3965 = vunpack.c.l.b16 %v1190
    %v3966 = vunpack.c.h.b16 %v1190
    %v3967 = vunpack.c.l.b16 %v1191
    %v3968 = vunpack.c.l.b16 %v1192
    %v3969 = vunpack.c.h.b16 %v1192
    %v3970 = vunpack.c.l.b16 %v1193
    %v3971 = vunpack.c.h.b16 %v1193
    %v3972 = vunpack.c.l.b16 %v1194
    %v3973 = vunpack.c.l.b16 %v1195
    %v3974 = vunpack.c.h.b16 %v1195
    %v3975 = vunpack.c.l.b16 %v1196
    %v3976 = vunpack.c.h.b16 %v1196
    %v3977 = vunpack.c.l.b16 %v1197
    %v3978 = vunpack.c.l.b16 %v1198
    %v3979 = vunpack.c.h.b16 %v1198
    %v3980 = vunpack.c.l.b16 %v1199
    %v3981 = vunpack.c.h.b16 %v1199
    %v3982 = vunpack.c.l.b16 %v1200
    %v3983 = vunpack.c.l.b16 %v1201
    %v3984 = vunpack.c.h.b16 %v1201
    %v3985 = vunpack.c.l.b16 %v1202
    %v3986 = vunpack.c.h.b16 %v1202
    %v3987 = vunpack.c.l.b16 %v1203
    %v3988 = vunpack.c.l.b16 %v1204
    %v3989 = vunpack.c.h.b16 %v1204
    %v3990 = vunpack.c.l.b16 %v1205
    %v3991 = vunpack.c.h.b16 %v1205
    %v3992 = vunpack.c.l.b16 %v1206
    %v3993 = vunpack.c.l.b16 %v1207
    %v3994 = vunpack.c.h.b16 %v1207
    %v3995 = vunpack.c.l.b16 %v1208
    %v3996 = vunpack.c.h.b16 %v1208
    %v3997 = vunpack.c.l.b16 %v1209
    %v3998 = vunpack.c.l.b16 %v1210
    %v3999 = vunpack.c.h.b16 %v1210
    %v4000 = vunpack.c.l.b16 %v1211
    %v4001 = vunpack.c.h.b16 %v1211
    %v4002 = vunpack.c.l.b16 %v1212
    %v4003 = vunpack.c.l.b16 %v1213
    %v4004 = vunpack.c.h.b16 %v1213
    %v4005 = vunpack.c.l.b16 %v1214
    %v4006 = vunpack.c.h.b16 %v1214
    %v4007 = vunpack.c.l.b16 %v1215
    %v4008 = vunpack.c.l.b16 %v1216
    %v4009 = vunpack.c.h.b16 %v1216
    %v4010 = vunpack.c.l.b16 %v1217
    %v4011 = vunpack.c.h.b16 %v1217
    %v4012 = vunpack.c.l.b16 %v1218
    %v4013 = vunpack.c.l.b16 %v1219
    %v4014 = vunpack.c.h.b16 %v1219
    %v4015 = vunpack.c.l.b16 %v1220
    %v4016 = vunpack.c.h.b16 %v1220
    %v4017 = vunpack.c.l.b16 %v1221
    %v4018 = vunpack.c.l.b16 %v1222
    %v4019 = vunpack.c.h.b16 %v1222
    %v4020 = vunpack.c.l.b16 %v1223
    %v4021 = vunpack.c.h.b16 %v1223
    %v4022 = vunpack.c.l.b16 %v1224
    %v4023 = vunpack.c.l.b16 %v1225
    %v4024 = vunpack.c.h.b16 %v1225
    %v4025 = vunpack.c.l.b16 %v1226
    %v4026 = vunpack.c.h.b16 %v1226
    %v4027 = vunpack.c.l.b16 %v1227
    %v4028 = vunpack.c.l.b16 %v1228
    %v4029 = vunpack.c.h.b16 %v1228
    %v4030 = vunpack.c.l.b16 %v1229
    %v4031 = vunpack.c.h.b16 %v1229
    %v4032 = vunpack.c.l.b16 %v1230
    %v4033 = vunpack.c.l.b16 %v1231
    %v4034 = vunpack.c.h.b16 %v1231
    %v4035 = vunpack.c.l.b16 %v1232
    %v4036 = vunpack.c.h.b16 %v1232
    %v4037 = vunpack.c.l.b16 %v1233
    %v4038 = vunpack.c.l.b16 %v1234
    %v4039 = vunpack.c.h.b16 %v1234
    %v4040 = vunpack.c.l.b16 %v1235
    %v4041 = vunpack.c.h.b16 %v1235
    %v4042 = vunpack.c.l.b16 %v1236
    %v4043 = vunpack.c.l.b16 %v1237
    %v4044 = vunpack.c.h.b16 %v1237
    %v4045 = vunpack.c.l.b16 %v1238
    %v4046 = vunpack.c.h.b16 %v1238
    %v4047 = vunpack.c.l.b16 %v1239
    %v4048 = vunpack.c.l.b16 %v1240
    %v4049 = vunpack.c.h.b16 %v1240
    %v4050 = vunpack.c.l.b16 %v1241
    %v4051 = vunpack.c.h.b16 %v1241
    %v4052 = vunpack.c.l.b16 %v1242
    %v4053 = vunpack.c.l.b16 %v1243
    %v4054 = vunpack.c.h.b16 %v1243
    %v4055 = vunpack.c.l.b16 %v1244
    %v4056 = vunpack.c.h.b16 %v1244
    %v4057 = vunpack.c.l.b16 %v1245
    %v4058 = vunpack.c.l.b16 %v1246
    %v4059 = vunpack.c.h.b16 %v1246
    %v4060 = vunpack.c.l.b16 %v1247
    %v4061 = vunpack.c.h.b16 %v1247
    %v4062 = vunpack.c.l.b16 %v1248
    %v4063 = vunpack.c.l.b16 %v1249
    %v4064 = vunpack.c.h.b16 %v1249
    %v4065 = vunpack.c.l.b16 %v1250
    %v4066 = vunpack.c.h.b16 %v1250
    %v4067 = vunpack.c.l.b16 %v1251
    %v4068 = vunpack.c.l.b16 %v1252
    %v4069 = vunpack.c.h.b16 %v1252
    %v4070 = vunpack.c.l.b16 %v1253
    %v4071 = vunpack.c.h.b16 %v1253
    %v4072 = vunpack.c.l.b16 %v1254
    %v4073 = vunpack.c.l.b16 %v1255
    %v4074 = vunpack.c.h.b16 %v1255
    %v4075 = vunpack.c.l.b16 %v1256
    %v4076 = vunpack.c.h.b16 %v1256
    %v4077 = vunpack.c.l.b16 %v1257
    %v4078 = vunpack.c.l.b16 %v1258
    %v4079 = vunpack.c.h.b16 %v1258
    %v4080 = vunpack.c.l.b16 %v1259
    %v4081 = vunpack.c.h.b16 %v1259
    %v4082 = vunpack.c.l.b16 %v1260
    %v4083 = vunpack.c.l.b16 %v1261
    %v4084 = vunpack.c.h.b16 %v1261
    %v4085 = vunpack.c.l.b16 %v1262
    %v4086 = vunpack.c.h.b16 %v1262
    %v4087 = vunpack.c.l.b16 %v1263
    %v4088 = vunpack.c.l.b16 %v1264
    %v4089 = vunpack.c.h.b16 %v1264
    %v4090 = vunpack.c.l.b16 %v1265
    %v4091 = vunpack.c.h.b16 %v1265
    %v4092 = vunpack.c.l.b16 %v1266
    %v4093 = vunpack.c.l.b16 %v1267
    %v4094 = vunpack.c.h.b16 %v1267
    %v4095 = vunpack.c.l.b16 %v1268
    %v4096 = vunpack.c.h.b16 %v1268
    %v4097 = vunpack.c.l.b16 %v1269
    %v4098 = vunpack.c.l.b16 %v1270
    %v4099 = vunpack.c.h.b16 %v1270
    %v4100 = vunpack.c.l.b16 %v1271
    %v4101 = vunpack.c.h.b16 %v1271
    %v4102 = vunpack.c.l.b16 %v1272
    %v4103 = vunpack.c.l.b16 %v1273
    %v4104 = vunpack.c.h.b16 %v1273
    %v4105 = vunpack.c.l.b16 %v1274
    %v4106 = vunpack.c.h.b16 %v1274
    %v4107 = vunpack.c.l.b16 %v1275
    %v4108 = vunpack.c.l.b16 %v1276
    %v4109 = vunpack.c.h.b16 %v1276
    %v4110 = vunpack.c.l.b16 %v1277
    %v4111 = vunpack.c.h.b16 %v1277
    %v4112 = vunpack.c.l.b16 %v1278
    %v4113 = vunpack.c.l.b16 %v1279
    %v4114 = vunpack.c.h.b16 %v1279
    %v4115 = vunpack.c.l.b16 %v1280
    %v4116 = vunpack.c.h.b16 %v1280
    %v4117 = vunpack.c.l.b16 %v1281
    %v4118 = vunpack.c.l.b16 %v1282
    %v4119 = vunpack.c.h.b16 %v1282
    %v4120 = vunpack.c.l.b16 %v1283
    %v4121 = vunpack.c.h.b16 %v1283
    %v4122 = vunpack.c.l.b16 %v1284
    %v4123 = vunpack.c.l.b16 %v1285
    %v4124 = vunpack.c.h.b16 %v1285
    %v4125 = vunpack.c.l.b16 %v1286
    %v4126 = vunpack.c.h.b16 %v1286
    %v4127 = vunpack.c.l.b16 %v1287
    %v4128 = vunpack.c.l.b16 %v1288
    %v4129 = vunpack.c.h.b16 %v1288
    %v4130 = vunpack.c.l.b16 %v1289
    %v4131 = vunpack.c.h.b16 %v1289
    %v4132 = vunpack.c.l.b16 %v1290
    %v4133 = vunpack.c.l.b16 %v1291
    %v4134 = vunpack.c.h.b16 %v1291
    %v4135 = vunpack.c.l.b16 %v1292
    %v4136 = vunpack.c.h.b16 %v1292
    %v4137 = vunpack.c.l.b16 %v1293
    %v4138 = vunpack.c.l.b16 %v1294
    %v4139 = vunpack.c.h.b16 %v1294
    %v4140 = vunpack.c.l.b16 %v1295
    %v4141 = vunpack.c.h.b16 %v1295
    %v4142 = vunpack.c.l.b16 %v1296
    %v4143 = vunpack.c.l.b16 %v1297
    %v4144 = vunpack.c.h.b16 %v1297
    %v4145 = vunpack.c.l.b16 %v1298
    %v4146 = vunpack.c.h.b16 %v1298
    %v4147 = vunpack.c.l.b16 %v1299
    %v4148 = vunpack.c.l.b16 %v1300
    %v4149 = vunpack.c.h.b16 %v1300
    %v4150 = vunpack.c.l.b16 %v1301
    %v4151 = vunpack.c.h.b16 %v1301
    %v4152 = vunpack.c.l.b16 %v1302
    %v4153 = vunpack.c.l.b16 %v1303
    %v4154 = vunpack.c.h.b16 %v1303
    %v4155 = vunpack.c.l.b16 %v1304
    %v4156 = vunpack.c.h.b16 %v1304
    %v4157 = vunpack.c.l.b16 %v1305
    %v4158 = vunpack.c.l.b16 %v1306
    %v4159 = vunpack.c.h.b16 %v1306
    %v4160 = vunpack.c.l.b16 %v1307
    %v4161 = vunpack.c.h.b16 %v1307
    %v4162 = vunpack.c.l.b16 %v1308
    %v4163 = vunpack.c.l.b16 %v1309
    %v4164 = vunpack.c.h.b16 %v1309
    %v4165 = vunpack.c.l.b16 %v1310
    %v4166 = vunpack.c.h.b16 %v1310
    %v4167 = vunpack.c.l.b16 %v1311
    %v4168 = vunpack.c.l.b16 %v1312
    %v4169 = vunpack.c.h.b16 %v1312
    %v4170 = vunpack.c.l.b16 %v1313
    %v4171 = vunpack.c.h.b16 %v1313
    %v4172 = vunpack.c.l.b16 %v1314
    %v4173 = vunpack.c.l.b16 %v1315
    %v4174 = vunpack.c.h.b16 %v1315
    %v4175 = vunpack.c.l.b16 %v1316
    %v4176 = vunpack.c.h.b16 %v1316
    %v4177 = vunpack.c.l.b16 %v1317
    %v4178 = vunpack.c.l.b16 %v1318
    %v4179 = vunpack.c.h.b16 %v1318
    %v4180 = vunpack.c.l.b16 %v1319
    %v4181 = vunpack.c.h.b16 %v1319
    %v4182 = vunpack.c.l.b16 %v1320
    %v4183 = vunpack.c.l.b16 %v1321
    %v4184 = vunpack.c.h.b16 %v1321
    %v4185 = vunpack.c.l.b16 %v1322
    %v4186 = vunpack.c.h.b16 %v1322
    %v4187 = vunpack.c.l.b16 %v1323
    %v4188 = vunpack.c.l.b16 %v1324
    %v4189 = vunpack.c.h.b16 %v1324
    %v4190 = vunpack.c.l.b16 %v1325
    %v4191 = vunpack.c.h.b16 %v1325
    %v4192 = vunpack.c.l.b16 %v1326
    %v4193 = vunpack.c.l.b16 %v1327
    %v4194 = vunpack.c.h.b16 %v1327
    %v4195 = vunpack.c.l.b16 %v1328
    %v4196 = vunpack.c.h.b16 %v1328
    %v4197 = vunpack.c.l.b16 %v1329
    %v4198 = vunpack.c.l.b16 %v1330
    %v4199 = vunpack.c.h.b16 %v1330
    %v4200 = vunpack.c.l.b16 %v1331
    %v4201 = vunpack.c.h.b16 %v1331
    %v4202 = vunpack.c.l.b16 %v1332
    %v4203 = vunpack.c.l.b16 %v1333
    %v4204 = vunpack.c.h.b16 %v1333
    %v4205 = vunpack.c.l.b16 %v1334
    %v4206 = vunpack.c.h.b16 %v1334
    %v4207 = vunpack.c.l.b16 %v1335
    %v4208 = vunpack.c.l.b16 %v1336
    %v4209 = vunpack.c.h.b16 %v1336
    %v4210 = vunpack.c.l.b16 %v1337
    %v4211 = vunpack.c.h.b16 %v1337
    %v4212 = vunpack.c.l.b16 %v1338
    %v4213 = vunpack.c.l.b16 %v1339
    %v4214 = vunpack.c.h.b16 %v1339
    %v4215 = vunpack.c.l.b16 %v1340
    %v4216 = vunpack.c.h.b16 %v1340
    %v4217 = vunpack.c.l.b16 %v1341
    %v4218 = vunpack.c.l.b16 %v1342
    %v4219 = vunpack.c.h.b16 %v1342
    %v4220 = vunpack.c.l.b16 %v1343
    %v4221 = vunpack.c.h.b16 %v1343
    %v4222 = vunpack.c.l.b16 %v1344
    %v4223 = vunpack.c.l.b16 %v1345
    %v4224 = vunpack.c.h.b16 %v1345
    %v4225 = vunpack.c.l.b16 %v1346
    %v4226 = vunpack.c.h.b16 %v1346
    %v4227 = vunpack.c.l.b16 %v1347
    %v4228 = vunpack.c.l.b16 %v1348
    %v4229 = vunpack.c.h.b16 %v1348
    %v4230 = vunpack.c.l.b16 %v1349
    %v4231 = vunpack.c.h.b16 %v1349
    %v4232 = vunpack.c.l.b16 %v1350
    %v4233 = vunpack.c.l.b16 %v1351
    %v4234 = vunpack.c.h.b16 %v1351
    %v4235 = vunpack.c.l.b16 %v1352
    %v4236 = vunpack.c.h.b16 %v1352
    %v4237 = vunpack.c.l.b16 %v1353
    %v4238 = vunpack.c.l.b16 %v1354
    %v4239 = vunpack.c.h.b16 %v1354
    %v4240 = vunpack.c.l.b16 %v1355
    %v4241 = vunpack.c.h.b16 %v1355
    %v4242 = vunpack.c.l.b16 %v1356
    %v4243 = vunpack.c.l.b16 %v1357
    %v4244 = vunpack.c.h.b16 %v1357
    %v4245 = vunpack.c.l.b16 %v1358
    %v4246 = vunpack.c.h.b16 %v1358
    %v4247 = vunpack.c.l.b16 %v1359
    %v4248 = vunpack.c.l.b16 %v1360
    %v4249 = vunpack.c.h.b16 %v1360
    %v4250 = vunpack.c.l.b16 %v1361
    %v4251 = vunpack.c.h.b16 %v1361
    %v4252 = vunpack.c.l.b16 %v1362
    %v4253 = vunpack.c.l.b16 %v1363
    %v4254 = vunpack.c.h.b16 %v1363
    %v4255 = vunpack.c.l.b16 %v1364
    %v4256 = vunpack.c.h.b16 %v1364
    %v4257 = vunpack.c.l.b16 %v1365
    %v4258 = vunpack.c.l.b16 %v1366
    %v4259 = vunpack.c.h.b16 %v1366
    %v4260 = vunpack.c.l.b16 %v1367
    %v4261 = vunpack.c.h.b16 %v1367
    %v4262 = vunpack.c.l.b16 %v1368
    %v4263 = vpack.c.b16 %v3708, %v3703
    %v4264 = vpack.c.b16 %v3709, %v3704
    %v4265 = vpack.c.b16 %v3710, %v3705
    %v4266 = vpack.c.b16 %v3711, %v3706
    %v4267 = vpack.c.b16 %v3712, %v3707
    %v4268 = vpack.c.b16 %v3718, %v3713
    %v4269 = vpack.c.b16 %v3719, %v3714
    %v4270 = vpack.c.b16 %v3720, %v3715
    %v4271 = vpack.c.b16 %v3721, %v3716
    %v4272 = vpack.c.b16 %v3722, %v3717
    %v4273 = vpack.c.b16 %v3728, %v3723
    %v4274 = vpack.c.b16 %v3729, %v3724
    %v4275 = vpack.c.b16 %v3730, %v3725
    %v4276 = vpack.c.b16 %v3731, %v3726
    %v4277 = vpack.c.b16 %v3732, %v3727
    %v4278 = vpack.c.b16 %v3738, %v3733
    %v4279 = vpack.c.b16 %v3739, %v3734
    %v4280 = vpack.c.b16 %v3740, %v3735
    %v4281 = vpack.c.b16 %v3741, %v3736
    %v4282 = vpack.c.b16 %v3742, %v3737
    %v4283 = vpack.c.b16 %v3748, %v3743
    %v4284 = vpack.c.b16 %v3749, %v3744
    %v4285 = vpack.c.b16 %v3750, %v3745
    %v4286 = vpack.c.b16 %v3751, %v3746
    %v4287 = vpack.c.b16 %v3752, %v3747
    %v4288 = vpack.c.b16 %v3758, %v3753
    %v4289 = vpack.c.b16 %v3759, %v3754
    %v4290 = vpack.c.b16 %v3760, %v3755
    %v4291 = vpack.c.b16 %v3761, %v3756
    %v4292 = vpack.c.b16 %v3762, %v3757
    %v4293 = vpack.c.b16 %v3768, %v3763
    %v4294 = vpack.c.b16 %v3769, %v3764
    %v4295 = vpack.c.b16 %v3770, %v3765
    %v4296 = vpack.c.b16 %v3771, %v3766
    %v4297 = vpack.c.b16 %v3772, %v3767
    %v4298 = vpack.c.b16 %v3778, %v3773
    %v4299 = vpack.c.b16 %v3779, %v3774
    %v4300 = vpack.c.b16 %v3780, %v3775
    %v4301 = vpack.c.b16 %v3781, %v3776
    %v4302 = vpack.c.b16 %v3782, %v3777
    %v4303 = vpack.c.b16 %v3788, %v3783
    %v4304 = vpack.c.b16 %v3789, %v3784
    %v4305 = vpack.c.b16 %v3790, %v3785
    %v4306 = vpack.c.b16 %v3791, %v3786
    %v4307 = vpack.c.b16 %v3792, %v3787
    %v4308 = vpack.c.b16 %v3798, %v3793
    %v4309 = vpack.c.b16 %v3799, %v3794
    %v4310 = vpack.c.b16 %v3800, %v3795
    %v4311 = vpack.c.b16 %v3801, %v3796
    %v4312 = vpack.c.b16 %v3802, %v3797
    %v4313 = vpack.c.b16 %v3808, %v3803
    %v4314 = vpack.c.b16 %v3809, %v3804
    %v4315 = vpack.c.b16 %v3810, %v3805
    %v4316 = vpack.c.b16 %v3811, %v3806
    %v4317 = vpack.c.b16 %v3812, %v3807
    %v4318 = vpack.c.b16 %v3818, %v3813
    %v4319 = vpack.c.b16 %v3819, %v3814
    %v4320 = vpack.c.b16 %v3820, %v3815
    %v4321 = vpack.c.b16 %v3821, %v3816
    %v4322 = vpack.c.b16 %v3822, %v3817
    %v4323 = vpack.c.b16 %v3828, %v3823
    %v4324 = vpack.c.b16 %v3829, %v3824
    %v4325 = vpack.c.b16 %v3830, %v3825
    %v4326 = vpack.c.b16 %v3831, %v3826
    %v4327 = vpack.c.b16 %v3832, %v3827
    %v4328 = vpack.c.b16 %v3838, %v3833
    %v4329 = vpack.c.b16 %v3839, %v3834
    %v4330 = vpack.c.b16 %v3840, %v3835
    %v4331 = vpack.c.b16 %v3841, %v3836
    %v4332 = vpack.c.b16 %v3842, %v3837
    %v4333 = vpack.c.b16 %v3848, %v3843
    %v4334 = vpack.c.b16 %v3849, %v3844
    %v4335 = vpack.c.b16 %v3850, %v3845
    %v4336 = vpack.c.b16 %v3851, %v3846
    %v4337 = vpack.c.b16 %v3852, %v3847
    %v4338 = vpack.c.b16 %v3858, %v3853
    %v4339 = vpack.c.b16 %v3859, %v3854
    %v4340 = vpack.c.b16 %v3860, %v3855
    %v4341 = vpack.c.b16 %v3861, %v3856
    %v4342 = vpack.c.b16 %v3862, %v3857
    %v4343 = vpack.c.b16 %v3868, %v3863
    %v4344 = vpack.c.b16 %v3869, %v3864
    %v4345 = vpack.c.b16 %v3870, %v3865
    %v4346 = vpack.c.b16 %v3871, %v3866
    %v4347 = vpack.c.b16 %v3872, %v3867
    %v4348 = vpack.c.b16 %v3878, %v3873
    %v4349 = vpack.c.b16 %v3879, %v3874
    %v4350 = vpack.c.b16 %v3880, %v3875
    %v4351 = vpack.c.b16 %v3881, %v3876
    %v4352 = vpack.c.b16 %v3882, %v3877
    %v4353 = vpack.c.b16 %v3888, %v3883
    %v4354 = vpack.c.b16 %v3889, %v3884
    %v4355 = vpack.c.b16 %v3890, %v3885
    %v4356 = vpack.c.b16 %v3891, %v3886
    %v4357 = vpack.c.b16 %v3892, %v3887
    %v4358 = vpack.c.b16 %v3898, %v3893
    %v4359 = vpack.c.b16 %v3899, %v3894
    %v4360 = vpack.c.b16 %v3900, %v3895
    %v4361 = vpack.c.b16 %v3901, %v3896
    %v4362 = vpack.c.b16 %v3902, %v3897
    %v4363 = vpack.c.b16 %v3908, %v3903
    %v4364 = vpack.c.b16 %v3909, %v3904
    %v4365 = vpack.c.b16 %v3910, %v3905
    %v4366 = vpack.c.b16 %v3911, %v3906
    %v4367 = vpack.c.b16 %v3912, %v3907
    %v4368 = vpack.c.b16 %v3918, %v3913
    %v4369 = vpack.c.b16 %v3919, %v3914
    %v4370 = vpack.c.b16 %v3920, %v3915
    %v4371 = vpack.c.b16 %v3921, %v3916
    %v4372 = vpack.c.b16 %v3922, %v3917
    %v4373 = vpack.c.b16 %v3928, %v3923
    %v4374 = vpack.c.b16 %v3929, %v3924
    %v4375 = vpack.c.b16 %v3930, %v3925
    %v4376 = vpack.c.b16 %v3931, %v3926
    %v4377 = vpack.c.b16 %v3932, %v3927
    %v4378 = vpack.c.b16 %v3938, %v3933
    %v4379 = vpack.c.b16 %v3939, %v3934
    %v4380 = vpack.c.b16 %v3940, %v3935
    %v4381 = vpack.c.b16 %v3941, %v3936
    %v4382 = vpack.c.b16 %v3942, %v3937
    %v4383 = vpack.c.b16 %v3948, %v3943
    %v4384 = vpack.c.b16 %v3949, %v3944
    %v4385 = vpack.c.b16 %v3950, %v3945
    %v4386 = vpack.c.b16 %v3951, %v3946
    %v4387 = vpack.c.b16 %v3952, %v3947
    %v4388 = vpack.c.b16 %v3958, %v3953
    %v4389 = vpack.c.b16 %v3959, %v3954
    %v4390 = vpack.c.b16 %v3960, %v3955
    %v4391 = vpack.c.b16 %v3961, %v3956
    %v4392 = vpack.c.b16 %v3962, %v3957
    %v4393 = vpack.c.b16 %v3968, %v3963
    %v4394 = vpack.c.b16 %v3969, %v3964
    %v4395 = vpack.c.b16 %v3970, %v3965
    %v4396 = vpack.c.b16 %v3971, %v3966
    %v4397 = vpack.c.b16 %v3972, %v3967
    %v4398 = vpack.c.b16 %v3978, %v3973
    %v4399 = vpack.c.b16 %v3979, %v3974
    %v4400 = vpack.c.b16 %v3980, %v3975
    %v4401 = vpack.c.b16 %v3981, %v3976
    %v4402 = vpack.c.b16 %v3982, %v3977
    %v4403 = vpack.c.b16 %v3988, %v3983
    %v4404 = vpack.c.b16 %v3989, %v3984
    %v4405 = vpack.c.b16 %v3990, %v3985
    %v4406 = vpack.c.b16 %v3991, %v3986
    %v4407 = vpack.c.b16 %v3992, %v3987
    %v4408 = vpack.c.b16 %v3998, %v3993
    %v4409 = vpack.c.b16 %v3999, %v3994
    %v4410 = vpack.c.b16 %v4000, %v3995
    %v4411 = vpack.c.b16 %v4001, %v3996
    %v4412 = vpack.c.b16 %v4002, %v3997
    %v4413 = vpack.c.b16 %v4008, %v4003
    %v4414 = vpack.c.b16 %v4009, %v4004
    %v4415 = vpack.c.b16 %v4010, %v4005
    %v4416 = vpack.c.b16 %v4011, %v4006
    %v4417 = vpack.c.b16 %v4012, %v4007
    %v4418 = vpack.c.b16 %v4018, %v4013
    %v4419 = vpack.c.b16 %v4019, %v4014
    %v4420 = vpack.c.b16 %v4020, %v4015
    %v4421 = vpack.c.b16 %v4021, %v4016
    %v4422 = vpack.c.b16 %v4022, %v4017
    %v4423 = vpack.c.b16 %v4028, %v4023
    %v4424 = vpack.c.b16 %v4029, %v4024
    %v4425 = vpack.c.b16 %v4030, %v4025
    %v4426 = vpack.c.b16 %v4031, %v4026
    %v4427 = vpack.c.b16 %v4032, %v4027
    %v4428 = vpack.c.b16 %v4038, %v4033
    %v4429 = vpack.c.b16 %v4039, %v4034
    %v4430 = vpack.c.b16 %v4040, %v4035
    %v4431 = vpack.c.b16 %v4041, %v4036
    %v4432 = vpack.c.b16 %v4042, %v4037
    %v4433 = vpack.c.b16 %v4048, %v4043
    %v4434 = vpack.c.b16 %v4049, %v4044
    %v4435 = vpack.c.b16 %v4050, %v4045
    %v4436 = vpack.c.b16 %v4051, %v4046
    %v4437 = vpack.c.b16 %v4052, %v4047
    %v4438 = vpack.c.b16 %v4058, %v4053
    %v4439 = vpack.c.b16 %v4059, %v4054
    %v4440 = vpack.c.b16 %v4060, %v4055
    %v4441 = vpack.c.b16 %v4061, %v4056
    %v4442 = vpack.c.b16 %v4062, %v4057
    %v4443 = vpack.c.b16 %v4068, %v4063
    %v4444 = vpack.c.b16 %v4069, %v4064
    %v4445 = vpack.c.b16 %v4070, %v4065
    %v4446 = vpack.c.b16 %v4071, %v4066
    %v4447 = vpack.c.b16 %v4072, %v4067
    %v4448 = vpack.c.b16 %v4078, %v4073
    %v4449 = vpack.c.b16 %v4079, %v4074
    %v4450 = vpack.c.b16 %v4080, %v4075
    %v4451 = vpack.c.b16 %v4081, %v4076
    %v4452 = vpack.c.b16 %v4082, %v4077
    %v4453 = vpack.c.b16 %v4088, %v4083
    %v4454 = vpack.c.b16 %v4089, %v4084
    %v4455 = vpack.c.b16 %v4090, %v4085
    %v4456 = vpack.c.b16 %v4091, %v4086
    %v4457 = vpack.c.b16 %v4092, %v4087
    %v4458 = vpack.c.b16 %v4098, %v4093
    %v4459 = vpack.c.b16 %v4099, %v4094
    %v4460 = vpack.c.b16 %v4100, %v4095
    %v4461 = vpack.c.b16 %v4101, %v4096
    %v4462 = vpack.c.b16 %v4102, %v4097
    %v4463 = vpack.c.b16 %v4108, %v4103
    %v4464 = vpack.c.b16 %v4109, %v4104
    %v4465 = vpack.c.b16 %v4110, %v4105
    %v4466 = vpack.c.b16 %v4111, %v4106
    %v4467 = vpack.c.b16 %v4112, %v4107
    %v4468 = vpack.c.b16 %v4118, %v4113
    %v4469 = vpack.c.b16 %v4119, %v4114
    %v4470 = vpack.c.b16 %v4120, %v4115
    %v4471 = vpack.c.b16 %v4121, %v4116
    %v4472 = vpack.c.b16 %v4122, %v4117
    %v4473 = vpack.c.b16 %v4128, %v4123
    %v4474 = vpack.c.b16 %v4129, %v4124
    %v4475 = vpack.c.b16 %v4130, %v4125
    %v4476 = vpack.c.b16 %v4131, %v4126
    %v4477 = vpack.c.b16 %v4132, %v4127
    %v4478 = vpack.c.b16 %v4138, %v4133
    %v4479 = vpack.c.b16 %v4139, %v4134
    %v4480 = vpack.c.b16 %v4140, %v4135
    %v4481 = vpack.c.b16 %v4141, %v4136
    %v4482 = vpack.c.b16 %v4142, %v4137
    %v4483 = vpack.c.b16 %v4148, %v4143
    %v4484 = vpack.c.b16 %v4149, %v4144
    %v4485 = vpack.c.b16 %v4150, %v4145
    %v4486 = vpack.c.b16 %v4151, %v4146
    %v4487 = vpack.c.b16 %v4152, %v4147
    %v4488 = vpack.c.b16 %v4158, %v4153
    %v4489 = vpack.c.b16 %v4159, %v4154
    %v4490 = vpack.c.b16 %v4160, %v4155
    %v4491 = vpack.c.b16 %v4161, %v4156
    %v4492 = vpack.c.b16 %v4162, %v4157
    %v4493 = vpack.c.b16 %v4168, %v4163
    %v4494 = vpack.c.b16 %v4169, %v4164
    %v4495 = vpack.c.b16 %v4170, %v4165
    %v4496 = vpack.c.b16 %v4171, %v4166
    %v4497 = vpack.c.b16 %v4172, %v4167
    %v4498 = vpack.c.b16 %v4178, %v4173
    %v4499 = vpack.c.b16 %v4179, %v4174
    %v4500 = vpack.c.b16 %v4180, %v4175
    %v4501 = vpack.c.b16 %v4181, %v4176
    %v4502 = vpack.c.b16 %v4182, %v4177
    %v4503 = vpack.c.b16 %v4188, %v4183
    %v4504 = vpack.c.b16 %v4189, %v4184
    %v4505 = vpack.c.b16 %v4190, %v4185
    %v4506 = vpack.c.b16 %v4191, %v4186
    %v4507 = vpack.c.b16 %v4192, %v4187
    %v4508 = vpack.c.b16 %v4198, %v4193
    %v4509 = vpack.c.b16 %v4199, %v4194
    %v4510 = vpack.c.b16 %v4200, %v4195
    %v4511 = vpack.c.b16 %v4201, %v4196
    %v4512 = vpack.c.b16 %v4202, %v4197
    %v4513 = vpack.c.b16 %v4208, %v4203
    %v4514 = vpack.c.b16 %v4209, %v4204
    %v4515 = vpack.c.b16 %v4210, %v4205
    %v4516 = vpack.c.b16 %v4211, %v4206
    %v4517 = vpack.c.b16 %v4212, %v4207
    %v4518 = vpack.c.b16 %v4218, %v4213
    %v4519 = vpack.c.b16 %v4219, %v4214
    %v4520 = vpack.c.b16 %v4220, %v4215
    %v4521 = vpack.c.b16 %v4221, %v4216
    %v4522 = vpack.c.b16 %v4222, %v4217
    %v4523 = vpack.c.b16 %v4228, %v4223
    %v4524 = vpack.c.b16 %v4229, %v4224
    %v4525 = vpack.c.b16 %v4230, %v4225
    %v4526 = vpack.c.b16 %v4231, %v4226
    %v4527 = vpack.c.b16 %v4232, %v4227
    %v4528 = vpack.c.b16 %v4238, %v4233
    %v4529 = vpack.c.b16 %v4239, %v4234
    %v4530 = vpack.c.b16 %v4240, %v4235
    %v4531 = vpack.c.b16 %v4241, %v4236
    %v4532 = vpack.c.b16 %v4242, %v4237
    %v4533 = vpack.c.b16 %v4248, %v4243
    %v4534 = vpack.c.b16 %v4249, %v4244
    %v4535 = vpack.c.b16 %v4250, %v4245
    %v4536 = vpack.c.b16 %v4251, %v4246
    %v4537 = vpack.c.b16 %v4252, %v4247
    %v4538 = vpack.c.b16 %v4258, %v4253
    %v4539 = vpack.c.b16 %v4259, %v4254
    %v4540 = vpack.c.b16 %v4260, %v4255
    %v4541 = vpack.c.b16 %v4261, %v4256
    %v4542 = vpack.c.b16 %v4262, %v4257
    %4823 = vmatprep.subr.bf16.mxu0 %v4264
    %4824 = vmatpush1.bf16.msra.mxu0 %v4263
    %4825 = vmatprep.subr.bf16.mxu0 %v4269
    %4826 = vmatpush1.bf16.msra.mxu0 %v4268
    %4827 = vmatprep.subr.bf16.mxu0 %v4274
    %4828 = vmatpush1.bf16.msra.mxu0 %v4273
    %4829 = vmatprep.subr.bf16.mxu0 %v4279
    %4830 = vmatpush1.bf16.msra.mxu0 %v4278
    %4831 = vmatprep.subr.bf16.mxu0 %v4284
    %4832 = vmatpush1.bf16.msra.mxu0 %v4283
    %4833 = vmatprep.subr.bf16.mxu0 %v4289
    %4834 = vmatpush1.bf16.msra.mxu0 %v4288
    %4835 = vmatprep.subr.bf16.mxu0 %v4294
    %4836 = vmatpush1.bf16.msra.mxu0 %v4293
    %4837 = vmatprep.subr.bf16.mxu0 %v4299
    %4838 = vmatpush1.bf16.msra.mxu0 %v4298
    %4839 = vmatprep.subr.bf16.mxu0 %v4304
    %4840 = vmatpush1.bf16.msra.mxu0 %v4303
    %4841 = vmatprep.subr.bf16.mxu0 %v4309
    %4842 = vmatpush1.bf16.msra.mxu0 %v4308
    %4843 = vmatprep.subr.bf16.mxu0 %v4314
    %4844 = vmatpush1.bf16.msra.mxu0 %v4313
    %4845 = vmatprep.subr.bf16.mxu0 %v4319
    %4846 = vmatpush1.bf16.msra.mxu0 %v4318
    %4847 = vmatprep.subr.bf16.mxu0 %v4324
    %4848 = vmatpush1.bf16.msra.mxu0 %v4323
    %4849 = vmatprep.subr.bf16.mxu0 %v4329
    %4850 = vmatpush1.bf16.msra.mxu0 %v4328
    %4851 = vmatprep.subr.bf16.mxu0 %v4334
    %4852 = vmatpush1.bf16.msra.mxu0 %v4333
    %4853 = vmatprep.subr.bf16.mxu0 %v4339
    %4854 = vmatpush1.bf16.msra.mxu0 %v4338
    %4855 = vmatprep.mubr.bf16.mxu0 %v691
    %4856 = vmatmul.mubr.bf16.gmra.mrb[0].mxu0 %v690
    %v4857 = vpop.f32.mrb[0].mxu0
    %v4858 = vadd.f32 %v3345, %v4857
    %v4859 = vpop.f32.mrb[0].mxu0
    %v4860 = vadd.f32 %v3349, %v4859
    %v4861 = vpop.f32.mrb[0].mxu0
    %v4862 = vpop.f32.mrb[0].mxu0
    %4863 = vdwg.mxu0
    %4864 = vmatprep.subr.bf16.mxu0 %v4344
    %4865 = vmatpush1.bf16.msra.mxu0 %v4343
    %4866 = vmatprep.subr.bf16.mxu0 %v4349
    %4867 = vmatpush1.bf16.msra.mxu0 %v4348
    %4868 = vmatprep.subr.bf16.mxu0 %v4354
    %4869 = vmatpush1.bf16.msra.mxu0 %v4353
    %4870 = vmatprep.subr.bf16.mxu0 %v4359
    %4871 = vmatpush1.bf16.msra.mxu0 %v4358
    %4872 = vmatprep.subr.bf16.mxu0 %v4364
    %4873 = vmatpush1.bf16.msra.mxu0 %v4363
    %4874 = vmatprep.subr.bf16.mxu0 %v4369
    %4875 = vmatpush1.bf16.msra.mxu0 %v4368
    %4876 = vmatprep.subr.bf16.mxu0 %v4374
    %4877 = vmatpush1.bf16.msra.mxu0 %v4373
    %4878 = vmatprep.subr.bf16.mxu0 %v4379
    %4879 = vmatpush1.bf16.msra.mxu0 %v4378
    %4880 = vmatprep.subr.bf16.mxu0 %v4384
    %4881 = vmatpush1.bf16.msra.mxu0 %v4383
    %4882 = vmatprep.subr.bf16.mxu0 %v4389
    %4883 = vmatpush1.bf16.msra.mxu0 %v4388
    %4884 = vmatprep.subr.bf16.mxu0 %v4394
    %4885 = vmatpush1.bf16.msra.mxu0 %v4393
    %4886 = vmatprep.subr.bf16.mxu0 %v4399
    %4887 = vmatpush1.bf16.msra.mxu0 %v4398
    %4888 = vmatprep.subr.bf16.mxu0 %v4404
    %4889 = vmatpush1.bf16.msra.mxu0 %v4403
    %4890 = vmatprep.subr.bf16.mxu0 %v4409
    %4891 = vmatpush1.bf16.msra.mxu0 %v4408
    %4892 = vmatprep.subr.bf16.mxu0 %v4414
    %4893 = vmatpush1.bf16.msra.mxu0 %v4413
    %4894 = vmatprep.subr.bf16.mxu0 %v4419
    %4895 = vmatpush1.bf16.msra.mxu0 %v4418
    %4896 = vmatprep.mubr.bf16.mxu0 %v693
    %4897 = vmatmul.mubr.bf16.gmra.mrb[0].mxu0 %v692
    %v4898 = vpop.f32.mrb[0].mxu0
    %v4899 = vadd.f32 %v4858, %v4898
    %v4900 = vpop.f32.mrb[0].mxu0
    %v4901 = vadd.f32 %v4860, %v4900
    %v4902 = vpop.f32.mrb[0].mxu0
    %v4903 = vpop.f32.mrb[0].mxu0
    %4904 = vdwg.mxu0
    %4905 = vmatprep.subr.bf16.mxu0 %v4424
    %4906 = vmatpush1.bf16.msra.mxu0 %v4423
    %4907 = vmatprep.subr.bf16.mxu0 %v4429
    %4908 = vmatpush1.bf16.msra.mxu0 %v4428
    %4909 = vmatprep.subr.bf16.mxu0 %v4434
    %4910 = vmatpush1.bf16.msra.mxu0 %v4433
    %4911 = vmatprep.subr.bf16.mxu0 %v4439
    %4912 = vmatpush1.bf16.msra.mxu0 %v4438
    %4913 = vmatprep.subr.bf16.mxu0 %v4444
    %4914 = vmatpush1.bf16.msra.mxu0 %v4443
    %4915 = vmatprep.subr.bf16.mxu0 %v4449
    %4916 = vmatpush1.bf16.msra.mxu0 %v4448
    %4917 = vmatprep.subr.bf16.mxu0 %v4454
    %4918 = vmatpush1.bf16.msra.mxu0 %v4453
    %4919 = vmatprep.subr.bf16.mxu0 %v4459
    %4920 = vmatpush1.bf16.msra.mxu0 %v4458
    %4921 = vmatprep.subr.bf16.mxu0 %v4464
    %4922 = vmatpush1.bf16.msra.mxu0 %v4463
    %4923 = vmatprep.subr.bf16.mxu0 %v4469
    %4924 = vmatpush1.bf16.msra.mxu0 %v4468
    %4925 = vmatprep.subr.bf16.mxu0 %v4474
    %4926 = vmatpush1.bf16.msra.mxu0 %v4473
    %4927 = vmatprep.subr.bf16.mxu0 %v4479
    %4928 = vmatpush1.bf16.msra.mxu0 %v4478
    %4929 = vmatprep.subr.bf16.mxu0 %v4484
    %4930 = vmatpush1.bf16.msra.mxu0 %v4483
    %4931 = vmatprep.subr.bf16.mxu0 %v4489
    %4932 = vmatpush1.bf16.msra.mxu0 %v4488
    %4933 = vmatprep.subr.bf16.mxu0 %v4494
    %4934 = vmatpush1.bf16.msra.mxu0 %v4493
    %4935 = vmatprep.subr.bf16.mxu0 %v4499
    %4936 = vmatpush1.bf16.msra.mxu0 %v4498
    %4937 = vmatprep.mubr.bf16.mxu0 %v695
    %4938 = vmatmul.mubr.bf16.gmra.mrb[0].mxu0 %v694
    %v4939 = vpop.f32.mrb[0].mxu0
    %v4940 = vadd.f32 %v4899, %v4939
    %v4941 = vpop.f32.mrb[0].mxu0
    %v4942 = vadd.f32 %v4901, %v4941
    %v4943 = vpop.f32.mrb[0].mxu0
    %v4944 = vpop.f32.mrb[0].mxu0
    %4945 = vdwg.mxu0
    %4946 = vmatprep.subr.bf16.mxu0 %v4504
    %4947 = vmatpush1.bf16.msra.mxu0 %v4503
    %4948 = vmatprep.subr.bf16.mxu0 %v4509
    %4949 = vmatpush1.bf16.msra.mxu0 %v4508
    %4950 = vmatprep.subr.bf16.mxu0 %v4514
    %4951 = vmatpush1.bf16.msra.mxu0 %v4513
    %4952 = vmatprep.subr.bf16.mxu0 %v4519
    %4953 = vmatpush1.bf16.msra.mxu0 %v4518
    %4954 = vmatprep.subr.bf16.mxu0 %v4524
    %4955 = vmatpush1.bf16.msra.mxu0 %v4523
    %4956 = vmatprep.subr.bf16.mxu0 %v4529
    %4957 = vmatpush1.bf16.msra.mxu0 %v4528
    %4958 = vmatprep.subr.bf16.mxu0 %v4534
    %4959 = vmatpush1.bf16.msra.mxu0 %v4533
    %4960 = vmatprep.subr.bf16.mxu0 %v4539
    %4961 = vmatpush1.bf16.msra.mxu0 %v4538
    %4962 = vmatprep.subr.bf16.mxu0 0
    %4963 = vmatpush1.bf16.msra.mxu0 0
    %4964 = vmatprep.subr.bf16.mxu0 0
    %4965 = vmatpush1.bf16.msra.mxu0 0
    %4966 = vmatprep.subr.bf16.mxu0 0
    %4967 = vmatpush1.bf16.msra.mxu0 0
    %4968 = vmatprep.subr.bf16.mxu0 0
    %4969 = vmatpush1.bf16.msra.mxu0 0
    %4970 = vmatprep.subr.bf16.mxu0 0
    %4971 = vmatpush1.bf16.msra.mxu0 0
    %4972 = vmatprep.subr.bf16.mxu0 0
    %4973 = vmatpush1.bf16.msra.mxu0 0
    %4974 = vmatprep.subr.bf16.mxu0 0
    %4975 = vmatpush1.bf16.msra.mxu0 0
    %4976 = vmatprep.subr.bf16.mxu0 0
    %4977 = vmatpush1.bf16.msra.mxu0 0
    %4978 = vmatprep.mubr.bf16.mxu0 0
    %4979 = vmatmul.mubr.bf16.gmra.mrb[0].mxu0 %v696
    %v4980 = vpop.f32.mrb[0].mxu0
    %v4981 = vadd.f32 %v4940, %v4980
    %v4982 = vpop.f32.mrb[0].mxu0
    %v4983 = vadd.f32 %v4942, %v4982
    %v4984 = vpop.f32.mrb[0].mxu0
    %v4985 = vpop.f32.mrb[0].mxu0
    %4986 = vdwg.mxu0
    %4987 = vmatprep.subr.bf16.mxu0 %v4266
    %4988 = vmatpush1.bf16.msra.mxu0 %v4265
    %4989 = vmatprep.subr.bf16.mxu0 %v4271
    %4990 = vmatpush1.bf16.msra.mxu0 %v4270
    %4991 = vmatprep.subr.bf16.mxu0 %v4276
    %4992 = vmatpush1.bf16.msra.mxu0 %v4275
    %4993 = vmatprep.subr.bf16.mxu0 %v4281
    %4994 = vmatpush1.bf16.msra.mxu0 %v4280
    %4995 = vmatprep.subr.bf16.mxu0 %v4286
    %4996 = vmatpush1.bf16.msra.mxu0 %v4285
    %4997 = vmatprep.subr.bf16.mxu0 %v4291
    %4998 = vmatpush1.bf16.msra.mxu0 %v4290
    %4999 = vmatprep.subr.bf16.mxu0 %v4296
    %5000 = vmatpush1.bf16.msra.mxu0 %v4295
    %5001 = vmatprep.subr.bf16.mxu0 %v4301
    %5002 = vmatpush1.bf16.msra.mxu0 %v4300
    %5003 = vmatprep.subr.bf16.mxu0 %v4306
    %5004 = vmatpush1.bf16.msra.mxu0 %v4305
    %5005 = vmatprep.subr.bf16.mxu0 %v4311
    %5006 = vmatpush1.bf16.msra.mxu0 %v4310
    %5007 = vmatprep.subr.bf16.mxu0 %v4316
    %5008 = vmatpush1.bf16.msra.mxu0 %v4315
    %5009 = vmatprep.subr.bf16.mxu0 %v4321
    %5010 = vmatpush1.bf16.msra.mxu0 %v4320
    %5011 = vmatprep.subr.bf16.mxu0 %v4326
    %5012 = vmatpush1.bf16.msra.mxu0 %v4325
    %5013 = vmatprep.subr.bf16.mxu0 %v4331
    %5014 = vmatpush1.bf16.msra.mxu0 %v4330
    %5015 = vmatprep.subr.bf16.mxu0 %v4336
    %5016 = vmatpush1.bf16.msra.mxu0 %v4335
    %5017 = vmatprep.subr.bf16.mxu0 %v4341
    %5018 = vmatpush1.bf16.msra.mxu0 %v4340
    %5019 = vmatprep.mubr.bf16.mxu0 %v691
    %5020 = vmatmul.mubr.bf16.gmra.mrb[0].mxu0 %v690
    %v5021 = vpop.f32.mrb[0].mxu0
    %v5022 = vadd.f32 %v3353, %v5021
    %v5023 = vpop.f32.mrb[0].mxu0
    %v5024 = vadd.f32 %v3357, %v5023
    %v5025 = vpop.f32.mrb[0].mxu0
    %v5026 = vpop.f32.mrb[0].mxu0
    %5027 = vdwg.mxu0
    %5028 = vmatprep.subr.bf16.mxu0 %v4346
    %5029 = vmatpush1.bf16.msra.mxu0 %v4345
    %5030 = vmatprep.subr.bf16.mxu0 %v4351
    %5031 = vmatpush1.bf16.msra.mxu0 %v4350
    %5032 = vmatprep.subr.bf16.mxu0 %v4356
    %5033 = vmatpush1.bf16.msra.mxu0 %v4355
    %5034 = vmatprep.subr.bf16.mxu0 %v4361
    %5035 = vmatpush1.bf16.msra.mxu0 %v4360
    %5036 = vmatprep.subr.bf16.mxu0 %v4366
    %5037 = vmatpush1.bf16.msra.mxu0 %v4365
    %5038 = vmatprep.subr.bf16.mxu0 %v4371
    %5039 = vmatpush1.bf16.msra.mxu0 %v4370
    %5040 = vmatprep.subr.bf16.mxu0 %v4376
    %5041 = vmatpush1.bf16.msra.mxu0 %v4375
    %5042 = vmatprep.subr.bf16.mxu0 %v4381
    %5043 = vmatpush1.bf16.msra.mxu0 %v4380
    %5044 = vmatprep.subr.bf16.mxu0 %v4386
    %5045 = vmatpush1.bf16.msra.mxu0 %v4385
    %5046 = vmatprep.subr.bf16.mxu0 %v4391
    %5047 = vmatpush1.bf16.msra.mxu0 %v4390
    %5048 = vmatprep.subr.bf16.mxu0 %v4396
    %5049 = vmatpush1.bf16.msra.mxu0 %v4395
    %5050 = vmatprep.subr.bf16.mxu0 %v4401
    %5051 = vmatpush1.bf16.msra.mxu0 %v4400
    %5052 = vmatprep.subr.bf16.mxu0 %v4406
    %5053 = vmatpush1.bf16.msra.mxu0 %v4405
    %5054 = vmatprep.subr.bf16.mxu0 %v4411
    %5055 = vmatpush1.bf16.msra.mxu0 %v4410
    %5056 = vmatprep.subr.bf16.mxu0 %v4416
    %5057 = vmatpush1.bf16.msra.mxu0 %v4415
    %5058 = vmatprep.subr.bf16.mxu0 %v4421
    %5059 = vmatpush1.bf16.msra.mxu0 %v4420
    %5060 = vmatprep.mubr.bf16.mxu0 %v693
    %5061 = vmatmul.mubr.bf16.gmra.mrb[0].mxu0 %v692
    %v5062 = vpop.f32.mrb[0].mxu0
    %v5063 = vadd.f32 %v5022, %v5062
    %v5064 = vpop.f32.mrb[0].mxu0
    %v5065 = vadd.f32 %v5024, %v5064
    %v5066 = vpop.f32.mrb[0].mxu0
    %v5067 = vpop.f32.mrb[0].mxu0
    %5068 = vdwg.mxu0
    %5069 = vmatprep.subr.bf16.mxu0 %v4426
    %5070 = vmatpush1.bf16.msra.mxu0 %v4425
    %5071 = vmatprep.subr.bf16.mxu0 %v4431
    %5072 = vmatpush1.bf16.msra.mxu0 %v4430
    %5073 = vmatprep.subr.bf16.mxu0 %v4436
    %5074 = vmatpush1.bf16.msra.mxu0 %v4435
    %5075 = vmatprep.subr.bf16.mxu0 %v4441
    %5076 = vmatpush1.bf16.msra.mxu0 %v4440
    %5077 = vmatprep.subr.bf16.mxu0 %v4446
    %5078 = vmatpush1.bf16.msra.mxu0 %v4445
    %5079 = vmatprep.subr.bf16.mxu0 %v4451
    %5080 = vmatpush1.bf16.msra.mxu0 %v4450
    %5081 = vmatprep.subr.bf16.mxu0 %v4456
    %5082 = vmatpush1.bf16.msra.mxu0 %v4455
    %5083 = vmatprep.subr.bf16.mxu0 %v4461
    %5084 = vmatpush1.bf16.msra.mxu0 %v4460
    %5085 = vmatprep.subr.bf16.mxu0 %v4466
    %5086 = vmatpush1.bf16.msra.mxu0 %v4465
    %5087 = vmatprep.subr.bf16.mxu0 %v4471
    %5088 = vmatpush1.bf16.msra.mxu0 %v4470
    %5089 = vmatprep.subr.bf16.mxu0 %v4476
    %5090 = vmatpush1.bf16.msra.mxu0 %v4475
    %5091 = vmatprep.subr.bf16.mxu0 %v4481
    %5092 = vmatpush1.bf16.msra.mxu0 %v4480
    %5093 = vmatprep.subr.bf16.mxu0 %v4486
    %5094 = vmatpush1.bf16.msra.mxu0 %v4485
    %5095 = vmatprep.subr.bf16.mxu0 %v4491
    %5096 = vmatpush1.bf16.msra.mxu0 %v4490
    %5097 = vmatprep.subr.bf16.mxu0 %v4496
    %5098 = vmatpush1.bf16.msra.mxu0 %v4495
    %5099 = vmatprep.subr.bf16.mxu0 %v4501
    %5100 = vmatpush1.bf16.msra.mxu0 %v4500
    %5101 = vmatprep.mubr.bf16.mxu0 %v695
    %5102 = vmatmul.mubr.bf16.gmra.mrb[0].mxu0 %v694
    %v5103 = vpop.f32.mrb[0].mxu0
    %v5104 = vadd.f32 %v5063, %v5103
    %v5105 = vpop.f32.mrb[0].mxu0
    %v5106 = vadd.f32 %v5065, %v5105
    %v5107 = vpop.f32.mrb[0].mxu0
    %v5108 = vpop.f32.mrb[0].mxu0
    %5109 = vdwg.mxu0
    %5110 = vmatprep.subr.bf16.mxu0 %v4506
    %5111 = vmatpush1.bf16.msra.mxu0 %v4505
    %5112 = vmatprep.subr.bf16.mxu0 %v4511
    %5113 = vmatpush1.bf16.msra.mxu0 %v4510
    %5114 = vmatprep.subr.bf16.mxu0 %v4516
    %5115 = vmatpush1.bf16.msra.mxu0 %v4515
    %5116 = vmatprep.subr.bf16.mxu0 %v4521
    %5117 = vmatpush1.bf16.msra.mxu0 %v4520
    %5118 = vmatprep.subr.bf16.mxu0 %v4526
    %5119 = vmatpush1.bf16.msra.mxu0 %v4525
    %5120 = vmatprep.subr.bf16.mxu0 %v4531
    %5121 = vmatpush1.bf16.msra.mxu0 %v4530
    %5122 = vmatprep.subr.bf16.mxu0 %v4536
    %5123 = vmatpush1.bf16.msra.mxu0 %v4535
    %5124 = vmatprep.subr.bf16.mxu0 %v4541
    %5125 = vmatpush1.bf16.msra.mxu0 %v4540
    %5126 = vmatprep.subr.bf16.mxu0 0
    %5127 = vmatpush1.bf16.msra.mxu0 0
    %5128 = vmatprep.subr.bf16.mxu0 0
    %5129 = vmatpush1.bf16.msra.mxu0 0
    %5130 = vmatprep.subr.bf16.mxu0 0
    %5131 = vmatpush1.bf16.msra.mxu0 0
    %5132 = vmatprep.subr.bf16.mxu0 0
    %5133 = vmatpush1.bf16.msra.mxu0 0
    %5134 = vmatprep.subr.bf16.mxu0 0
    %5135 = vmatpush1.bf16.msra.mxu0 0
    %5136 = vmatprep.subr.bf16.mxu0 0
    %5137 = vmatpush1.bf16.msra.mxu0 0
    %5138 = vmatprep.subr.bf16.mxu0 0
    %5139 = vmatpush1.bf16.msra.mxu0 0
    %5140 = vmatprep.subr.bf16.mxu0 0
    %5141 = vmatpush1.bf16.msra.mxu0 0
    %5142 = vmatprep.mubr.bf16.mxu0 0
    %5143 = vmatmul.mubr.bf16.gmra.mrb[0].mxu0 %v696
    %v5144 = vpop.f32.mrb[0].mxu0
    %v5145 = vadd.f32 %v5104, %v5144
    %v5146 = vpop.f32.mrb[0].mxu0
    %v5147 = vadd.f32 %v5106, %v5146
    %v5148 = vpop.f32.mrb[0].mxu0
    %v5149 = vpop.f32.mrb[0].mxu0
    %5150 = vdwg.mxu0
    %5151 = vmatprep.subr.bf16.mxu0 0
    %5152 = vmatpush1.bf16.msra.mxu0 %v4267
    %5153 = vmatprep.subr.bf16.mxu0 0
    %5154 = vmatpush1.bf16.msra.mxu0 %v4272
    %5155 = vmatprep.subr.bf16.mxu0 0
    %5156 = vmatpush1.bf16.msra.mxu0 %v4277
    %5157 = vmatprep.subr.bf16.mxu0 0
    %5158 = vmatpush1.bf16.msra.mxu0 %v4282
    %5159 = vmatprep.subr.bf16.mxu0 0
    %5160 = vmatpush1.bf16.msra.mxu0 %v4287
    %5161 = vmatprep.subr.bf16.mxu0 0
    %5162 = vmatpush1.bf16.msra.mxu0 %v4292
    %5163 = vmatprep.subr.bf16.mxu0 0
    %5164 = vmatpush1.bf16.msra.mxu0 %v4297
    %5165 = vmatprep.subr.bf16.mxu0 0
    %5166 = vmatpush1.bf16.msra.mxu0 %v4302
    %5167 = vmatprep.subr.bf16.mxu0 0
    %5168 = vmatpush1.bf16.msra.mxu0 %v4307
    %5169 = vmatprep.subr.bf16.mxu0 0
    %5170 = vmatpush1.bf16.msra.mxu0 %v4312
    %5171 = vmatprep.subr.bf16.mxu0 0
    %5172 = vmatpush1.bf16.msra.mxu0 %v4317
    %5173 = vmatprep.subr.bf16.mxu0 0
    %5174 = vmatpush1.bf16.msra.mxu0 %v4322
    %5175 = vmatprep.subr.bf16.mxu0 0
    %5176 = vmatpush1.bf16.msra.mxu0 %v4327
    %5177 = vmatprep.subr.bf16.mxu0 0
    %5178 = vmatpush1.bf16.msra.mxu0 %v4332
    %5179 = vmatprep.subr.bf16.mxu0 0
    %5180 = vmatpush1.bf16.msra.mxu0 %v4337
    %5181 = vmatprep.subr.bf16.mxu0 0
    %5182 = vmatpush1.bf16.msra.mxu0 %v4342
    %5183 = vmatprep.mubr.bf16.mxu0 %v691
    %5184 = vmatmul.mubr.bf16.gmra.mrb[0].mxu0 %v690
    %v5185 = vpop.f32.mrb[0].mxu0
    %v5186 = vadd.f32 %v3361, %v5185
    %v5187 = vpop.f32.mrb[0].mxu0
    %v5188 = vpop.f32.mrb[0].mxu0
    %v5189 = vpop.f32.mrb[0].mxu0
    %5190 = vdwg.mxu0
    %5191 = vmatprep.subr.bf16.mxu0 0
    %5192 = vmatpush1.bf16.msra.mxu0 %v4347
    %5193 = vmatprep.subr.bf16.mxu0 0
    %5194 = vmatpush1.bf16.msra.mxu0 %v4352
    %5195 = vmatprep.subr.bf16.mxu0 0
    %5196 = vmatpush1.bf16.msra.mxu0 %v4357
    %5197 = vmatprep.subr.bf16.mxu0 0
    %5198 = vmatpush1.bf16.msra.mxu0 %v4362
    %5199 = vmatprep.subr.bf16.mxu0 0
    %5200 = vmatpush1.bf16.msra.mxu0 %v4367
    %5201 = vmatprep.subr.bf16.mxu0 0
    %5202 = vmatpush1.bf16.msra.mxu0 %v4372
    %5203 = vmatprep.subr.bf16.mxu0 0
    %5204 = vmatpush1.bf16.msra.mxu0 %v4377
    %5205 = vmatprep.subr.bf16.mxu0 0
    %5206 = vmatpush1.bf16.msra.mxu0 %v4382
    %5207 = vmatprep.subr.bf16.mxu0 0
    %5208 = vmatpush1.bf16.msra.mxu0 %v4387
    %5209 = vmatprep.subr.bf16.mxu0 0
    %5210 = vmatpush1.bf16.msra.mxu0 %v4392
    %5211 = vmatprep.subr.bf16.mxu0 0
    %5212 = vmatpush1.bf16.msra.mxu0 %v4397
    %5213 = vmatprep.subr.bf16.mxu0 0
    %5214 = vmatpush1.bf16.msra.mxu0 %v4402
    %5215 = vmatprep.subr.bf16.mxu0 0
    %5216 = vmatpush1.bf16.msra.mxu0 %v4407
    %5217 = vmatprep.subr.bf16.mxu0 0
    %5218 = vmatpush1.bf16.msra.mxu0 %v4412
    %5219 = vmatprep.subr.bf16.mxu0 0
    %5220 = vmatpush1.bf16.msra.mxu0 %v4417
    %5221 = vmatprep.subr.bf16.mxu0 0
    %5222 = vmatpush1.bf16.msra.mxu0 %v4422
    %5223 = vmatprep.mubr.bf16.mxu0 %v693
    %5224 = vmatmul.mubr.bf16.gmra.mrb[0].mxu0 %v692
    %v5225 = vpop.f32.mrb[0].mxu0
    %v5226 = vadd.f32 %v5186, %v5225
    %v5227 = vpop.f32.mrb[0].mxu0
    %v5228 = vpop.f32.mrb[0].mxu0
    %v5229 = vpop.f32.mrb[0].mxu0
    %5230 = vdwg.mxu0
    %5231 = vmatprep.subr.bf16.mxu0 0
    %5232 = vmatpush1.bf16.msra.mxu0 %v4427
    %5233 = vmatprep.subr.bf16.mxu0 0
    %5234 = vmatpush1.bf16.msra.mxu0 %v4432
    %5235 = vmatprep.subr.bf16.mxu0 0
    %5236 = vmatpush1.bf16.msra.mxu0 %v4437
    %5237 = vmatprep.subr.bf16.mxu0 0
    %5238 = vmatpush1.bf16.msra.mxu0 %v4442
    %5239 = vmatprep.subr.bf16.mxu0 0
    %5240 = vmatpush1.bf16.msra.mxu0 %v4447
    %5241 = vmatprep.subr.bf16.mxu0 0
    %5242 = vmatpush1.bf16.msra.mxu0 %v4452
    %5243 = vmatprep.subr.bf16.mxu0 0
    %5244 = vmatpush1.bf16.msra.mxu0 %v4457
    %5245 = vmatprep.subr.bf16.mxu0 0
    %5246 = vmatpush1.bf16.msra.mxu0 %v4462
    %5247 = vmatprep.subr.bf16.mxu0 0
    %5248 = vmatpush1.bf16.msra.mxu0 %v4467
    %5249 = vmatprep.subr.bf16.mxu0 0
    %5250 = vmatpush1.bf16.msra.mxu0 %v4472
    %5251 = vmatprep.subr.bf16.mxu0 0
    %5252 = vmatpush1.bf16.msra.mxu0 %v4477
    %5253 = vmatprep.subr.bf16.mxu0 0
    %5254 = vmatpush1.bf16.msra.mxu0 %v4482
    %5255 = vmatprep.subr.bf16.mxu0 0
    %5256 = vmatpush1.bf16.msra.mxu0 %v4487
    %5257 = vmatprep.subr.bf16.mxu0 0
    %5258 = vmatpush1.bf16.msra.mxu0 %v4492
    %5259 = vmatprep.subr.bf16.mxu0 0
    %5260 = vmatpush1.bf16.msra.mxu0 %v4497
    %5261 = vmatprep.subr.bf16.mxu0 0
    %5262 = vmatpush1.bf16.msra.mxu0 %v4502
    %5263 = vmatprep.mubr.bf16.mxu0 %v695
    %5264 = vmatmul.mubr.bf16.gmra.mrb[0].mxu0 %v694
    %v5265 = vpop.f32.mrb[0].mxu0
    %v5266 = vadd.f32 %v5226, %v5265
    %v5267 = vpop.f32.mrb[0].mxu0
    %v5268 = vpop.f32.mrb[0].mxu0
    %v5269 = vpop.f32.mrb[0].mxu0
    %5270 = vdwg.mxu0
    %5271 = vmatprep.subr.bf16.mxu0 0
    %5272 = vmatpush1.bf16.msra.mxu0 %v4507
    %5273 = vmatprep.subr.bf16.mxu0 0
    %5274 = vmatpush1.bf16.msra.mxu0 %v4512
    %5275 = vmatprep.subr.bf16.mxu0 0
    %5276 = vmatpush1.bf16.msra.mxu0 %v4517
    %5277 = vmatprep.subr.bf16.mxu0 0
    %5278 = vmatpush1.bf16.msra.mxu0 %v4522
    %5279 = vmatprep.subr.bf16.mxu0 0
    %5280 = vmatpush1.bf16.msra.mxu0 %v4527
    %5281 = vmatprep.subr.bf16.mxu0 0
    %5282 = vmatpush1.bf16.msra.mxu0 %v4532
    %5283 = vmatprep.subr.bf16.mxu0 0
    %5284 = vmatpush1.bf16.msra.mxu0 %v4537
    %5285 = vmatprep.subr.bf16.mxu0 0
    %5286 = vmatpush1.bf16.msra.mxu0 %v4542
    %5287 = vmatprep.subr.bf16.mxu0 0
    %5288 = vmatpush1.bf16.msra.mxu0 0
    %5289 = vmatprep.subr.bf16.mxu0 0
    %5290 = vmatpush1.bf16.msra.mxu0 0
    %5291 = vmatprep.subr.bf16.mxu0 0
    %5292 = vmatpush1.bf16.msra.mxu0 0
    %5293 = vmatprep.subr.bf16.mxu0 0
    %5294 = vmatpush1.bf16.msra.mxu0 0
    %5295 = vmatprep.subr.bf16.mxu0 0
    %5296 = vmatpush1.bf16.msra.mxu0 0
    %5297 = vmatprep.subr.bf16.mxu0 0
    %5298 = vmatpush1.bf16.msra.mxu0 0
    %5299 = vmatprep.subr.bf16.mxu0 0
    %5300 = vmatpush1.bf16.msra.mxu0 0
    %5301 = vmatprep.subr.bf16.mxu0 0
    %5302 = vmatpush1.bf16.msra.mxu0 0
    %5303 = vmatprep.mubr.bf16.mxu0 0
    %5304 = vmatmul.mubr.bf16.gmra.mrb[0].mxu0 %v696
    %v5305 = vpop.f32.mrb[0].mxu0
    %v5306 = vadd.f32 %v5266, %v5305
    %v5307 = vpop.f32.mrb[0].mxu0
    %v5308 = vpop.f32.mrb[0].mxu0
    %v5309 = vpop.f32.mrb[0].mxu0
    %5310 = vdwg.mxu0
    %v5311 = vld [vmem:[%s1] sm:$0xff]
    %v5312 = vld [vmem:[#allocation9] ss:$2 sm:$0x1f]
    %5314 = vset.pattern.permute.xlu0 0
    %5315 = vperm.xlu0 %5314, %v5311
    %v5316 = vpop.permute.xlu0 %5315
    %v5319 = vlaneseq
    %v5320 = vshrl.u32 %v5319, 7
    %v5321 = vsub.s32 0, %v5320
    %v5322 = vrot.slane %v5312, %v5321
    %v5323 = vlaneseq
    %v5324 = vshrl.u32 %v5323, 7
    %v5325 = vsub.s32 1, %v5324
    %v5326 = vrot.slane %v5312, %v5325
    %v5327 = vlaneseq
    %v5328 = vshrl.u32 %v5327, 7
    %v5329 = vsub.s32 2, %v5328
    %v5330 = vrot.slane %v5312, %v5329
    %v5331 = vlaneseq
    %v5332 = vshrl.u32 %v5331, 7
    %v5333 = vsub.s32 3, %v5332
    %v5334 = vrot.slane %v5312, %v5333
    %v5335 = vlaneseq
    %v5336 = vshrl.u32 %v5335, 7
    %v5337 = vsub.s32 4, %v5336
    %v5338 = vrot.slane %v5312, %v5337
    %v5344 = vmul.f32 %v5316, %v5322
    %v5345 = vmul.f32 %v5316, %v5326
    %v5346 = vmul.f32 %v5316, %v5330
    %v5347 = vmul.f32 %v5316, %v5334
    %v5348 = vmul.f32 %v5316, %v5338
    %v5349 = vadd.f32 %v3010, %v5344
    %v5350 = vadd.f32 %v3012, %v5345
    %v5351 = vadd.f32 %v3174, %v5346
    %v5352 = vadd.f32 %v3176, %v5347
    %v5353 = vadd.f32 %v3335, %v5348
    %s5354 = scalar_lea.vmem [#allocation9], 10
    %v5355 = vld [vmem:[%s5354] ss:$2 sm:$0x1f]
    %v5357 = vlaneseq
    %v5358 = vshrl.u32 %v5357, 7
    %v5359 = vsub.s32 0, %v5358
    %v5360 = vrot.slane %v5355, %v5359
    %v5361 = vlaneseq
    %v5362 = vshrl.u32 %v5361, 7
    %v5363 = vsub.s32 1, %v5362
    %v5364 = vrot.slane %v5355, %v5363
    %v5365 = vlaneseq
    %v5366 = vshrl.u32 %v5365, 7
    %v5367 = vsub.s32 2, %v5366
    %v5368 = vrot.slane %v5355, %v5367
    %v5369 = vlaneseq
    %v5370 = vshrl.u32 %v5369, 7
    %v5371 = vsub.s32 3, %v5370
    %v5372 = vrot.slane %v5355, %v5371
    %v5373 = vlaneseq
    %v5374 = vshrl.u32 %v5373, 7
    %v5375 = vsub.s32 4, %v5374
    %v5376 = vrot.slane %v5355, %v5375
    %v5382 = vmul.f32 %v5316, %v5360
    %v5383 = vmul.f32 %v5316, %v5364
    %v5384 = vmul.f32 %v5316, %v5368
    %v5385 = vmul.f32 %v5316, %v5372
    %v5386 = vmul.f32 %v5316, %v5376
    %v5387 = vadd.f32 %v4981, %v5382
    %v5388 = vadd.f32 %v4983, %v5383
    %v5389 = vadd.f32 %v5145, %v5384
    %v5390 = vadd.f32 %v5147, %v5385
    %v5391 = vadd.f32 %v5306, %v5386
    %s5392 = scalar_lea.vmem [#allocation9], 1
    %v5393 = vld [vmem:[%s5392] ss:$2 sm:$0x1f]
    %5394 = vset.pattern.permute.xlu0 1
    %5395 = vperm.xlu0 %5394, %v5311
    %v5396 = vpop.permute.xlu0 %5395
    %v5399 = vlaneseq
    %v5400 = vshrl.u32 %v5399, 7
    %v5401 = vsub.s32 0, %v5400
    %v5402 = vrot.slane %v5393, %v5401
    %v5403 = vlaneseq
    %v5404 = vshrl.u32 %v5403, 7
    %v5405 = vsub.s32 1, %v5404
    %v5406 = vrot.slane %v5393, %v5405
    %v5407 = vlaneseq
    %v5408 = vshrl.u32 %v5407, 7
    %v5409 = vsub.s32 2, %v5408
    %v5410 = vrot.slane %v5393, %v5409
    %v5411 = vlaneseq
    %v5412 = vshrl.u32 %v5411, 7
    %v5413 = vsub.s32 3, %v5412
    %v5414 = vrot.slane %v5393, %v5413
    %v5415 = vlaneseq
    %v5416 = vshrl.u32 %v5415, 7
    %v5417 = vsub.s32 4, %v5416
    %v5418 = vrot.slane %v5393, %v5417
    %v5424 = vmul.f32 %v5396, %v5402
    %v5425 = vmul.f32 %v5396, %v5406
    %v5426 = vmul.f32 %v5396, %v5410
    %v5427 = vmul.f32 %v5396, %v5414
    %v5428 = vmul.f32 %v5396, %v5418
    %v5429 = vadd.f32 %v5349, %v5424
    %v5430 = vadd.f32 %v5350, %v5425
    %v5431 = vadd.f32 %v5351, %v5426
    %v5432 = vadd.f32 %v5352, %v5427
    %v5433 = vadd.f32 %v5353, %v5428
    %s5434 = scalar_lea.vmem [#allocation9], 11
    %v5435 = vld [vmem:[%s5434] ss:$2 sm:$0x1f]
    %v5437 = vlaneseq
    %v5438 = vshrl.u32 %v5437, 7
    %v5439 = vsub.s32 0, %v5438
    %v5440 = vrot.slane %v5435, %v5439
    %v5441 = vlaneseq
    %v5442 = vshrl.u32 %v5441, 7
    %v5443 = vsub.s32 1, %v5442
    %v5444 = vrot.slane %v5435, %v5443
    %v5445 = vlaneseq
    %v5446 = vshrl.u32 %v5445, 7
    %v5447 = vsub.s32 2, %v5446
    %v5448 = vrot.slane %v5435, %v5447
    %v5449 = vlaneseq
    %v5450 = vshrl.u32 %v5449, 7
    %v5451 = vsub.s32 3, %v5450
    %v5452 = vrot.slane %v5435, %v5451
    %v5453 = vlaneseq
    %v5454 = vshrl.u32 %v5453, 7
    %v5455 = vsub.s32 4, %v5454
    %v5456 = vrot.slane %v5435, %v5455
    %v5462 = vmul.f32 %v5396, %v5440
    %v5463 = vmul.f32 %v5396, %v5444
    %v5464 = vmul.f32 %v5396, %v5448
    %v5465 = vmul.f32 %v5396, %v5452
    %v5466 = vmul.f32 %v5396, %v5456
    %v5467 = vadd.f32 %v5387, %v5462
    %v5468 = vadd.f32 %v5388, %v5463
    %v5469 = vadd.f32 %v5389, %v5464
    %v5470 = vadd.f32 %v5390, %v5465
    %v5471 = vadd.f32 %v5391, %v5466
    %v5472 = vmax.f32 %v5429, 0.0
    %v5473 = vmax.f32 %v5430, 0.0
    %v5474 = vmax.f32 %v5431, 0.0
    %v5475 = vmax.f32 %v5432, 0.0
    %v5476 = vmax.f32 %v5433, 0.0
    %v5477 = vmax.f32 %v5467, 0.0
    %v5478 = vmax.f32 %v5468, 0.0
    %v5479 = vmax.f32 %v5469, 0.0
    %v5480 = vmax.f32 %v5470, 0.0
    %v5481 = vmax.f32 %v5471, 0.0
    %v5482 = vld [vmem:[#allocation12] ss:$2 sm:$0x1f]
    %v5484 = vlaneseq
    %v5485 = vshrl.u32 %v5484, 7
    %v5486 = vsub.s32 0, %v5485
    %v5487 = vrot.slane %v5482, %v5486
    %v5488 = vlaneseq
    %v5489 = vshrl.u32 %v5488, 7
    %v5490 = vsub.s32 1, %v5489
    %v5491 = vrot.slane %v5482, %v5490
    %v5492 = vlaneseq
    %v5493 = vshrl.u32 %v5492, 7
    %v5494 = vsub.s32 2, %v5493
    %v5495 = vrot.slane %v5482, %v5494
    %v5496 = vlaneseq
    %v5497 = vshrl.u32 %v5496, 7
    %v5498 = vsub.s32 3, %v5497
    %v5499 = vrot.slane %v5482, %v5498
    %v5500 = vlaneseq
    %v5501 = vshrl.u32 %v5500, 7
    %v5502 = vsub.s32 4, %v5501
    %v5503 = vrot.slane %v5482, %v5502
    %v5509 = vmul.f32 %v5472, %v5487
    %v5510 = vmul.f32 %v5473, %v5491
    %v5511 = vmul.f32 %v5474, %v5495
    %v5512 = vmul.f32 %v5475, %v5499
    %v5513 = vmul.f32 %v5476, %v5503
    %v5514 = vadd.f32 %v5509, %v5510
    %v5515 = vadd.f32 %v5514, %v5511
    %v5516 = vadd.f32 %v5515, %v5512
    %v5517 = vadd.f32 %v5516, %v5513
    %5518 = vadd.xlane.f32.xlu0 %v5517
    %v5519 = vpop.xlane.xlu0 %5518
    %s5520 = scalar_lea.vmem [#allocation12], 1
    %v5521 = vld [vmem:[%s5520] ss:$2 sm:$0x1f]
    %v5523 = vlaneseq
    %v5524 = vshrl.u32 %v5523, 7
    %v5525 = vsub.s32 0, %v5524
    %v5526 = vrot.slane %v5521, %v5525
    %v5527 = vlaneseq
    %v5528 = vshrl.u32 %v5527, 7
    %v5529 = vsub.s32 1, %v5528
    %v5530 = vrot.slane %v5521, %v5529
    %v5531 = vlaneseq
    %v5532 = vshrl.u32 %v5531, 7
    %v5533 = vsub.s32 2, %v5532
    %v5534 = vrot.slane %v5521, %v5533
    %v5535 = vlaneseq
    %v5536 = vshrl.u32 %v5535, 7
    %v5537 = vsub.s32 3, %v5536
    %v5538 = vrot.slane %v5521, %v5537
    %v5539 = vlaneseq
    %v5540 = vshrl.u32 %v5539, 7
    %v5541 = vsub.s32 4, %v5540
    %v5542 = vrot.slane %v5521, %v5541
    %v5548 = vmul.f32 %v5477, %v5526
    %v5549 = vmul.f32 %v5478, %v5530
    %v5550 = vmul.f32 %v5479, %v5534
    %v5551 = vmul.f32 %v5480, %v5538
    %v5552 = vmul.f32 %v5481, %v5542
    %v5553 = vadd.f32 %v5548, %v5549
    %v5554 = vadd.f32 %v5553, %v5550
    %v5555 = vadd.f32 %v5554, %v5551
    %v5556 = vadd.f32 %v5555, %v5552
    %5557 = vadd.xlane.f32.xlu0 %v5556
    %v5558 = vpop.xlane.xlu0 %5557
    %vm5559 = vcmask 7168
    %v5560 = vsel %vm5559, %v5519, %v5558
    %v5561 = vld [vmem:[#allocation13] sm:$0x1]
    %v5563 = vlaneseq
    %v5564 = vshrl.u32 %v5563, 7
    %v5565 = vsub.s32 0, %v5564
    %v5566 = vrot.slane %v5561, %v5565
    %v5568 = vadd.f32 %v5560, %v5566
    %vm5569 = vcmask 15360
    %5570 = vst.msk [vmem:[%s10] sm:$0xff] %vm5569, %v5568
    // Predicated region
    $region74: #{critic_forward.1} parent=1 // pred_check
      _
    $region75: #{critic_forward.1} parent=1 // pred_check_branch
      %5572 = sbr.rel (0) target = $region77
    $region76: #{critic_forward.1} parent=1 // pred_region
      _
    $region77: #{critic_forward.1} parent=1 // pred_fallthru
      _
    // Predicated region
    $region78: #{critic_forward.1} parent=1 // pred_check
      _
    $region79: #{critic_forward.1} parent=1 // pred_check_branch
      %5574 = sbr.rel (0) target = $region81
    $region80: #{critic_forward.1} parent=1 // pred_region
      _
    $region81: #{critic_forward.1} parent=1 // pred_fallthru
      _
    %5575 = vsyncpa [#allocation3], 1
    %5576 = vsyncpa [#allocation5], 1
    %5577 = vsyncpa [#allocation8], 1
    %5578 = vsyncpa [#allocation11], 1
    %5579 = vsyncpa [#allocation14], 1

</llo_original>
